<compile_context>
chip_gen: v7x
topology: tpu7x:2x2x1
jax: 0.10.0
libtpu: 0.0.40
codegen_flags: <defaults>
</compile_context>

<pallas_src>
import functools

import jax
import jax.numpy as jnp
from jax.experimental import pallas as pl
from jax.experimental.pallas import tpu as pltpu

_EPS = 1e-5


def _pick_vmem_limit():
    """Generation-aware scoped-VMEM budget (~75% of physical, capped at 100 MiB)."""
    try:
        cap = int(pltpu.get_tpu_info().vmem_capacity_bytes)
    except Exception:  # not on TPU yet / API shape changed -> conservative default
        cap = 64 * 1024 * 1024
    return max(32 * 1024 * 1024, min(cap * 3 // 4, 100 * 1024 * 1024))


_VMEM_LIMIT_BYTES = _pick_vmem_limit()

# rows of the stacked per-layer (L, 20, F) vector table
(FF1_G, FF1_B, FF1_B2,
 CV_G, CV_B, PW1_BA, PW1_BB, DW_B, PW2_B,
 MH_G, MH_B, MH_BQ, MH_BK, MH_BV, MH_BO,
 FF2_G, FF2_B, FF2_B2, FLN_G, FLN_B) = range(20)
_NUM_VEC_ROWS = 20


# ---------------------------------------------------------------------------
# in-kernel helpers
# ---------------------------------------------------------------------------
def _sigmoid(x):
    # route the divide through the EUP; exp is EUP as well -> frees VALU slots
    return pl.reciprocal(1.0 + jnp.exp(-x), approx=True)


def _silu(x):
    return x * _sigmoid(x)


# ---------------------------------------------------------------------------
# Pallas kernels
# ---------------------------------------------------------------------------
def _downsample_kernel(xe_ref, xo_ref, w_ref, b_ref, out_ref):
    """Conv1d(F, F, kernel=5, stride=2, padding=2), Bt batch elements per step.

    xe/xo: even / odd time phases of the zero-padded input, (Bt, Tds+2, F)/(Bt, Tds+1, F).
    w: (5*F, F) bf16 -- the 5 taps stacked along the contraction axis.
    out[b, t] = bias + concat_k(x_pad[b, 2t+k]) @ w   (single fused MXU GEMM)
    """
    Bt, Tds, F = out_ref.shape
    xe = xe_ref[...]
    xo = xo_ref[...]
    taps = jnp.concatenate(
        [xe[:, 0:Tds], xo[:, 0:Tds], xe[:, 1:Tds + 1], xo[:, 1:Tds + 1],
         xe[:, 2:Tds + 2]], axis=-1)                                # (Bt, Tds, 5F)
    y = jnp.dot(taps.reshape(Bt * Tds, 5 * F).astype(jnp.bfloat16), w_ref[...],
                preferred_element_type=jnp.float32)
    out_ref[...] = (y + b_ref[...]).reshape(Bt, Tds, F)


def _upsample_kernel(x_ref, w_ref, b_ref, even_ref, odd_ref):
    """ConvTranspose1d(F, F, kernel=5, stride=2, padding=1), Bt batch elems/step.

    w: (F, 5*F) bf16 -- the 5 taps fused along the output axis (one GEMM).
    out[2m]   = b + x[m] @ w1 + x[m-1] @ w3
    out[2m+1] = b + x[m+1] @ w0 + x[m] @ w2 + x[m-1] @ w4
    Each output ref is written exactly once (no read-modify-write).
    """
    Bt, Tds, F = x_ref.shape
    c = jnp.dot(x_ref[...].reshape(Bt * Tds, F).astype(jnp.bfloat16), w_ref[...],
                preferred_element_type=jnp.float32).reshape(Bt, Tds, 5 * F)
    b = b_ref[...]                                                  # (1, F)
    c0 = c[:, :, 0 * F:1 * F]
    c1 = c[:, :, 1 * F:2 * F]
    c2 = c[:, :, 2 * F:3 * F]
    c3 = c[:, :, 3 * F:4 * F]
    c4 = c[:, :, 4 * F:5 * F]
    z = jnp.zeros((Bt, 1, F), jnp.float32)
    even_ref[...] = (b
                     + jnp.concatenate([c1, z], axis=1)
                     + jnp.concatenate([z, c3], axis=1))            # (Bt, Tds+1, F)
    odd_ref[...] = (b + c2
                    + jnp.concatenate([c0[:, 1:Tds], z], axis=1)
                    + jnp.concatenate([z, c4[:, 0:Tds - 1]], axis=1))   # (Bt, Tds, F)


def _conformer_stack_kernel(num_heads,
                            x_ref, mask_ref, vecF_ref, vecH_ref,
                            w_ff1a_ref, w_ff1b_ref, w_pw1_ref, w_dw_ref,
                            w_pw2_ref, w_qkv_ref, w_o_ref, w_ff2a_ref,
                            w_ff2b_ref, out_ref):
    """One (batch-block, layer) step of the grid.

    out_ref doubles as the layer-resident VMEM carry: its block index is
    constant across the layer ("arbitrary") axis, so the activation never
    round-trips through HBM between layers.  Per-layer weights are streamed
    via their index_maps (next-layer DMA pipelines under this layer's compute).
    """
    layer = pl.program_id(1)
    Bt, T, F = out_ref.shape
    H = num_heads
    Dh = F // H
    K = w_dw_ref.shape[0]
    P = (K - 1) // 2
    N = Bt * T

    @pl.when(layer == 0)
    def _():
        out_ref[...] = x_ref[...]

    x = out_ref[...].reshape(N, F)

    # hoist all per-layer broadcast vectors ONCE (JAX does not CSE broadcasts)
    vecF = vecF_ref[...]                                  # (20, F)
    (ff1_g, ff1_b, ff1_b2, cv_g, cv_b, pw1_ba, pw1_bb, dw_b, pw2_b,
     mh_g, mh_b, mh_bq, mh_bk, mh_bv, mh_bo,
     ff2_g, ff2_b, ff2_b2, fln_g, fln_b) = [
        vecF[i:i + 1, :] for i in range(_NUM_VEC_ROWS)]
    vecH = vecH_ref[...]                                  # (2, ffn)
    ff1_b1 = vecH[0:1, :]
    ff2_b1 = vecH[1:2, :]

    def mm(a, w_ref_):                                    # bf16 MXU GEMM, f32 acc
        return jnp.dot(a.astype(jnp.bfloat16), w_ref_[...],
                       preferred_element_type=jnp.float32)

    def ln(v, g, b):
        m = jnp.mean(v, axis=-1, keepdims=True)
        c = v - m
        var = jnp.mean(c * c, axis=-1, keepdims=True)
        return c * jax.lax.rsqrt(var + _EPS) * g + b

    # ---- feed-forward module 1:  residual = 0.5 * ff(x) + x ----
    y = ln(x, ff1_g, ff1_b)
    y = _silu(mm(y, w_ff1a_ref) + ff1_b1)
    y = mm(y, w_ff1b_ref) + ff1_b2
    res = 0.5 * y + x

    # ---- convolution module (conv before MHSA in this block variant) ----
    y = ln(res, cv_g, cv_b)
    pw1 = mm(y, w_pw1_ref)                                # fused pointwise_conv1 (F -> 2F)
    y = (pw1[:, 0:F] + pw1_ba) * _sigmoid(pw1[:, F:2 * F] + pw1_bb)   # GLU
    # depthwise conv, per-sequence "same" zero padding; BatchNorm(eval) pre-folded
    # TODO(synk): replace the misaligned sublane shifts with pltpu.roll + edge masks.
    wdw = w_dw_ref[...]                                   # (K, F) f32, BN-folded
    y3 = y.reshape(Bt, T, F)
    zpad = jnp.zeros((Bt, P, F), jnp.float32)
    yp = jnp.concatenate([zpad, y3, zpad], axis=1)        # (Bt, T + K - 1, F)
    acc = jnp.zeros((Bt, T, F), jnp.float32) + dw_b
    for k in range(K):
        acc = acc + yp[:, k:k + T, :] * wdw[k:k + 1, :]
    y = _silu(acc).reshape(N, F)
    y = mm(y, w_pw2_ref) + pw2_b
    res = y + res

    # ---- multi-head self-attention ----
    y = ln(res, mh_g, mh_b)
    qkv = mm(y, w_qkv_ref)                                # fused QKV; 1/sqrt(Dh) folded into Wq/bq
    q3 = (qkv[:, 0:F] + mh_bq).reshape(Bt, T, F)
    k3 = (qkv[:, F:2 * F] + mh_bk).reshape(Bt, T, F)
    v3 = (qkv[:, 2 * F:3 * F] + mh_bv).reshape(Bt, T, F)
    bias = mask_ref[...]                                  # (Bt, 1, T) additive key-padding mask
    heads = []
    # TODO(synk): flash-style kv tiling (online softmax over key tiles) for long
    # sequences; full (Bt, T, T) scores kept live here.
    for hh in range(H):
        qh = q3[:, :, hh * Dh:(hh + 1) * Dh].astype(jnp.bfloat16)
        kh = k3[:, :, hh * Dh:(hh + 1) * Dh].astype(jnp.bfloat16)
        vh = v3[:, :, hh * Dh:(hh + 1) * Dh].astype(jnp.bfloat16)
        s = jnp.einsum('bqd,bkd->bqk', qh, kh,
                       preferred_element_type=jnp.float32)          # (Bt, T, T)
        s = s + bias
        s = s - jnp.max(s, axis=-1, keepdims=True)
        e = jnp.exp(s)
        p = e * pl.reciprocal(jnp.sum(e, axis=-1, keepdims=True), approx=True)
        heads.append(jnp.einsum('bqk,bkd->bqd', p.astype(jnp.bfloat16), vh,
                                preferred_element_type=jnp.float32))  # (Bt, T, Dh)
    att = jnp.concatenate(heads, axis=-1).reshape(N, F)
    y = mm(att, w_o_ref) + mh_bo
    res = y + res

    # ---- feed-forward module 2 + final layer norm ----
    y = ln(res, ff2_g, ff2_b)
    y = _silu(mm(y, w_ff2a_ref) + ff2_b1)
    y = mm(y, w_ff2b_ref) + ff2_b2
    y = 0.5 * y + res
    y = ln(y, fln_g, fln_b)

    out_ref[...] = y.reshape(Bt, T, F)


# ---------------------------------------------------------------------------
# pallas_call wrappers
# ---------------------------------------------------------------------------
def _downsample_call(xe, xo, w, b, bt):
    B, Te, F = xe.shape
    Tds = Te - 2
    return pl.pallas_call(
        _downsample_kernel,
        out_shape=jax.ShapeDtypeStruct((B, Tds, F), jnp.float32),
        grid=(B // bt,),
        in_specs=[
            pl.BlockSpec((bt, Tds + 2, F), lambda bi: (bi, 0, 0)),
            pl.BlockSpec((bt, Tds + 1, F), lambda bi: (bi, 0, 0)),
            pl.BlockSpec((5 * F, F), lambda bi: (0, 0)),
            pl.BlockSpec((1, F), lambda bi: (0, 0)),
        ],
        out_specs=pl.BlockSpec((bt, Tds, F), lambda bi: (bi, 0, 0)),
        compiler_params=pltpu.CompilerParams(
            dimension_semantics=("parallel",),
            vmem_limit_bytes=_VMEM_LIMIT_BYTES),
    )(xe, xo, w, b)


def _upsample_call(x, w, b, bt):
    B, Tds, F = x.shape
    return pl.pallas_call(
        _upsample_kernel,
        out_shape=(jax.ShapeDtypeStruct((B, Tds + 1, F), jnp.float32),
                   jax.ShapeDtypeStruct((B, Tds, F), jnp.float32)),
        grid=(B // bt,),
        in_specs=[
            pl.BlockSpec((bt, Tds, F), lambda bi: (bi, 0, 0)),
            pl.BlockSpec((F, 5 * F), lambda bi: (0, 0)),
            pl.BlockSpec((1, F), lambda bi: (0, 0)),
        ],
        out_specs=(pl.BlockSpec((bt, Tds + 1, F), lambda bi: (bi, 0, 0)),
                   pl.BlockSpec((bt, Tds, F), lambda bi: (bi, 0, 0))),
        compiler_params=pltpu.CompilerParams(
            dimension_semantics=("parallel",),
            vmem_limit_bytes=_VMEM_LIMIT_BYTES),
    )(x, w, b)


def _conformer_stack_call(x, mask_bias, packed, num_heads, bt):
    B, T, F = x.shape
    L = packed["vecF"].shape[0]
    NV = packed["vecF"].shape[1]
    ffn = packed["vecH"].shape[2]
    K = packed["w_dw"].shape[1]

    def act_map(bi, li):    # activations / mask / output: resident across layers
        return (bi, 0, 0)

    def wt_map(bi, li):     # stacked per-layer weights: streamed over the layer axis
        return (li, 0, 0)

    in_specs = [
        pl.BlockSpec((bt, T, F), act_map),            # x (only used at layer 0)
        pl.BlockSpec((bt, 1, T), act_map),            # additive key-padding bias
        pl.BlockSpec((None, NV, F), wt_map),          # stacked F-sized vectors
        pl.BlockSpec((None, 2, ffn), wt_map),         # stacked ffn-sized biases
        pl.BlockSpec((None, F, ffn), wt_map),         # ff1 w1
        pl.BlockSpec((None, ffn, F), wt_map),         # ff1 w2
        pl.BlockSpec((None, F, 2 * F), wt_map),       # pointwise_conv1 (fused a|gate)
        pl.BlockSpec((None, K, F), wt_map),           # depthwise conv (BN folded)
        pl.BlockSpec((None, F, F), wt_map),           # pointwise_conv2
        pl.BlockSpec((None, F, 3 * F), wt_map),       # fused QKV
        pl.BlockSpec((None, F, F), wt_map),           # attention out proj
        pl.BlockSpec((None, F, ffn), wt_map),         # ff2 w1
        pl.BlockSpec((None, ffn, F), wt_map),         # ff2 w2
    ]
    kernel = functools.partial(_conformer_stack_kernel, num_heads)
    return pl.pallas_call(
        kernel,
        out_shape=jax.ShapeDtypeStruct((B, T, F), jnp.float32),
        grid=(B // bt, L),
        in_specs=in_specs,
        out_specs=pl.BlockSpec((bt, T, F), act_map),  # out block == layer carry
        compiler_params=pltpu.CompilerParams(
            dimension_semantics=("parallel", "arbitrary"),
            vmem_limit_bytes=_VMEM_LIMIT_BYTES),
    )(x, mask_bias,
      packed["vecF"], packed["vecH"],
      packed["w_ff1a"], packed["w_ff1b"], packed["w_pw1"], packed["w_dw"],
      packed["w_pw2"], packed["w_qkv"], packed["w_o"],
      packed["w_ff2a"], packed["w_ff2b"])


# ---------------------------------------------------------------------------
# full Conformer forward (glue in plain JAX, hot paths in Pallas)
# ---------------------------------------------------------------------------
@functools.partial(jax.jit, static_argnames=("num_heads", "batch_block"))
def conformer_forward(x, lengths, packed, num_heads, batch_block=1):
    B, T, F = x.shape
    tds = (T - 1) // 2 + 1

    # per-grid-step batch block: amortizes per-layer weight DMA across Bt batch
    # rows and raises GEMM M to Bt*T.  Fall back to 1 when the (Bt,T,F)<->(Bt*T,F)
    # reshapes would not be layout preserving (tds % 8 != 0) or B is indivisible.
    bt = max(int(batch_block), 1)
    if tds % 8 != 0:
        bt = 1
    while bt > 1 and B % bt != 0:
        bt -= 1

    # downsample Conv1d(F, F, k=5, stride=2, padding=2): pad + phase split is glue
    x_pad = jnp.pad(x, ((0, 0), (2, 2), (0, 0)))
    xe = x_pad[:, 0::2, :][:, :tds + 2, :]
    xo = x_pad[:, 1::2, :][:, :tds + 1, :]
    h = _downsample_call(xe, xo, packed["down_w"], packed["down_b"], bt)

    # key padding mask for downsampled lengths (True -> padding); additive bias form
    ds_len = (lengths + 1) // 2
    pad_mask = jnp.arange(tds, dtype=lengths.dtype)[None, :] >= ds_len[:, None]
    mask_bias = jnp.where(pad_mask, jnp.float32(-1e30), jnp.float32(0.0))[:, None, :]

    # all conformer blocks in ONE pallas_call: grid = (batch-blocks [parallel], layer)
    h = _conformer_stack_call(h, mask_bias, packed, num_heads, bt)

    # upsample ConvTranspose1d(F, F, k=5, stride=2, padding=1); interleave is glue
    even, odd = _upsample_call(h, packed["up_w"], packed["up_b"], bt)
    inter = jnp.stack([even[:, :tds, :], odd], axis=2).reshape(B, 2 * tds, F)
    full = jnp.concatenate([inter, even[:, tds:tds + 1, :]], axis=1)
    return full[:, :T, :], lengths


# ---------------------------------------------------------------------------
# parameter packing: stack per-layer weights, fuse GEMMs, fold BN / attn scale
# ---------------------------------------------------------------------------
def pack_params(params, num_heads):
    F = params["down_b"].shape[-1]
    assert F % num_heads == 0
    scale = 1.0 / float((F // num_heads) ** 0.5)

    def one(bp):
        # BatchNorm (eval mode, running stats) folded into the depthwise conv
        s = bp["cv_bng"] * jax.lax.rsqrt(bp["cv_bnv"] + _EPS)          # (1, F)
        dw_w = bp["cv_dw_w"] * s                                       # (K, F)
        dw_b = (bp["cv_dw_b"] - bp["cv_bnm"]) * s + bp["cv_bnb"]       # (1, F)
        vecF = jnp.concatenate([
            bp["ff1_lng"], bp["ff1_lnb"], bp["ff1_b2"],
            bp["cv_lng"], bp["cv_lnb"], bp["cv_pw1_ba"], bp["cv_pw1_bb"],
            dw_b, bp["cv_pw2_b"],
            bp["mh_lng"], bp["mh_lnb"],
            bp["mh_bq"] * scale, bp["mh_bk"], bp["mh_bv"], bp["mh_bo"],
            bp["ff2_lng"], bp["ff2_lnb"], bp["ff2_b2"],
            bp["fln_g"], bp["fln_b"],
        ], axis=0)                                                     # (20, F)
        vecH = jnp.concatenate([bp["ff1_b1"], bp["ff2_b1"]], axis=0)   # (2, ffn)
        w_qkv = jnp.concatenate(
            [bp["mh_wq"] * scale, bp["mh_wk"], bp["mh_wv"]], axis=1)   # (F, 3F)
        w_pw1 = jnp.concatenate([bp["cv_pw1_wa"], bp["cv_pw1_wb"]], axis=1)
        return dict(vecF=vecF, vecH=vecH, w_dw=dw_w,
                    w_ff1a=bp["ff1_w1"], w_ff1b=bp["ff1_w2"],
                    w_pw1=w_pw1, w_pw2=bp["cv_pw2_w"],
                    w_qkv=w_qkv, w_o=bp["mh_wo"],
                    w_ff2a=bp["ff2_w1"], w_ff2b=bp["ff2_w2"])

    per = [one(bp) for bp in params["blocks"]]

    def stack(name, dtype):
        return jnp.stack([p[name] for p in per], axis=0).astype(dtype)

    packed = {
        "vecF": stack("vecF", jnp.float32),
        "vecH": stack("vecH", jnp.float32),
        "w_dw": stack("w_dw", jnp.float32),
        "w_ff1a": stack("w_ff1a", jnp.bfloat16),
        "w_ff1b": stack("w_ff1b", jnp.bfloat16),
        "w_pw1": stack("w_pw1", jnp.bfloat16),
        "w_pw2": stack("w_pw2", jnp.bfloat16),
        "w_qkv": stack("w_qkv", jnp.bfloat16),
        "w_o": stack("w_o", jnp.bfloat16),
        "w_ff2a": stack("w_ff2a", jnp.bfloat16),
        "w_ff2b": stack("w_ff2b", jnp.bfloat16),
        # down/up-sample conv taps fused into single GEMM operands
        "down_w": params["down_w"].reshape(5 * F, F).astype(jnp.bfloat16),
        "down_b": params["down_b"].astype(jnp.float32),
        "up_w": (jnp.transpose(params["up_w"], (1, 0, 2)).reshape(F, 5 * F)
                 .astype(jnp.bfloat16)),
        "up_b": params["up_b"].astype(jnp.float32),
    }
    return packed


# ---------------------------------------------------------------------------
# deterministic parameter initialization (synthetic, not a checkpoint)
# ---------------------------------------------------------------------------
class _KeyGen:
    def __init__(self, key):
        self._key = key

    def __call__(self):
        self._key, sub = jax.random.split(self._key)
        return sub


def _init_block_params(kg, F, ffn, K):
    def n(shape, scale):
        return (scale * jax.random.normal(kg(), shape)).astype(jnp.float32)

    def ln():
        return 1.0 + n((1, F), 0.1), n((1, F), 0.1)

    p = {}
    p["ff1_lng"], p["ff1_lnb"] = ln()
    p["ff1_w1"] = n((F, ffn), 0.3 / F ** 0.5); p["ff1_b1"] = n((1, ffn), 0.02)
    p["ff1_w2"] = n((ffn, F), 0.3 / ffn ** 0.5); p["ff1_b2"] = n((1, F), 0.02)

    p["cv_lng"], p["cv_lnb"] = ln()
    p["cv_pw1_wa"] = n((F, F), 0.3 / F ** 0.5); p["cv_pw1_ba"] = n((1, F), 0.02)
    p["cv_pw1_wb"] = n((F, F), 0.3 / F ** 0.5); p["cv_pw1_bb"] = n((1, F), 0.02)
    p["cv_dw_w"] = n((K, F), 0.3 / K ** 0.5); p["cv_dw_b"] = n((1, F), 0.02)
    p["cv_bng"] = 1.0 + n((1, F), 0.1)
    p["cv_bnb"] = n((1, F), 0.1)
    p["cv_bnm"] = n((1, F), 0.1)
    p["cv_bnv"] = (0.75 + 0.5 * jax.random.uniform(kg(), (1, F))).astype(jnp.float32)
    p["cv_pw2_w"] = n((F, F), 0.3 / F ** 0.5); p["cv_pw2_b"] = n((1, F), 0.02)

    p["mh_lng"], p["mh_lnb"] = ln()
    for nm in ("q", "k", "v", "o"):
        p[f"mh_w{nm}"] = n((F, F), 0.3 / F ** 0.5)
        p[f"mh_b{nm}"] = n((1, F), 0.02)

    p["ff2_lng"], p["ff2_lnb"] = ln()
    p["ff2_w1"] = n((F, ffn), 0.3 / F ** 0.5); p["ff2_b1"] = n((1, ffn), 0.02)
    p["ff2_w2"] = n((ffn, F), 0.3 / ffn ** 0.5); p["ff2_b2"] = n((1, F), 0.02)

    p["fln_g"], p["fln_b"] = ln()
    return p


def init_conformer_params(key, F, ffn, num_layers, K):
    kg = _KeyGen(key)

    def n(shape, scale):
        return (scale * jax.random.normal(kg(), shape)).astype(jnp.float32)

    return {
        # Conv1d weight, pre-transposed to (K=5, C_in, C_out)
        "down_w": n((5, F, F), 0.2 / (5 * F) ** 0.5),
        "down_b": n((1, F), 0.02),
        # ConvTranspose1d weight, pre-transposed to (K=5, C_in, C_out)
        "up_w": n((5, F, F), 0.2 / (5 * F) ** 0.5),
        "up_b": n((1, F), 0.02),
        "blocks": [_init_block_params(kg, F, ffn, K) for _ in range(num_layers)],
    }


# ---------------------------------------------------------------------------
if __name__ == "__main__":
    B, T, F = 4, 16, 32          # batch, frames, input_dim
    NUM_HEADS = 4
    FFN_DIM = 64
    NUM_LAYERS = 2
    DW_KERNEL = 7                # depthwise_conv_kernel_size

    root = jax.random.PRNGKey(0)
    k_params, k_x = jax.random.split(root)
    raw_params = init_conformer_params(k_params, F, FFN_DIM, NUM_LAYERS, DW_KERNEL)
    # TODO(synk): real checkpoints (F >= 256) are lane dense; pad F to a multiple
    # of 128 at pack time when running narrow feature dims for full vst width.
    packed = pack_params(raw_params, NUM_HEADS)

    x = jax.random.normal(k_x, (B, T, F), dtype=jnp.float32)
    lengths = jnp.array([16, 11, 16, 7], dtype=jnp.int32)

    out, out_lengths = conformer_forward(x, lengths, packed,
                                         num_heads=NUM_HEADS, batch_block=2)
    out = jax.block_until_ready(out)
    out_lengths = jax.block_until_ready(out_lengths)

    assert out.shape == (B, T, F), out.shape
    assert out_lengths.shape == (B,), out_lengths.shape
    assert bool(jnp.all(jnp.isfinite(out)))
    print("KERNEL_OK")
</pallas_src>

<mosaic_0001>
module attributes {stable_mosaic.version = 11 : i64} {
  func.func @_downsample_kernel(%arg0: i32, %arg1: memref<2x10x32xf32, #tpu.memory_space<vmem>>, %arg2: memref<2x9x32xf32, #tpu.memory_space<vmem>>, %arg3: memref<160x32xbf16, #tpu.memory_space<vmem>>, %arg4: memref<1x32xf32, #tpu.memory_space<vmem>>, %arg5: memref<2x8x32xf32, #tpu.memory_space<vmem>>) attributes {dimension_semantics = [#tpu.dimension_semantics<parallel>], iteration_bounds = array<i64: 2>, scalar_prefetch = 0 : i64, scratch_operands = 0 : i64, tpu.core_type = #tpu.core_type<tc>, window_params = [{transform_indices = @transform_0, window_bounds = array<i64: 2, 10, 32>}, {transform_indices = @transform_1, window_bounds = array<i64: 2, 9, 32>}, {pipeline_mode = #tpu.pipeline_mode<synchronous>, transform_indices = @transform_2, window_bounds = array<i64: 160, 32>}, {pipeline_mode = #tpu.pipeline_mode<synchronous>, transform_indices = @transform_3, window_bounds = array<i64: 1, 32>}, {transform_indices = @transform_4, window_bounds = array<i64: 2, 8, 32>}]} {
    %c0 = arith.constant 0 : index
    %c0_0 = arith.constant 0 : index
    %c0_1 = arith.constant 0 : index
    %0 = vector.load %arg1[%c0, %c0_0, %c0_1] : memref<2x10x32xf32, #tpu.memory_space<vmem>>, vector<2x10x32xf32>
    %c0_2 = arith.constant 0 : index
    %c0_3 = arith.constant 0 : index
    %c0_4 = arith.constant 0 : index
    %1 = vector.load %arg2[%c0_2, %c0_3, %c0_4] : memref<2x9x32xf32, #tpu.memory_space<vmem>>, vector<2x9x32xf32>
    %2 = vector.extract_strided_slice %0 {offsets = [0, 0, 0], sizes = [2, 8, 32], strides = [1, 1, 1]} : vector<2x10x32xf32> to vector<2x8x32xf32>
    %3 = vector.extract_strided_slice %1 {offsets = [0, 0, 0], sizes = [2, 8, 32], strides = [1, 1, 1]} : vector<2x9x32xf32> to vector<2x8x32xf32>
    %4 = vector.extract_strided_slice %0 {offsets = [0, 1, 0], sizes = [2, 8, 32], strides = [1, 1, 1]} : vector<2x10x32xf32> to vector<2x8x32xf32>
    %5 = vector.extract_strided_slice %1 {offsets = [0, 1, 0], sizes = [2, 8, 32], strides = [1, 1, 1]} : vector<2x9x32xf32> to vector<2x8x32xf32>
    %6 = vector.extract_strided_slice %0 {offsets = [0, 2, 0], sizes = [2, 8, 32], strides = [1, 1, 1]} : vector<2x10x32xf32> to vector<2x8x32xf32>
    %7 = tpu.concatenate %2, %3, %4, %5, %6 in 2 : vector<2x8x32xf32>, vector<2x8x32xf32>, vector<2x8x32xf32>, vector<2x8x32xf32>, vector<2x8x32xf32> -> vector<2x8x160xf32>
    %8 = vector.shape_cast %7 : vector<2x8x160xf32> to vector<16x160xf32>
    %9 = arith.truncf %8 : vector<16x160xf32> to vector<16x160xbf16>
    %c0_5 = arith.constant 0 : index
    %c0_6 = arith.constant 0 : index
    %10 = vector.load %arg3[%c0_5, %c0_6] : memref<160x32xbf16, #tpu.memory_space<vmem>>, vector<160x32xbf16>
    %cst = arith.constant dense<0.000000e+00> : vector<16x32xf32>
    %11 = tpu.matmul %9, %10, %cst {dimension_numbers = #tpu.dot_dimension_numbers<[1], [0], [0], [1], [0, 0, 1, 1], [], []>} : vector<16x160xbf16>, vector<160x32xbf16>, vector<16x32xf32> -> vector<16x32xf32>
    %c0_7 = arith.constant 0 : index
    %c0_8 = arith.constant 0 : index
    %12 = vector.load %arg4[%c0_7, %c0_8] : memref<1x32xf32, #tpu.memory_space<vmem>>, vector<1x32xf32>
    %13 = vector.broadcast %12 : vector<1x32xf32> to vector<16x32xf32>
    %14 = arith.addf %11, %13 : vector<16x32xf32>
    %15 = vector.shape_cast %14 : vector<16x32xf32> to vector<2x8x32xf32>
    %c0_9 = arith.constant 0 : index
    %c0_10 = arith.constant 0 : index
    %c0_11 = arith.constant 0 : index
    %16 = vector.load %arg5[%c0_9, %c0_10, %c0_11] : memref<2x8x32xf32, #tpu.memory_space<vmem>>, vector<2x8x32xf32>
    tpu.vector_store %arg5[%c0_9, %c0_10, %c0_11], %15 {strides = array<i32>} : memref<2x8x32xf32, #tpu.memory_space<vmem>>, vector<2x8x32xf32>,
    return
  }
  func.func @transform_0(%arg0: i32) -> (i32, i32, i32) {
    %c0_i32 = arith.constant 0 : i32
    %c0_i32_0 = arith.constant 0 : i32
    %c0_i32_1 = arith.constant 0 : i32
    return %arg0, %c0_i32, %c0_i32_0 : i32, i32, i32
  }
  func.func @transform_1(%arg0: i32) -> (i32, i32, i32) {
    %c0_i32 = arith.constant 0 : i32
    %c0_i32_0 = arith.constant 0 : i32
    %c0_i32_1 = arith.constant 0 : i32
    return %arg0, %c0_i32, %c0_i32_0 : i32, i32, i32
  }
  func.func @transform_2(%arg0: i32) -> (i32, i32) {
    %c0_i32 = arith.constant 0 : i32
    %c0_i32_0 = arith.constant 0 : i32
    %c0_i32_1 = arith.constant 0 : i32
    return %c0_i32, %c0_i32_0 : i32, i32
  }
  func.func @transform_3(%arg0: i32) -> (i32, i32) {
    %c0_i32 = arith.constant 0 : i32
    %c0_i32_0 = arith.constant 0 : i32
    %c0_i32_1 = arith.constant 0 : i32
    return %c0_i32, %c0_i32_0 : i32, i32
  }
  func.func @transform_4(%arg0: i32) -> (i32, i32, i32) {
    %c0_i32 = arith.constant 0 : i32
    %c0_i32_0 = arith.constant 0 : i32
    %c0_i32_1 = arith.constant 0 : i32
    return %arg0, %c0_i32, %c0_i32_0 : i32, i32, i32
  }
}

module attributes {stable_mosaic.version = 11 : i64} {
  func.func @_upsample_kernel(%arg0: i32, %arg1: memref<2x8x32xf32, #tpu.memory_space<vmem>>, %arg2: memref<32x160xbf16, #tpu.memory_space<vmem>>, %arg3: memref<1x32xf32, #tpu.memory_space<vmem>>, %arg4: memref<2x9x32xf32, #tpu.memory_space<vmem>>, %arg5: memref<2x8x32xf32, #tpu.memory_space<vmem>>) attributes {dimension_semantics = [#tpu.dimension_semantics<parallel>], iteration_bounds = array<i64: 2>, scalar_prefetch = 0 : i64, scratch_operands = 0 : i64, tpu.core_type = #tpu.core_type<tc>, window_params = [{transform_indices = @transform_0, window_bounds = array<i64: 2, 8, 32>}, {pipeline_mode = #tpu.pipeline_mode<synchronous>, transform_indices = @transform_1, window_bounds = array<i64: 32, 160>}, {pipeline_mode = #tpu.pipeline_mode<synchronous>, transform_indices = @transform_2, window_bounds = array<i64: 1, 32>}, {transform_indices = @transform_3, window_bounds = array<i64: 2, 9, 32>}, {transform_indices = @transform_4, window_bounds = array<i64: 2, 8, 32>}]} {
    %c0 = arith.constant 0 : index
    %c0_0 = arith.constant 0 : index
    %c0_1 = arith.constant 0 : index
    %0 = vector.load %arg1[%c0, %c0_0, %c0_1] : memref<2x8x32xf32, #tpu.memory_space<vmem>>, vector<2x8x32xf32>
    %1 = vector.shape_cast %0 : vector<2x8x32xf32> to vector<16x32xf32>
    %2 = arith.truncf %1 : vector<16x32xf32> to vector<16x32xbf16>
    %c0_2 = arith.constant 0 : index
    %c0_3 = arith.constant 0 : index
    %3 = vector.load %arg2[%c0_2, %c0_3] : memref<32x160xbf16, #tpu.memory_space<vmem>>, vector<32x160xbf16>
    %cst = arith.constant dense<0.000000e+00> : vector<16x160xf32>
    %4 = tpu.matmul %2, %3, %cst {dimension_numbers = #tpu.dot_dimension_numbers<[1], [0], [0], [1], [0, 0, 1, 1], [], []>} : vector<16x32xbf16>, vector<32x160xbf16>, vector<16x160xf32> -> vector<16x160xf32>
    %5 = vector.shape_cast %4 : vector<16x160xf32> to vector<2x8x160xf32>
    %c0_4 = arith.constant 0 : index
    %c0_5 = arith.constant 0 : index
    %6 = vector.load %arg3[%c0_4, %c0_5] : memref<1x32xf32, #tpu.memory_space<vmem>>, vector<1x32xf32>
    %7 = vector.extract_strided_slice %5 {offsets = [0, 0, 0], sizes = [2, 8, 32], strides = [1, 1, 1]} : vector<2x8x160xf32> to vector<2x8x32xf32>
    %8 = vector.extract_strided_slice %5 {offsets = [0, 0, 32], sizes = [2, 8, 32], strides = [1, 1, 1]} : vector<2x8x160xf32> to vector<2x8x32xf32>
    %9 = vector.extract_strided_slice %5 {offsets = [0, 0, 64], sizes = [2, 8, 32], strides = [1, 1, 1]} : vector<2x8x160xf32> to vector<2x8x32xf32>
    %10 = vector.extract_strided_slice %5 {offsets = [0, 0, 96], sizes = [2, 8, 32], strides = [1, 1, 1]} : vector<2x8x160xf32> to vector<2x8x32xf32>
    %11 = vector.extract_strided_slice %5 {offsets = [0, 0, 128], sizes = [2, 8, 32], strides = [1, 1, 1]} : vector<2x8x160xf32> to vector<2x8x32xf32>
    %cst_6 = arith.constant 0.000000e+00 : f32
    %12 = vector.broadcast %cst_6 : f32 to vector<2x1x32xf32>
    %13 = tpu.concatenate %8, %12 in 1 : vector<2x8x32xf32>, vector<2x1x32xf32> -> vector<2x9x32xf32>
    %14 = vector.shape_cast %6 : vector<1x32xf32> to vector<1x1x32xf32>
    %15 = vector.broadcast %14 : vector<1x1x32xf32> to vector<2x9x32xf32>
    %16 = arith.addf %15, %13 : vector<2x9x32xf32>
    %17 = tpu.concatenate %12, %10 in 1 : vector<2x1x32xf32>, vector<2x8x32xf32> -> vector<2x9x32xf32>
    %18 = arith.addf %16, %17 : vector<2x9x32xf32>
    %c0_7 = arith.constant 0 : index
    %c0_8 = arith.constant 0 : index
    %c0_9 = arith.constant 0 : index
    %19 = vector.load %arg4[%c0_7, %c0_8, %c0_9] : memref<2x9x32xf32, #tpu.memory_space<vmem>>, vector<2x9x32xf32>
    tpu.vector_store %arg4[%c0_7, %c0_8, %c0_9], %18 {strides = array<i32>} : memref<2x9x32xf32, #tpu.memory_space<vmem>>, vector<2x9x32xf32>,
    %20 = vector.shape_cast %6 : vector<1x32xf32> to vector<1x1x32xf32>
    %21 = vector.broadcast %20 : vector<1x1x32xf32> to vector<2x8x32xf32>
    %22 = arith.addf %21, %9 : vector<2x8x32xf32>
    %23 = vector.extract_strided_slice %7 {offsets = [0, 1, 0], sizes = [2, 7, 32], strides = [1, 1, 1]} : vector<2x8x32xf32> to vector<2x7x32xf32>
    %24 = tpu.concatenate %23, %12 in 1 : vector<2x7x32xf32>, vector<2x1x32xf32> -> vector<2x8x32xf32>
    %25 = arith.addf %22, %24 : vector<2x8x32xf32>
    %26 = vector.extract_strided_slice %11 {offsets = [0, 0, 0], sizes = [2, 7, 32], strides = [1, 1, 1]} : vector<2x8x32xf32> to vector<2x7x32xf32>
    %27 = tpu.concatenate %12, %26 in 1 : vector<2x1x32xf32>, vector<2x7x32xf32> -> vector<2x8x32xf32>
    %28 = arith.addf %25, %27 : vector<2x8x32xf32>
    %c0_10 = arith.constant 0 : index
    %c0_11 = arith.constant 0 : index
    %c0_12 = arith.constant 0 : index
    %29 = vector.load %arg5[%c0_10, %c0_11, %c0_12] : memref<2x8x32xf32, #tpu.memory_space<vmem>>, vector<2x8x32xf32>
    tpu.vector_store %arg5[%c0_10, %c0_11, %c0_12], %28 {strides = array<i32>} : memref<2x8x32xf32, #tpu.memory_space<vmem>>, vector<2x8x32xf32>,
    return
  }
  func.func @transform_0(%arg0: i32) -> (i32, i32, i32) {
    %c0_i32 = arith.constant 0 : i32
    %c0_i32_0 = arith.constant 0 : i32
    %c0_i32_1 = arith.constant 0 : i32
    return %arg0, %c0_i32, %c0_i32_0 : i32, i32, i32
  }
  func.func @transform_1(%arg0: i32) -> (i32, i32) {
    %c0_i32 = arith.constant 0 : i32
    %c0_i32_0 = arith.constant 0 : i32
    %c0_i32_1 = arith.constant 0 : i32
    return %c0_i32, %c0_i32_0 : i32, i32
  }
  func.func @transform_2(%arg0: i32) -> (i32, i32) {
    %c0_i32 = arith.constant 0 : i32
    %c0_i32_0 = arith.constant 0 : i32
    %c0_i32_1 = arith.constant 0 : i32
    return %c0_i32, %c0_i32_0 : i32, i32
  }
  func.func @transform_3(%arg0: i32) -> (i32, i32, i32) {
    %c0_i32 = arith.constant 0 : i32
    %c0_i32_0 = arith.constant 0 : i32
    %c0_i32_1 = arith.constant 0 : i32
    return %arg0, %c0_i32, %c0_i32_0 : i32, i32, i32
  }
  func.func @transform_4(%arg0: i32) -> (i32, i32, i32) {
    %c0_i32 = arith.constant 0 : i32
    %c0_i32_0 = arith.constant 0 : i32
    %c0_i32_1 = arith.constant 0 : i32
    return %arg0, %c0_i32, %c0_i32_0 : i32, i32, i32
  }
}

module attributes {stable_mosaic.version = 11 : i64} {
  func.func @_conformer_stack_kernel(%arg0: i32, %arg1: i32, %arg2: memref<2x8x32xf32, #tpu.memory_space<vmem>>, %arg3: memref<2x1x8xf32, #tpu.memory_space<vmem>>, %arg4: memref<1x20x32xf32, #tpu.memory_space<vmem>>, %arg5: memref<1x2x64xf32, #tpu.memory_space<vmem>>, %arg6: memref<1x32x64xbf16, #tpu.memory_space<vmem>>, %arg7: memref<1x64x32xbf16, #tpu.memory_space<vmem>>, %arg8: memref<1x32x64xbf16, #tpu.memory_space<vmem>>, %arg9: memref<1x7x32xf32, #tpu.memory_space<vmem>>, %arg10: memref<1x32x32xbf16, #tpu.memory_space<vmem>>, %arg11: memref<1x32x96xbf16, #tpu.memory_space<vmem>>, %arg12: memref<1x32x32xbf16, #tpu.memory_space<vmem>>, %arg13: memref<1x32x64xbf16, #tpu.memory_space<vmem>>, %arg14: memref<1x64x32xbf16, #tpu.memory_space<vmem>>, %arg15: memref<2x8x32xf32, #tpu.memory_space<vmem>>) attributes {dimension_semantics = [#tpu.dimension_semantics<parallel>, #tpu.dimension_semantics<arbitrary>], iteration_bounds = array<i64: 2, 2>, scalar_prefetch = 0 : i64, scratch_operands = 0 : i64, tpu.core_type = #tpu.core_type<tc>, window_params = [{transform_indices = @transform_0, window_bounds = array<i64: 2, 8, 32>}, {transform_indices = @transform_1, window_bounds = array<i64: 2, 1, 8>}, {transform_indices = @transform_2, window_bounds = array<i64: 1, 20, 32>}, {transform_indices = @transform_3, window_bounds = array<i64: 1, 2, 64>}, {transform_indices = @transform_4, window_bounds = array<i64: 1, 32, 64>}, {transform_indices = @transform_5, window_bounds = array<i64: 1, 64, 32>}, {transform_indices = @transform_6, window_bounds = array<i64: 1, 32, 64>}, {transform_indices = @transform_7, window_bounds = array<i64: 1, 7, 32>}, {transform_indices = @transform_8, window_bounds = array<i64: 1, 32, 32>}, {transform_indices = @transform_9, window_bounds = array<i64: 1, 32, 96>}, {transform_indices = @transform_10, window_bounds = array<i64: 1, 32, 32>}, {transform_indices = @transform_11, window_bounds = array<i64: 1, 32, 64>}, {transform_indices = @transform_12, window_bounds = array<i64: 1, 64, 32>}, {transform_indices = @transform_13, window_bounds = array<i64: 2, 8, 32>}]} {
    %c0_i32 = arith.constant 0 : i32
    %0 = arith.cmpi eq, %arg1, %c0_i32 : i32
    %1 = arith.extui %0 : i1 to i32
    %c0_i32_0 = arith.constant 0 : i32
    %2 = arith.cmpi ne, %1, %c0_i32_0 : i32
    scf.if %2 {
      %c0_102 = arith.constant 0 : index
      %c0_103 = arith.constant 0 : index
      %c0_104 = arith.constant 0 : index
      %370 = vector.load %arg2[%c0_102, %c0_103, %c0_104] : memref<2x8x32xf32, #tpu.memory_space<vmem>>, vector<2x8x32xf32>
      %c0_105 = arith.constant 0 : index
      %c0_106 = arith.constant 0 : index
      %c0_107 = arith.constant 0 : index
      %371 = vector.load %arg15[%c0_105, %c0_106, %c0_107] : memref<2x8x32xf32, #tpu.memory_space<vmem>>, vector<2x8x32xf32>
      tpu.vector_store %arg15[%c0_105, %c0_106, %c0_107], %370 {strides = array<i32>} : memref<2x8x32xf32, #tpu.memory_space<vmem>>, vector<2x8x32xf32>,
    } else {
    }
    %c0 = arith.constant 0 : index
    %c0_1 = arith.constant 0 : index
    %c0_2 = arith.constant 0 : index
    %3 = vector.load %arg15[%c0, %c0_1, %c0_2] : memref<2x8x32xf32, #tpu.memory_space<vmem>>, vector<2x8x32xf32>
    %4 = vector.shape_cast %3 : vector<2x8x32xf32> to vector<16x32xf32>
    %c0_3 = arith.constant 0 : index
    %c0_4 = arith.constant 0 : index
    %c0_5 = arith.constant 0 : index
    %5 = vector.load %arg4[%c0_3, %c0_4, %c0_5] : memref<1x20x32xf32, #tpu.memory_space<vmem>>, vector<1x20x32xf32>
    %6 = vector.shape_cast %5 : vector<1x20x32xf32> to vector<20x32xf32>
    %7 = vector.extract_strided_slice %6 {offsets = [0, 0], sizes = [1, 32], strides = [1, 1]} : vector<20x32xf32> to vector<1x32xf32>
    %8 = vector.extract_strided_slice %6 {offsets = [1, 0], sizes = [1, 32], strides = [1, 1]} : vector<20x32xf32> to vector<1x32xf32>
    %9 = vector.extract_strided_slice %6 {offsets = [2, 0], sizes = [1, 32], strides = [1, 1]} : vector<20x32xf32> to vector<1x32xf32>
    %10 = vector.extract_strided_slice %6 {offsets = [3, 0], sizes = [1, 32], strides = [1, 1]} : vector<20x32xf32> to vector<1x32xf32>
    %11 = vector.extract_strided_slice %6 {offsets = [4, 0], sizes = [1, 32], strides = [1, 1]} : vector<20x32xf32> to vector<1x32xf32>
    %12 = vector.extract_strided_slice %6 {offsets = [5, 0], sizes = [1, 32], strides = [1, 1]} : vector<20x32xf32> to vector<1x32xf32>
    %13 = vector.extract_strided_slice %6 {offsets = [6, 0], sizes = [1, 32], strides = [1, 1]} : vector<20x32xf32> to vector<1x32xf32>
    %14 = vector.extract_strided_slice %6 {offsets = [7, 0], sizes = [1, 32], strides = [1, 1]} : vector<20x32xf32> to vector<1x32xf32>
    %15 = vector.extract_strided_slice %6 {offsets = [8, 0], sizes = [1, 32], strides = [1, 1]} : vector<20x32xf32> to vector<1x32xf32>
    %16 = vector.extract_strided_slice %6 {offsets = [9, 0], sizes = [1, 32], strides = [1, 1]} : vector<20x32xf32> to vector<1x32xf32>
    %17 = vector.extract_strided_slice %6 {offsets = [10, 0], sizes = [1, 32], strides = [1, 1]} : vector<20x32xf32> to vector<1x32xf32>
    %18 = vector.extract_strided_slice %6 {offsets = [11, 0], sizes = [1, 32], strides = [1, 1]} : vector<20x32xf32> to vector<1x32xf32>
    %19 = vector.extract_strided_slice %6 {offsets = [12, 0], sizes = [1, 32], strides = [1, 1]} : vector<20x32xf32> to vector<1x32xf32>
    %20 = vector.extract_strided_slice %6 {offsets = [13, 0], sizes = [1, 32], strides = [1, 1]} : vector<20x32xf32> to vector<1x32xf32>
    %21 = vector.extract_strided_slice %6 {offsets = [14, 0], sizes = [1, 32], strides = [1, 1]} : vector<20x32xf32> to vector<1x32xf32>
    %22 = vector.extract_strided_slice %6 {offsets = [15, 0], sizes = [1, 32], strides = [1, 1]} : vector<20x32xf32> to vector<1x32xf32>
    %23 = vector.extract_strided_slice %6 {offsets = [16, 0], sizes = [1, 32], strides = [1, 1]} : vector<20x32xf32> to vector<1x32xf32>
    %24 = vector.extract_strided_slice %6 {offsets = [17, 0], sizes = [1, 32], strides = [1, 1]} : vector<20x32xf32> to vector<1x32xf32>
    %25 = vector.extract_strided_slice %6 {offsets = [18, 0], sizes = [1, 32], strides = [1, 1]} : vector<20x32xf32> to vector<1x32xf32>
    %26 = vector.extract_strided_slice %6 {offsets = [19, 0], sizes = [1, 32], strides = [1, 1]} : vector<20x32xf32> to vector<1x32xf32>
    %c0_6 = arith.constant 0 : index
    %c0_7 = arith.constant 0 : index
    %c0_8 = arith.constant 0 : index
    %27 = vector.load %arg5[%c0_6, %c0_7, %c0_8] : memref<1x2x64xf32, #tpu.memory_space<vmem>>, vector<1x2x64xf32>
    %28 = vector.shape_cast %27 : vector<1x2x64xf32> to vector<2x64xf32>
    %29 = vector.extract_strided_slice %28 {offsets = [0, 0], sizes = [1, 64], strides = [1, 1]} : vector<2x64xf32> to vector<1x64xf32>
    %30 = vector.extract_strided_slice %28 {offsets = [1, 0], sizes = [1, 64], strides = [1, 1]} : vector<2x64xf32> to vector<1x64xf32>
    %cst = arith.constant dense<0.000000e+00> : vector<16xf32>
    %31 = vector.multi_reduction <add>, %4, %cst [1] : vector<16x32xf32> to vector<16xf32>
    %32 = vector.shape_cast %31 : vector<16xf32> to vector<16x1xf32>
    %cst_9 = arith.constant 3.200000e+01 : f32
    %33 = vector.broadcast %cst_9 : f32 to vector<16x1xf32>
    %34 = arith.divf %32, %33 : vector<16x1xf32>
    %35 = vector.broadcast %34 : vector<16x1xf32> to vector<16x32xf32>
    %36 = arith.subf %4, %35 : vector<16x32xf32>
    %37 = arith.mulf %36, %36 : vector<16x32xf32>
    %cst_10 = arith.constant dense<0.000000e+00> : vector<16xf32>
    %38 = vector.multi_reduction <add>, %37, %cst_10 [1] : vector<16x32xf32> to vector<16xf32>
    %39 = vector.shape_cast %38 : vector<16xf32> to vector<16x1xf32>
    %cst_11 = arith.constant 3.200000e+01 : f32
    %40 = vector.broadcast %cst_11 : f32 to vector<16x1xf32>
    %41 = arith.divf %39, %40 : vector<16x1xf32>
    %cst_12 = arith.constant 9.99999974E-6 : f32
    %42 = vector.broadcast %cst_12 : f32 to vector<16x1xf32>
    %43 = arith.addf %41, %42 : vector<16x1xf32>
    %44 = math.rsqrt %43 : vector<16x1xf32>
    %45 = vector.broadcast %44 : vector<16x1xf32> to vector<16x32xf32>
    %46 = arith.mulf %36, %45 : vector<16x32xf32>
    %47 = vector.broadcast %7 : vector<1x32xf32> to vector<16x32xf32>
    %48 = arith.mulf %46, %47 : vector<16x32xf32>
    %49 = vector.broadcast %8 : vector<1x32xf32> to vector<16x32xf32>
    %50 = arith.addf %48, %49 : vector<16x32xf32>
    %51 = arith.truncf %50 : vector<16x32xf32> to vector<16x32xbf16>
    %c0_13 = arith.constant 0 : index
    %c0_14 = arith.constant 0 : index
    %c0_15 = arith.constant 0 : index
    %52 = vector.load %arg6[%c0_13, %c0_14, %c0_15] : memref<1x32x64xbf16, #tpu.memory_space<vmem>>, vector<1x32x64xbf16>
    %53 = vector.shape_cast %52 : vector<1x32x64xbf16> to vector<32x64xbf16>
    %cst_16 = arith.constant dense<0.000000e+00> : vector<16x64xf32>
    %54 = tpu.matmul %51, %53, %cst_16 {dimension_numbers = #tpu.dot_dimension_numbers<[1], [0], [0], [1], [0, 0, 1, 1], [], []>} : vector<16x32xbf16>, vector<32x64xbf16>, vector<16x64xf32> -> vector<16x64xf32>
    %55 = vector.broadcast %29 : vector<1x64xf32> to vector<16x64xf32>
    %56 = arith.addf %54, %55 : vector<16x64xf32>
    %cst_17 = arith.constant 0.000000e+00 : f32
    %57 = vector.broadcast %cst_17 : f32 to vector<16x64xf32>
    %58 = arith.subf %57, %56 : vector<16x64xf32>
    %59 = math.exp %58 : vector<16x64xf32>
    %cst_18 = arith.constant 1.000000e+00 : f32
    %60 = vector.broadcast %cst_18 : f32 to vector<16x64xf32>
    %61 = arith.addf %60, %59 : vector<16x64xf32>
    %62 = tpu.reciprocal %61 {approx = true} : vector<16x64xf32> -> vector<16x64xf32>
    %63 = arith.mulf %56, %62 : vector<16x64xf32>
    %64 = arith.truncf %63 : vector<16x64xf32> to vector<16x64xbf16>
    %c0_19 = arith.constant 0 : index
    %c0_20 = arith.constant 0 : index
    %c0_21 = arith.constant 0 : index
    %65 = vector.load %arg7[%c0_19, %c0_20, %c0_21] : memref<1x64x32xbf16, #tpu.memory_space<vmem>>, vector<1x64x32xbf16>
    %66 = vector.shape_cast %65 : vector<1x64x32xbf16> to vector<64x32xbf16>
    %cst_22 = arith.constant dense<0.000000e+00> : vector<16x32xf32>
    %67 = tpu.matmul %64, %66, %cst_22 {dimension_numbers = #tpu.dot_dimension_numbers<[1], [0], [0], [1], [0, 0, 1, 1], [], []>} : vector<16x64xbf16>, vector<64x32xbf16>, vector<16x32xf32> -> vector<16x32xf32>
    %68 = vector.broadcast %9 : vector<1x32xf32> to vector<16x32xf32>
    %69 = arith.addf %67, %68 : vector<16x32xf32>
    %cst_23 = arith.constant 5.000000e-01 : f32
    %70 = vector.broadcast %cst_23 : f32 to vector<16x32xf32>
    %71 = arith.mulf %70, %69 : vector<16x32xf32>
    %72 = arith.addf %71, %4 : vector<16x32xf32>
    %cst_24 = arith.constant dense<0.000000e+00> : vector<16xf32>
    %73 = vector.multi_reduction <add>, %72, %cst_24 [1] : vector<16x32xf32> to vector<16xf32>
    %74 = vector.shape_cast %73 : vector<16xf32> to vector<16x1xf32>
    %cst_25 = arith.constant 3.200000e+01 : f32
    %75 = vector.broadcast %cst_25 : f32 to vector<16x1xf32>
    %76 = arith.divf %74, %75 : vector<16x1xf32>
    %77 = vector.broadcast %76 : vector<16x1xf32> to vector<16x32xf32>
    %78 = arith.subf %72, %77 : vector<16x32xf32>
    %79 = arith.mulf %78, %78 : vector<16x32xf32>
    %cst_26 = arith.constant dense<0.000000e+00> : vector<16xf32>
    %80 = vector.multi_reduction <add>, %79, %cst_26 [1] : vector<16x32xf32> to vector<16xf32>
    %81 = vector.shape_cast %80 : vector<16xf32> to vector<16x1xf32>
    %cst_27 = arith.constant 3.200000e+01 : f32
    %82 = vector.broadcast %cst_27 : f32 to vector<16x1xf32>
    %83 = arith.divf %81, %82 : vector<16x1xf32>
    %cst_28 = arith.constant 9.99999974E-6 : f32
    %84 = vector.broadcast %cst_28 : f32 to vector<16x1xf32>
    %85 = arith.addf %83, %84 : vector<16x1xf32>
    %86 = math.rsqrt %85 : vector<16x1xf32>
    %87 = vector.broadcast %86 : vector<16x1xf32> to vector<16x32xf32>
    %88 = arith.mulf %78, %87 : vector<16x32xf32>
    %89 = vector.broadcast %10 : vector<1x32xf32> to vector<16x32xf32>
    %90 = arith.mulf %88, %89 : vector<16x32xf32>
    %91 = vector.broadcast %11 : vector<1x32xf32> to vector<16x32xf32>
    %92 = arith.addf %90, %91 : vector<16x32xf32>
    %93 = arith.truncf %92 : vector<16x32xf32> to vector<16x32xbf16>
    %c0_29 = arith.constant 0 : index
    %c0_30 = arith.constant 0 : index
    %c0_31 = arith.constant 0 : index
    %94 = vector.load %arg8[%c0_29, %c0_30, %c0_31] : memref<1x32x64xbf16, #tpu.memory_space<vmem>>, vector<1x32x64xbf16>
    %95 = vector.shape_cast %94 : vector<1x32x64xbf16> to vector<32x64xbf16>
    %cst_32 = arith.constant dense<0.000000e+00> : vector<16x64xf32>
    %96 = tpu.matmul %93, %95, %cst_32 {dimension_numbers = #tpu.dot_dimension_numbers<[1], [0], [0], [1], [0, 0, 1, 1], [], []>} : vector<16x32xbf16>, vector<32x64xbf16>, vector<16x64xf32> -> vector<16x64xf32>
    %97 = vector.extract_strided_slice %96 {offsets = [0, 0], sizes = [16, 32], strides = [1, 1]} : vector<16x64xf32> to vector<16x32xf32>
    %98 = vector.broadcast %12 : vector<1x32xf32> to vector<16x32xf32>
    %99 = arith.addf %97, %98 : vector<16x32xf32>
    %100 = vector.extract_strided_slice %96 {offsets = [0, 32], sizes = [16, 32], strides = [1, 1]} : vector<16x64xf32> to vector<16x32xf32>
    %101 = vector.broadcast %13 : vector<1x32xf32> to vector<16x32xf32>
    %102 = arith.addf %100, %101 : vector<16x32xf32>
    %cst_33 = arith.constant 0.000000e+00 : f32
    %103 = vector.broadcast %cst_33 : f32 to vector<16x32xf32>
    %104 = arith.subf %103, %102 : vector<16x32xf32>
    %105 = math.exp %104 : vector<16x32xf32>
    %cst_34 = arith.constant 1.000000e+00 : f32
    %106 = vector.broadcast %cst_34 : f32 to vector<16x32xf32>
    %107 = arith.addf %106, %105 : vector<16x32xf32>
    %108 = tpu.reciprocal %107 {approx = true} : vector<16x32xf32> -> vector<16x32xf32>
    %109 = arith.mulf %99, %108 : vector<16x32xf32>
    %c0_35 = arith.constant 0 : index
    %c0_36 = arith.constant 0 : index
    %c0_37 = arith.constant 0 : index
    %110 = vector.load %arg9[%c0_35, %c0_36, %c0_37] : memref<1x7x32xf32, #tpu.memory_space<vmem>>, vector<1x7x32xf32>
    %111 = vector.shape_cast %110 : vector<1x7x32xf32> to vector<7x32xf32>
    %112 = vector.shape_cast %109 : vector<16x32xf32> to vector<2x8x32xf32>
    %cst_38 = arith.constant 0.000000e+00 : f32
    %113 = vector.broadcast %cst_38 : f32 to vector<2x3x32xf32>
    %114 = tpu.concatenate %113, %112, %113 in 1 : vector<2x3x32xf32>, vector<2x8x32xf32>, vector<2x3x32xf32> -> vector<2x14x32xf32>
    %cst_39 = arith.constant 0.000000e+00 : f32
    %115 = vector.broadcast %cst_39 : f32 to vector<2x8x32xf32>
    %116 = vector.shape_cast %14 : vector<1x32xf32> to vector<1x1x32xf32>
    %117 = vector.broadcast %116 : vector<1x1x32xf32> to vector<2x8x32xf32>
    %118 = arith.addf %115, %117 : vector<2x8x32xf32>
    %119 = vector.extract_strided_slice %114 {offsets = [0, 0, 0], sizes = [2, 8, 32], strides = [1, 1, 1]} : vector<2x14x32xf32> to vector<2x8x32xf32>
    %120 = vector.extract_strided_slice %111 {offsets = [0, 0], sizes = [1, 32], strides = [1, 1]} : vector<7x32xf32> to vector<1x32xf32>
    %121 = vector.shape_cast %120 : vector<1x32xf32> to vector<1x1x32xf32>
    %122 = vector.broadcast %121 : vector<1x1x32xf32> to vector<2x8x32xf32>
    %123 = arith.mulf %119, %122 : vector<2x8x32xf32>
    %124 = arith.addf %118, %123 : vector<2x8x32xf32>
    %125 = vector.extract_strided_slice %114 {offsets = [0, 1, 0], sizes = [2, 8, 32], strides = [1, 1, 1]} : vector<2x14x32xf32> to vector<2x8x32xf32>
    %126 = vector.extract_strided_slice %111 {offsets = [1, 0], sizes = [1, 32], strides = [1, 1]} : vector<7x32xf32> to vector<1x32xf32>
    %127 = vector.shape_cast %126 : vector<1x32xf32> to vector<1x1x32xf32>
    %128 = vector.broadcast %127 : vector<1x1x32xf32> to vector<2x8x32xf32>
    %129 = arith.mulf %125, %128 : vector<2x8x32xf32>
    %130 = arith.addf %124, %129 : vector<2x8x32xf32>
    %131 = vector.extract_strided_slice %114 {offsets = [0, 2, 0], sizes = [2, 8, 32], strides = [1, 1, 1]} : vector<2x14x32xf32> to vector<2x8x32xf32>
    %132 = vector.extract_strided_slice %111 {offsets = [2, 0], sizes = [1, 32], strides = [1, 1]} : vector<7x32xf32> to vector<1x32xf32>
    %133 = vector.shape_cast %132 : vector<1x32xf32> to vector<1x1x32xf32>
    %134 = vector.broadcast %133 : vector<1x1x32xf32> to vector<2x8x32xf32>
    %135 = arith.mulf %131, %134 : vector<2x8x32xf32>
    %136 = arith.addf %130, %135 : vector<2x8x32xf32>
    %137 = vector.extract_strided_slice %114 {offsets = [0, 3, 0], sizes = [2, 8, 32], strides = [1, 1, 1]} : vector<2x14x32xf32> to vector<2x8x32xf32>
    %138 = vector.extract_strided_slice %111 {offsets = [3, 0], sizes = [1, 32], strides = [1, 1]} : vector<7x32xf32> to vector<1x32xf32>
    %139 = vector.shape_cast %138 : vector<1x32xf32> to vector<1x1x32xf32>
    %140 = vector.broadcast %139 : vector<1x1x32xf32> to vector<2x8x32xf32>
    %141 = arith.mulf %137, %140 : vector<2x8x32xf32>
    %142 = arith.addf %136, %141 : vector<2x8x32xf32>
    %143 = vector.extract_strided_slice %114 {offsets = [0, 4, 0], sizes = [2, 8, 32], strides = [1, 1, 1]} : vector<2x14x32xf32> to vector<2x8x32xf32>
    %144 = vector.extract_strided_slice %111 {offsets = [4, 0], sizes = [1, 32], strides = [1, 1]} : vector<7x32xf32> to vector<1x32xf32>
    %145 = vector.shape_cast %144 : vector<1x32xf32> to vector<1x1x32xf32>
    %146 = vector.broadcast %145 : vector<1x1x32xf32> to vector<2x8x32xf32>
    %147 = arith.mulf %143, %146 : vector<2x8x32xf32>
    %148 = arith.addf %142, %147 : vector<2x8x32xf32>
    %149 = vector.extract_strided_slice %114 {offsets = [0, 5, 0], sizes = [2, 8, 32], strides = [1, 1, 1]} : vector<2x14x32xf32> to vector<2x8x32xf32>
    %150 = vector.extract_strided_slice %111 {offsets = [5, 0], sizes = [1, 32], strides = [1, 1]} : vector<7x32xf32> to vector<1x32xf32>
    %151 = vector.shape_cast %150 : vector<1x32xf32> to vector<1x1x32xf32>
    %152 = vector.broadcast %151 : vector<1x1x32xf32> to vector<2x8x32xf32>
    %153 = arith.mulf %149, %152 : vector<2x8x32xf32>
    %154 = arith.addf %148, %153 : vector<2x8x32xf32>
    %155 = vector.extract_strided_slice %114 {offsets = [0, 6, 0], sizes = [2, 8, 32], strides = [1, 1, 1]} : vector<2x14x32xf32> to vector<2x8x32xf32>
    %156 = vector.extract_strided_slice %111 {offsets = [6, 0], sizes = [1, 32], strides = [1, 1]} : vector<7x32xf32> to vector<1x32xf32>
    %157 = vector.shape_cast %156 : vector<1x32xf32> to vector<1x1x32xf32>
    %158 = vector.broadcast %157 : vector<1x1x32xf32> to vector<2x8x32xf32>
    %159 = arith.mulf %155, %158 : vector<2x8x32xf32>
    %160 = arith.addf %154, %159 : vector<2x8x32xf32>
    %cst_40 = arith.constant 0.000000e+00 : f32
    %161 = vector.broadcast %cst_40 : f32 to vector<2x8x32xf32>
    %162 = arith.subf %161, %160 : vector<2x8x32xf32>
    %163 = math.exp %162 : vector<2x8x32xf32>
    %cst_41 = arith.constant 1.000000e+00 : f32
    %164 = vector.broadcast %cst_41 : f32 to vector<2x8x32xf32>
    %165 = arith.addf %164, %163 : vector<2x8x32xf32>
    %166 = tpu.reciprocal %165 {approx = true} : vector<2x8x32xf32> -> vector<2x8x32xf32>
    %167 = arith.mulf %160, %166 : vector<2x8x32xf32>
    %168 = vector.shape_cast %167 : vector<2x8x32xf32> to vector<16x32xf32>
    %169 = arith.truncf %168 : vector<16x32xf32> to vector<16x32xbf16>
    %c0_42 = arith.constant 0 : index
    %c0_43 = arith.constant 0 : index
    %c0_44 = arith.constant 0 : index
    %170 = vector.load %arg10[%c0_42, %c0_43, %c0_44] : memref<1x32x32xbf16, #tpu.memory_space<vmem>>, vector<1x32x32xbf16>
    %171 = vector.shape_cast %170 : vector<1x32x32xbf16> to vector<32x32xbf16>
    %cst_45 = arith.constant dense<0.000000e+00> : vector<16x32xf32>
    %172 = tpu.matmul %169, %171, %cst_45 {dimension_numbers = #tpu.dot_dimension_numbers<[1], [0], [0], [1], [0, 0, 1, 1], [], []>} : vector<16x32xbf16>, vector<32x32xbf16>, vector<16x32xf32> -> vector<16x32xf32>
    %173 = vector.broadcast %15 : vector<1x32xf32> to vector<16x32xf32>
    %174 = arith.addf %172, %173 : vector<16x32xf32>
    %175 = arith.addf %174, %72 : vector<16x32xf32>
    %cst_46 = arith.constant dense<0.000000e+00> : vector<16xf32>
    %176 = vector.multi_reduction <add>, %175, %cst_46 [1] : vector<16x32xf32> to vector<16xf32>
    %177 = vector.shape_cast %176 : vector<16xf32> to vector<16x1xf32>
    %cst_47 = arith.constant 3.200000e+01 : f32
    %178 = vector.broadcast %cst_47 : f32 to vector<16x1xf32>
    %179 = arith.divf %177, %178 : vector<16x1xf32>
    %180 = vector.broadcast %179 : vector<16x1xf32> to vector<16x32xf32>
    %181 = arith.subf %175, %180 : vector<16x32xf32>
    %182 = arith.mulf %181, %181 : vector<16x32xf32>
    %cst_48 = arith.constant dense<0.000000e+00> : vector<16xf32>
    %183 = vector.multi_reduction <add>, %182, %cst_48 [1] : vector<16x32xf32> to vector<16xf32>
    %184 = vector.shape_cast %183 : vector<16xf32> to vector<16x1xf32>
    %cst_49 = arith.constant 3.200000e+01 : f32
    %185 = vector.broadcast %cst_49 : f32 to vector<16x1xf32>
    %186 = arith.divf %184, %185 : vector<16x1xf32>
    %cst_50 = arith.constant 9.99999974E-6 : f32
    %187 = vector.broadcast %cst_50 : f32 to vector<16x1xf32>
    %188 = arith.addf %186, %187 : vector<16x1xf32>
    %189 = math.rsqrt %188 : vector<16x1xf32>
    %190 = vector.broadcast %189 : vector<16x1xf32> to vector<16x32xf32>
    %191 = arith.mulf %181, %190 : vector<16x32xf32>
    %192 = vector.broadcast %16 : vector<1x32xf32> to vector<16x32xf32>
    %193 = arith.mulf %191, %192 : vector<16x32xf32>
    %194 = vector.broadcast %17 : vector<1x32xf32> to vector<16x32xf32>
    %195 = arith.addf %193, %194 : vector<16x32xf32>
    %196 = arith.truncf %195 : vector<16x32xf32> to vector<16x32xbf16>
    %c0_51 = arith.constant 0 : index
    %c0_52 = arith.constant 0 : index
    %c0_53 = arith.constant 0 : index
    %197 = vector.load %arg11[%c0_51, %c0_52, %c0_53] : memref<1x32x96xbf16, #tpu.memory_space<vmem>>, vector<1x32x96xbf16>
    %198 = vector.shape_cast %197 : vector<1x32x96xbf16> to vector<32x96xbf16>
    %cst_54 = arith.constant dense<0.000000e+00> : vector<16x96xf32>
    %199 = tpu.matmul %196, %198, %cst_54 {dimension_numbers = #tpu.dot_dimension_numbers<[1], [0], [0], [1], [0, 0, 1, 1], [], []>} : vector<16x32xbf16>, vector<32x96xbf16>, vector<16x96xf32> -> vector<16x96xf32>
    %200 = vector.extract_strided_slice %199 {offsets = [0, 0], sizes = [16, 32], strides = [1, 1]} : vector<16x96xf32> to vector<16x32xf32>
    %201 = vector.broadcast %18 : vector<1x32xf32> to vector<16x32xf32>
    %202 = arith.addf %200, %201 : vector<16x32xf32>
    %203 = vector.shape_cast %202 : vector<16x32xf32> to vector<2x8x32xf32>
    %204 = vector.extract_strided_slice %199 {offsets = [0, 32], sizes = [16, 32], strides = [1, 1]} : vector<16x96xf32> to vector<16x32xf32>
    %205 = vector.broadcast %19 : vector<1x32xf32> to vector<16x32xf32>
    %206 = arith.addf %204, %205 : vector<16x32xf32>
    %207 = vector.shape_cast %206 : vector<16x32xf32> to vector<2x8x32xf32>
    %208 = vector.extract_strided_slice %199 {offsets = [0, 64], sizes = [16, 32], strides = [1, 1]} : vector<16x96xf32> to vector<16x32xf32>
    %209 = vector.broadcast %20 : vector<1x32xf32> to vector<16x32xf32>
    %210 = arith.addf %208, %209 : vector<16x32xf32>
    %211 = vector.shape_cast %210 : vector<16x32xf32> to vector<2x8x32xf32>
    %c0_55 = arith.constant 0 : index
    %c0_56 = arith.constant 0 : index
    %c0_57 = arith.constant 0 : index
    %212 = vector.load %arg3[%c0_55, %c0_56, %c0_57] : memref<2x1x8xf32, #tpu.memory_space<vmem>>, vector<2x1x8xf32>
    %213 = vector.extract_strided_slice %203 {offsets = [0, 0, 0], sizes = [2, 8, 8], strides = [1, 1, 1]} : vector<2x8x32xf32> to vector<2x8x8xf32>
    %214 = arith.truncf %213 : vector<2x8x8xf32> to vector<2x8x8xbf16>
    %215 = vector.extract_strided_slice %207 {offsets = [0, 0, 0], sizes = [2, 8, 8], strides = [1, 1, 1]} : vector<2x8x32xf32> to vector<2x8x8xf32>
    %216 = arith.truncf %215 : vector<2x8x8xf32> to vector<2x8x8xbf16>
    %217 = vector.extract_strided_slice %211 {offsets = [0, 0, 0], sizes = [2, 8, 8], strides = [1, 1, 1]} : vector<2x8x32xf32> to vector<2x8x8xf32>
    %218 = arith.truncf %217 : vector<2x8x8xf32> to vector<2x8x8xbf16>
    "tpu.trace_start"() <{level = 10 : i32, message = "bqd,bkd->bqk"}> : () -> ()
    %cst_58 = arith.constant dense<0.000000e+00> : vector<2x8x8xf32>
    %219 = tpu.matmul %214, %216, %cst_58 {dimension_numbers = #tpu.dot_dimension_numbers<[2], [2], [1], [1], [0, 0, 0, 1, 1, 1], [0], [0]>} : vector<2x8x8xbf16>, vector<2x8x8xbf16>, vector<2x8x8xf32> -> vector<2x8x8xf32>
    "tpu.trace_stop"() : () -> ()
    %220 = vector.broadcast %212 : vector<2x1x8xf32> to vector<2x8x8xf32>
    %221 = arith.addf %219, %220 : vector<2x8x8xf32>
    %cst_59 = arith.constant dense<0xFF800000> : vector<2x8xf32>
    %222 = vector.multi_reduction <maximumf>, %221, %cst_59 [2] : vector<2x8x8xf32> to vector<2x8xf32>
    %223 = vector.shape_cast %222 : vector<2x8xf32> to vector<2x8x1xf32>
    %224 = vector.broadcast %223 : vector<2x8x1xf32> to vector<2x8x8xf32>
    %225 = arith.subf %221, %224 : vector<2x8x8xf32>
    %226 = math.exp %225 : vector<2x8x8xf32>
    %cst_60 = arith.constant dense<0.000000e+00> : vector<2x8xf32>
    %227 = vector.multi_reduction <add>, %226, %cst_60 [2] : vector<2x8x8xf32> to vector<2x8xf32>
    %228 = vector.shape_cast %227 : vector<2x8xf32> to vector<2x8x1xf32>
    %229 = tpu.reciprocal %228 {approx = true} : vector<2x8x1xf32> -> vector<2x8x1xf32>
    %230 = vector.broadcast %229 : vector<2x8x1xf32> to vector<2x8x8xf32>
    %231 = arith.mulf %226, %230 : vector<2x8x8xf32>
    %232 = arith.truncf %231 : vector<2x8x8xf32> to vector<2x8x8xbf16>
    "tpu.trace_start"() <{level = 10 : i32, message = "bqk,bkd->bqd"}> : () -> ()
    %cst_61 = arith.constant dense<0.000000e+00> : vector<2x8x8xf32>
    %233 = tpu.matmul %232, %218, %cst_61 {dimension_numbers = #tpu.dot_dimension_numbers<[2], [1], [1], [2], [0, 0, 0, 1, 1, 2], [0], [0]>} : vector<2x8x8xbf16>, vector<2x8x8xbf16>, vector<2x8x8xf32> -> vector<2x8x8xf32>
    "tpu.trace_stop"() : () -> ()
    %234 = vector.extract_strided_slice %203 {offsets = [0, 0, 8], sizes = [2, 8, 8], strides = [1, 1, 1]} : vector<2x8x32xf32> to vector<2x8x8xf32>
    %235 = arith.truncf %234 : vector<2x8x8xf32> to vector<2x8x8xbf16>
    %236 = vector.extract_strided_slice %207 {offsets = [0, 0, 8], sizes = [2, 8, 8], strides = [1, 1, 1]} : vector<2x8x32xf32> to vector<2x8x8xf32>
    %237 = arith.truncf %236 : vector<2x8x8xf32> to vector<2x8x8xbf16>
    %238 = vector.extract_strided_slice %211 {offsets = [0, 0, 8], sizes = [2, 8, 8], strides = [1, 1, 1]} : vector<2x8x32xf32> to vector<2x8x8xf32>
    %239 = arith.truncf %238 : vector<2x8x8xf32> to vector<2x8x8xbf16>
    "tpu.trace_start"() <{level = 10 : i32, message = "bqd,bkd->bqk"}> : () -> ()
    %cst_62 = arith.constant dense<0.000000e+00> : vector<2x8x8xf32>
    %240 = tpu.matmul %235, %237, %cst_62 {dimension_numbers = #tpu.dot_dimension_numbers<[2], [2], [1], [1], [0, 0, 0, 1, 1, 1], [0], [0]>} : vector<2x8x8xbf16>, vector<2x8x8xbf16>, vector<2x8x8xf32> -> vector<2x8x8xf32>
    "tpu.trace_stop"() : () -> ()
    %241 = vector.broadcast %212 : vector<2x1x8xf32> to vector<2x8x8xf32>
    %242 = arith.addf %240, %241 : vector<2x8x8xf32>
    %cst_63 = arith.constant dense<0xFF800000> : vector<2x8xf32>
    %243 = vector.multi_reduction <maximumf>, %242, %cst_63 [2] : vector<2x8x8xf32> to vector<2x8xf32>
    %244 = vector.shape_cast %243 : vector<2x8xf32> to vector<2x8x1xf32>
    %245 = vector.broadcast %244 : vector<2x8x1xf32> to vector<2x8x8xf32>
    %246 = arith.subf %242, %245 : vector<2x8x8xf32>
    %247 = math.exp %246 : vector<2x8x8xf32>
    %cst_64 = arith.constant dense<0.000000e+00> : vector<2x8xf32>
    %248 = vector.multi_reduction <add>, %247, %cst_64 [2] : vector<2x8x8xf32> to vector<2x8xf32>
    %249 = vector.shape_cast %248 : vector<2x8xf32> to vector<2x8x1xf32>
    %250 = tpu.reciprocal %249 {approx = true} : vector<2x8x1xf32> -> vector<2x8x1xf32>
    %251 = vector.broadcast %250 : vector<2x8x1xf32> to vector<2x8x8xf32>
    %252 = arith.mulf %247, %251 : vector<2x8x8xf32>
    %253 = arith.truncf %252 : vector<2x8x8xf32> to vector<2x8x8xbf16>
    "tpu.trace_start"() <{level = 10 : i32, message = "bqk,bkd->bqd"}> : () -> ()
    %cst_65 = arith.constant dense<0.000000e+00> : vector<2x8x8xf32>
    %254 = tpu.matmul %253, %239, %cst_65 {dimension_numbers = #tpu.dot_dimension_numbers<[2], [1], [1], [2], [0, 0, 0, 1, 1, 2], [0], [0]>} : vector<2x8x8xbf16>, vector<2x8x8xbf16>, vector<2x8x8xf32> -> vector<2x8x8xf32>
    "tpu.trace_stop"() : () -> ()
    %255 = vector.extract_strided_slice %203 {offsets = [0, 0, 16], sizes = [2, 8, 8], strides = [1, 1, 1]} : vector<2x8x32xf32> to vector<2x8x8xf32>
    %256 = arith.truncf %255 : vector<2x8x8xf32> to vector<2x8x8xbf16>
    %257 = vector.extract_strided_slice %207 {offsets = [0, 0, 16], sizes = [2, 8, 8], strides = [1, 1, 1]} : vector<2x8x32xf32> to vector<2x8x8xf32>
    %258 = arith.truncf %257 : vector<2x8x8xf32> to vector<2x8x8xbf16>
    %259 = vector.extract_strided_slice %211 {offsets = [0, 0, 16], sizes = [2, 8, 8], strides = [1, 1, 1]} : vector<2x8x32xf32> to vector<2x8x8xf32>
    %260 = arith.truncf %259 : vector<2x8x8xf32> to vector<2x8x8xbf16>
    "tpu.trace_start"() <{level = 10 : i32, message = "bqd,bkd->bqk"}> : () -> ()
    %cst_66 = arith.constant dense<0.000000e+00> : vector<2x8x8xf32>
    %261 = tpu.matmul %256, %258, %cst_66 {dimension_numbers = #tpu.dot_dimension_numbers<[2], [2], [1], [1], [0, 0, 0, 1, 1, 1], [0], [0]>} : vector<2x8x8xbf16>, vector<2x8x8xbf16>, vector<2x8x8xf32> -> vector<2x8x8xf32>
    "tpu.trace_stop"() : () -> ()
    %262 = vector.broadcast %212 : vector<2x1x8xf32> to vector<2x8x8xf32>
    %263 = arith.addf %261, %262 : vector<2x8x8xf32>
    %cst_67 = arith.constant dense<0xFF800000> : vector<2x8xf32>
    %264 = vector.multi_reduction <maximumf>, %263, %cst_67 [2] : vector<2x8x8xf32> to vector<2x8xf32>
    %265 = vector.shape_cast %264 : vector<2x8xf32> to vector<2x8x1xf32>
    %266 = vector.broadcast %265 : vector<2x8x1xf32> to vector<2x8x8xf32>
    %267 = arith.subf %263, %266 : vector<2x8x8xf32>
    %268 = math.exp %267 : vector<2x8x8xf32>
    %cst_68 = arith.constant dense<0.000000e+00> : vector<2x8xf32>
    %269 = vector.multi_reduction <add>, %268, %cst_68 [2] : vector<2x8x8xf32> to vector<2x8xf32>
    %270 = vector.shape_cast %269 : vector<2x8xf32> to vector<2x8x1xf32>
    %271 = tpu.reciprocal %270 {approx = true} : vector<2x8x1xf32> -> vector<2x8x1xf32>
    %272 = vector.broadcast %271 : vector<2x8x1xf32> to vector<2x8x8xf32>
    %273 = arith.mulf %268, %272 : vector<2x8x8xf32>
    %274 = arith.truncf %273 : vector<2x8x8xf32> to vector<2x8x8xbf16>
    "tpu.trace_start"() <{level = 10 : i32, message = "bqk,bkd->bqd"}> : () -> ()
    %cst_69 = arith.constant dense<0.000000e+00> : vector<2x8x8xf32>
    %275 = tpu.matmul %274, %260, %cst_69 {dimension_numbers = #tpu.dot_dimension_numbers<[2], [1], [1], [2], [0, 0, 0, 1, 1, 2], [0], [0]>} : vector<2x8x8xbf16>, vector<2x8x8xbf16>, vector<2x8x8xf32> -> vector<2x8x8xf32>
    "tpu.trace_stop"() : () -> ()
    %276 = vector.extract_strided_slice %203 {offsets = [0, 0, 24], sizes = [2, 8, 8], strides = [1, 1, 1]} : vector<2x8x32xf32> to vector<2x8x8xf32>
    %277 = arith.truncf %276 : vector<2x8x8xf32> to vector<2x8x8xbf16>
    %278 = vector.extract_strided_slice %207 {offsets = [0, 0, 24], sizes = [2, 8, 8], strides = [1, 1, 1]} : vector<2x8x32xf32> to vector<2x8x8xf32>
    %279 = arith.truncf %278 : vector<2x8x8xf32> to vector<2x8x8xbf16>
    %280 = vector.extract_strided_slice %211 {offsets = [0, 0, 24], sizes = [2, 8, 8], strides = [1, 1, 1]} : vector<2x8x32xf32> to vector<2x8x8xf32>
    %281 = arith.truncf %280 : vector<2x8x8xf32> to vector<2x8x8xbf16>
    "tpu.trace_start"() <{level = 10 : i32, message = "bqd,bkd->bqk"}> : () -> ()
    %cst_70 = arith.constant dense<0.000000e+00> : vector<2x8x8xf32>
    %282 = tpu.matmul %277, %279, %cst_70 {dimension_numbers = #tpu.dot_dimension_numbers<[2], [2], [1], [1], [0, 0, 0, 1, 1, 1], [0], [0]>} : vector<2x8x8xbf16>, vector<2x8x8xbf16>, vector<2x8x8xf32> -> vector<2x8x8xf32>
    "tpu.trace_stop"() : () -> ()
    %283 = vector.broadcast %212 : vector<2x1x8xf32> to vector<2x8x8xf32>
    %284 = arith.addf %282, %283 : vector<2x8x8xf32>
    %cst_71 = arith.constant dense<0xFF800000> : vector<2x8xf32>
    %285 = vector.multi_reduction <maximumf>, %284, %cst_71 [2] : vector<2x8x8xf32> to vector<2x8xf32>
    %286 = vector.shape_cast %285 : vector<2x8xf32> to vector<2x8x1xf32>
    %287 = vector.broadcast %286 : vector<2x8x1xf32> to vector<2x8x8xf32>
    %288 = arith.subf %284, %287 : vector<2x8x8xf32>
    %289 = math.exp %288 : vector<2x8x8xf32>
    %cst_72 = arith.constant dense<0.000000e+00> : vector<2x8xf32>
    %290 = vector.multi_reduction <add>, %289, %cst_72 [2] : vector<2x8x8xf32> to vector<2x8xf32>
    %291 = vector.shape_cast %290 : vector<2x8xf32> to vector<2x8x1xf32>
    %292 = tpu.reciprocal %291 {approx = true} : vector<2x8x1xf32> -> vector<2x8x1xf32>
    %293 = vector.broadcast %292 : vector<2x8x1xf32> to vector<2x8x8xf32>
    %294 = arith.mulf %289, %293 : vector<2x8x8xf32>
    %295 = arith.truncf %294 : vector<2x8x8xf32> to vector<2x8x8xbf16>
    "tpu.trace_start"() <{level = 10 : i32, message = "bqk,bkd->bqd"}> : () -> ()
    %cst_73 = arith.constant dense<0.000000e+00> : vector<2x8x8xf32>
    %296 = tpu.matmul %295, %281, %cst_73 {dimension_numbers = #tpu.dot_dimension_numbers<[2], [1], [1], [2], [0, 0, 0, 1, 1, 2], [0], [0]>} : vector<2x8x8xbf16>, vector<2x8x8xbf16>, vector<2x8x8xf32> -> vector<2x8x8xf32>
    "tpu.trace_stop"() : () -> ()
    %297 = tpu.concatenate %233, %254, %275, %296 in 2 : vector<2x8x8xf32>, vector<2x8x8xf32>, vector<2x8x8xf32>, vector<2x8x8xf32> -> vector<2x8x32xf32>
    %298 = vector.shape_cast %297 : vector<2x8x32xf32> to vector<16x32xf32>
    %299 = arith.truncf %298 : vector<16x32xf32> to vector<16x32xbf16>
    %c0_74 = arith.constant 0 : index
    %c0_75 = arith.constant 0 : index
    %c0_76 = arith.constant 0 : index
    %300 = vector.load %arg12[%c0_74, %c0_75, %c0_76] : memref<1x32x32xbf16, #tpu.memory_space<vmem>>, vector<1x32x32xbf16>
    %301 = vector.shape_cast %300 : vector<1x32x32xbf16> to vector<32x32xbf16>
    %cst_77 = arith.constant dense<0.000000e+00> : vector<16x32xf32>
    %302 = tpu.matmul %299, %301, %cst_77 {dimension_numbers = #tpu.dot_dimension_numbers<[1], [0], [0], [1], [0, 0, 1, 1], [], []>} : vector<16x32xbf16>, vector<32x32xbf16>, vector<16x32xf32> -> vector<16x32xf32>
    %303 = vector.broadcast %21 : vector<1x32xf32> to vector<16x32xf32>
    %304 = arith.addf %302, %303 : vector<16x32xf32>
    %305 = arith.addf %304, %175 : vector<16x32xf32>
    %cst_78 = arith.constant dense<0.000000e+00> : vector<16xf32>
    %306 = vector.multi_reduction <add>, %305, %cst_78 [1] : vector<16x32xf32> to vector<16xf32>
    %307 = vector.shape_cast %306 : vector<16xf32> to vector<16x1xf32>
    %cst_79 = arith.constant 3.200000e+01 : f32
    %308 = vector.broadcast %cst_79 : f32 to vector<16x1xf32>
    %309 = arith.divf %307, %308 : vector<16x1xf32>
    %310 = vector.broadcast %309 : vector<16x1xf32> to vector<16x32xf32>
    %311 = arith.subf %305, %310 : vector<16x32xf32>
    %312 = arith.mulf %311, %311 : vector<16x32xf32>
    %cst_80 = arith.constant dense<0.000000e+00> : vector<16xf32>
    %313 = vector.multi_reduction <add>, %312, %cst_80 [1] : vector<16x32xf32> to vector<16xf32>
    %314 = vector.shape_cast %313 : vector<16xf32> to vector<16x1xf32>
    %cst_81 = arith.constant 3.200000e+01 : f32
    %315 = vector.broadcast %cst_81 : f32 to vector<16x1xf32>
    %316 = arith.divf %314, %315 : vector<16x1xf32>
    %cst_82 = arith.constant 9.99999974E-6 : f32
    %317 = vector.broadcast %cst_82 : f32 to vector<16x1xf32>
    %318 = arith.addf %316, %317 : vector<16x1xf32>
    %319 = math.rsqrt %318 : vector<16x1xf32>
    %320 = vector.broadcast %319 : vector<16x1xf32> to vector<16x32xf32>
    %321 = arith.mulf %311, %320 : vector<16x32xf32>
    %322 = vector.broadcast %22 : vector<1x32xf32> to vector<16x32xf32>
    %323 = arith.mulf %321, %322 : vector<16x32xf32>
    %324 = vector.broadcast %23 : vector<1x32xf32> to vector<16x32xf32>
    %325 = arith.addf %323, %324 : vector<16x32xf32>
    %326 = arith.truncf %325 : vector<16x32xf32> to vector<16x32xbf16>
    %c0_83 = arith.constant 0 : index
    %c0_84 = arith.constant 0 : index
    %c0_85 = arith.constant 0 : index
    %327 = vector.load %arg13[%c0_83, %c0_84, %c0_85] : memref<1x32x64xbf16, #tpu.memory_space<vmem>>, vector<1x32x64xbf16>
    %328 = vector.shape_cast %327 : vector<1x32x64xbf16> to vector<32x64xbf16>
    %cst_86 = arith.constant dense<0.000000e+00> : vector<16x64xf32>
    %329 = tpu.matmul %326, %328, %cst_86 {dimension_numbers = #tpu.dot_dimension_numbers<[1], [0], [0], [1], [0, 0, 1, 1], [], []>} : vector<16x32xbf16>, vector<32x64xbf16>, vector<16x64xf32> -> vector<16x64xf32>
    %330 = vector.broadcast %30 : vector<1x64xf32> to vector<16x64xf32>
    %331 = arith.addf %329, %330 : vector<16x64xf32>
    %cst_87 = arith.constant 0.000000e+00 : f32
    %332 = vector.broadcast %cst_87 : f32 to vector<16x64xf32>
    %333 = arith.subf %332, %331 : vector<16x64xf32>
    %334 = math.exp %333 : vector<16x64xf32>
    %cst_88 = arith.constant 1.000000e+00 : f32
    %335 = vector.broadcast %cst_88 : f32 to vector<16x64xf32>
    %336 = arith.addf %335, %334 : vector<16x64xf32>
    %337 = tpu.reciprocal %336 {approx = true} : vector<16x64xf32> -> vector<16x64xf32>
    %338 = arith.mulf %331, %337 : vector<16x64xf32>
    %339 = arith.truncf %338 : vector<16x64xf32> to vector<16x64xbf16>
    %c0_89 = arith.constant 0 : index
    %c0_90 = arith.constant 0 : index
    %c0_91 = arith.constant 0 : index
    %340 = vector.load %arg14[%c0_89, %c0_90, %c0_91] : memref<1x64x32xbf16, #tpu.memory_space<vmem>>, vector<1x64x32xbf16>
    %341 = vector.shape_cast %340 : vector<1x64x32xbf16> to vector<64x32xbf16>
    %cst_92 = arith.constant dense<0.000000e+00> : vector<16x32xf32>
    %342 = tpu.matmul %339, %341, %cst_92 {dimension_numbers = #tpu.dot_dimension_numbers<[1], [0], [0], [1], [0, 0, 1, 1], [], []>} : vector<16x64xbf16>, vector<64x32xbf16>, vector<16x32xf32> -> vector<16x32xf32>
    %343 = vector.broadcast %24 : vector<1x32xf32> to vector<16x32xf32>
    %344 = arith.addf %342, %343 : vector<16x32xf32>
    %cst_93 = arith.constant 5.000000e-01 : f32
    %345 = vector.broadcast %cst_93 : f32 to vector<16x32xf32>
    %346 = arith.mulf %345, %344 : vector<16x32xf32>
    %347 = arith.addf %346, %305 : vector<16x32xf32>
    %cst_94 = arith.constant dense<0.000000e+00> : vector<16xf32>
    %348 = vector.multi_reduction <add>, %347, %cst_94 [1] : vector<16x32xf32> to vector<16xf32>
    %349 = vector.shape_cast %348 : vector<16xf32> to vector<16x1xf32>
    %cst_95 = arith.constant 3.200000e+01 : f32
    %350 = vector.broadcast %cst_95 : f32 to vector<16x1xf32>
    %351 = arith.divf %349, %350 : vector<16x1xf32>
    %352 = vector.broadcast %351 : vector<16x1xf32> to vector<16x32xf32>
    %353 = arith.subf %347, %352 : vector<16x32xf32>
    %354 = arith.mulf %353, %353 : vector<16x32xf32>
    %cst_96 = arith.constant dense<0.000000e+00> : vector<16xf32>
    %355 = vector.multi_reduction <add>, %354, %cst_96 [1] : vector<16x32xf32> to vector<16xf32>
    %356 = vector.shape_cast %355 : vector<16xf32> to vector<16x1xf32>
    %cst_97 = arith.constant 3.200000e+01 : f32
    %357 = vector.broadcast %cst_97 : f32 to vector<16x1xf32>
    %358 = arith.divf %356, %357 : vector<16x1xf32>
    %cst_98 = arith.constant 9.99999974E-6 : f32
    %359 = vector.broadcast %cst_98 : f32 to vector<16x1xf32>
    %360 = arith.addf %358, %359 : vector<16x1xf32>
    %361 = math.rsqrt %360 : vector<16x1xf32>
    %362 = vector.broadcast %361 : vector<16x1xf32> to vector<16x32xf32>
    %363 = arith.mulf %353, %362 : vector<16x32xf32>
    %364 = vector.broadcast %25 : vector<1x32xf32> to vector<16x32xf32>
    %365 = arith.mulf %363, %364 : vector<16x32xf32>
    %366 = vector.broadcast %26 : vector<1x32xf32> to vector<16x32xf32>
    %367 = arith.addf %365, %366 : vector<16x32xf32>
    %368 = vector.shape_cast %367 : vector<16x32xf32> to vector<2x8x32xf32>
    %c0_99 = arith.constant 0 : index
    %c0_100 = arith.constant 0 : index
    %c0_101 = arith.constant 0 : index
    %369 = vector.load %arg15[%c0_99, %c0_100, %c0_101] : memref<2x8x32xf32, #tpu.memory_space<vmem>>, vector<2x8x32xf32>
    tpu.vector_store %arg15[%c0_99, %c0_100, %c0_101], %368 {strides = array<i32>} : memref<2x8x32xf32, #tpu.memory_space<vmem>>, vector<2x8x32xf32>,
    return
  }
  func.func @transform_0(%arg0: i32, %arg1: i32) -> (i32, i32, i32) {
    %c0_i32 = arith.constant 0 : i32
    %c0_i32_0 = arith.constant 0 : i32
    %c0_i32_1 = arith.constant 0 : i32
    return %arg0, %c0_i32, %c0_i32_0 : i32, i32, i32
  }
  func.func @transform_1(%arg0: i32, %arg1: i32) -> (i32, i32, i32) {
    %c0_i32 = arith.constant 0 : i32
    %c0_i32_0 = arith.constant 0 : i32
    %c0_i32_1 = arith.constant 0 : i32
    return %arg0, %c0_i32, %c0_i32_0 : i32, i32, i32
  }
  func.func @transform_2(%arg0: i32, %arg1: i32) -> (i32, i32, i32) {
    %c0_i32 = arith.constant 0 : i32
    %c0_i32_0 = arith.constant 0 : i32
    %c0_i32_1 = arith.constant 0 : i32
    return %arg1, %c0_i32, %c0_i32_0 : i32, i32, i32
  }
  func.func @transform_3(%arg0: i32, %arg1: i32) -> (i32, i32, i32) {
    %c0_i32 = arith.constant 0 : i32
    %c0_i32_0 = arith.constant 0 : i32
    %c0_i32_1 = arith.constant 0 : i32
    return %arg1, %c0_i32, %c0_i32_0 : i32, i32, i32
  }
  func.func @transform_4(%arg0: i32, %arg1: i32) -> (i32, i32, i32) {
    %c0_i32 = arith.constant 0 : i32
    %c0_i32_0 = arith.constant 0 : i32
    %c0_i32_1 = arith.constant 0 : i32
    return %arg1, %c0_i32, %c0_i32_0 : i32, i32, i32
  }
  func.func @transform_5(%arg0: i32, %arg1: i32) -> (i32, i32, i32) {
    %c0_i32 = arith.constant 0 : i32
    %c0_i32_0 = arith.constant 0 : i32
    %c0_i32_1 = arith.constant 0 : i32
    return %arg1, %c0_i32, %c0_i32_0 : i32, i32, i32
  }
  func.func @transform_6(%arg0: i32, %arg1: i32) -> (i32, i32, i32) {
    %c0_i32 = arith.constant 0 : i32
    %c0_i32_0 = arith.constant 0 : i32
    %c0_i32_1 = arith.constant 0 : i32
    return %arg1, %c0_i32, %c0_i32_0 : i32, i32, i32
  }
  func.func @transform_7(%arg0: i32, %arg1: i32) -> (i32, i32, i32) {
    %c0_i32 = arith.constant 0 : i32
    %c0_i32_0 = arith.constant 0 : i32
    %c0_i32_1 = arith.constant 0 : i32
    return %arg1, %c0_i32, %c0_i32_0 : i32, i32, i32
  }
  func.func @transform_8(%arg0: i32, %arg1: i32) -> (i32, i32, i32) {
    %c0_i32 = arith.constant 0 : i32
    %c0_i32_0 = arith.constant 0 : i32
    %c0_i32_1 = arith.constant 0 : i32
    return %arg1, %c0_i32, %c0_i32_0 : i32, i32, i32
  }
  func.func @transform_9(%arg0: i32, %arg1: i32) -> (i32, i32, i32) {
    %c0_i32 = arith.constant 0 : i32
    %c0_i32_0 = arith.constant 0 : i32
    %c0_i32_1 = arith.constant 0 : i32
    return %arg1, %c0_i32, %c0_i32_0 : i32, i32, i32
  }
  func.func @transform_10(%arg0: i32, %arg1: i32) -> (i32, i32, i32) {
    %c0_i32 = arith.constant 0 : i32
    %c0_i32_0 = arith.constant 0 : i32
    %c0_i32_1 = arith.constant 0 : i32
    return %arg1, %c0_i32, %c0_i32_0 : i32, i32, i32
  }
  func.func @transform_11(%arg0: i32, %arg1: i32) -> (i32, i32, i32) {
    %c0_i32 = arith.constant 0 : i32
    %c0_i32_0 = arith.constant 0 : i32
    %c0_i32_1 = arith.constant 0 : i32
    return %arg1, %c0_i32, %c0_i32_0 : i32, i32, i32
  }
  func.func @transform_12(%arg0: i32, %arg1: i32) -> (i32, i32, i32) {
    %c0_i32 = arith.constant 0 : i32
    %c0_i32_0 = arith.constant 0 : i32
    %c0_i32_1 = arith.constant 0 : i32
    return %arg1, %c0_i32, %c0_i32_0 : i32, i32, i32
  }
  func.func @transform_13(%arg0: i32, %arg1: i32) -> (i32, i32, i32) {
    %c0_i32 = arith.constant 0 : i32
    %c0_i32_0 = arith.constant 0 : i32
    %c0_i32_1 = arith.constant 0 : i32
    return %arg0, %c0_i32, %c0_i32_0 : i32, i32, i32
  }
}

</mosaic_0001>

<llo_original>
// kernel: conformer_forward.3
$region0: #{conformer_forward.3}
  #allocation0 [shape = 'u32[]', space=smem, size = 0x4, offset = 0x4, fixed_abs, tag = 'smem constant byte address 0x4 - core index']
  #allocation1 [shape = 'u32[144,128]{1,0:T(1,128)}', space=vmem, size = 0x12000, scoped, tag = 'internal scratch']
  %s0 = inlined_call_operand.vmem [shape: f32[4,10,32], index: 0, kind: input, shape index: {}]
  %s1 = inlined_call_operand.vmem [shape: f32[4,9,32], index: 1, kind: input, shape index: {}]
  %s2 = inlined_call_operand.vmem [shape: bf16[160,32], index: 2, kind: input, shape index: {}]
  %s3 = inlined_call_operand.vmem [shape: f32[1,32], index: 3, kind: input, shape index: {}]
  %s4 = inlined_call_operand.vmem [shape: f32[4,8,32], index: 4, kind: output, shape index: {}]
  %s5 = sld [smem:[#allocation0]]
  $region49: #{conformer_forward.3} parent=0
    _
  %s7 = ssub.s32 1, %s5
  %s8 = scalar_select 0, %s7, %s5
  loop: start=0, step=1, limit=4
  $region2: #{conformer_forward.3} parent=0 // loop_pre_header
    _
  $region3: #{conformer_forward.3} parent=0 // loop_header
    %s10 = sphi 0, %s14
    %p11 = scmp.ge.s32.totalorder %s10, 4
    %s20 = sphi 0, %s22
    %s23 = sphi 0, %s20
    %s24 = sphi 0, %s23
    %s40 = sphi 0, %s24
    %s46 = sphi 0, %s48
    %s49 = sphi 0, %s46
    %s50 = sphi 0, %s49
    %s66 = sphi 0, %s50
    %s70 = sphi 0, %s70
    %s72 = sphi 0, %s70
    %s73 = sphi 0, %s72
    %s87 = sphi 0, %s73
    %s91 = sphi 0, %s91
    %s93 = sphi 0, %s91
    %s94 = sphi 0, %s93
    %s108 = sphi 0, %s94
    %s114 = sphi 0, %s116
    %s117 = sphi 0, %s114
    %s118 = sphi 0, %s117
    %s134 = sphi 0, %s118
  $region4: #{conformer_forward.3} parent=0 // loop_header_branch
    %13 = sbr.rel (%p11) target = $region8
  $region5: #{conformer_forward.3} parent=0 // loop_body
    %s15 = ssub.s32 %s10, 1
    %s16 = ssub.s32 %s10, 2
    %s17 = sadd.s32 %s10, 1
    %s18 = ssub.s32 %s10, %s17
    %p19 = scmp.eq.s32.totalorder %s18, 0
    %s21 = sadd.s32 %s20, 1
    %s22 = scalar_select %p19, %s20, %s21
    %p25 = pneg %p19
    %p26 = scmp.eq.s32.totalorder %s10, 1
    %p27 = por %p25, %p26
    %p28 = scmp.ne.s32.totalorder %s20, %s23
    %p29 = scmp.eq.s32.totalorder %s10, 0
    %p30 = por %p28, %p29
    %p31 = scmp.ne.s32.totalorder %s20, %s23
    %p32 = scmp.eq.s32.totalorder %s15, 1
    %p33 = por %p31, %p32
    %p34 = scmp.ne.s32.totalorder %s23, %s24
    %p35 = scmp.eq.s32.totalorder %s15, 0
    %p36 = por %p34, %p35
    %p37 = scmp.ne.s32.totalorder %s23, %s24
    %p38 = scmp.eq.s32.totalorder %s16, 1
    %p39 = por %p37, %p38
    %p41 = scmp.ne.s32.totalorder %s24, %s40
    %p42 = scmp.eq.s32.totalorder %s16, 0
    %p43 = por %p41, %p42
    %s44 = ssub.s32 %s10, %s17
    %p45 = scmp.eq.s32.totalorder %s44, 0
    %s47 = sadd.s32 %s46, 1
    %s48 = scalar_select %p45, %s46, %s47
    %p51 = pneg %p45
    %p52 = scmp.eq.s32.totalorder %s10, 1
    %p53 = por %p51, %p52
    %p54 = scmp.ne.s32.totalorder %s46, %s49
    %p55 = scmp.eq.s32.totalorder %s10, 0
    %p56 = por %p54, %p55
    %p57 = scmp.ne.s32.totalorder %s46, %s49
    %p58 = scmp.eq.s32.totalorder %s15, 1
    %p59 = por %p57, %p58
    %p60 = scmp.ne.s32.totalorder %s49, %s50
    %p61 = scmp.eq.s32.totalorder %s15, 0
    %p62 = por %p60, %p61
    %p63 = scmp.ne.s32.totalorder %s49, %s50
    %p64 = scmp.eq.s32.totalorder %s16, 1
    %p65 = por %p63, %p64
    %p67 = scmp.ne.s32.totalorder %s50, %s66
    %p68 = scmp.eq.s32.totalorder %s16, 0
    %p69 = por %p67, %p68
    %s71 = sadd.s32 %s70, 1
    %p74 = scmp.eq.s32.totalorder %s10, 1
    %p75 = scmp.ne.s32.totalorder %s70, %s72
    %p76 = scmp.eq.s32.totalorder %s10, 0
    %p77 = por %p75, %p76
    %p78 = scmp.ne.s32.totalorder %s70, %s72
    %p79 = scmp.eq.s32.totalorder %s15, 1
    %p80 = por %p78, %p79
    %p81 = scmp.ne.s32.totalorder %s72, %s73
    %p82 = scmp.eq.s32.totalorder %s15, 0
    %p83 = por %p81, %p82
    %p84 = scmp.ne.s32.totalorder %s72, %s73
    %p85 = scmp.eq.s32.totalorder %s16, 1
    %p86 = por %p84, %p85
    %p88 = scmp.ne.s32.totalorder %s73, %s87
    %p89 = scmp.eq.s32.totalorder %s16, 0
    %p90 = por %p88, %p89
    %s92 = sadd.s32 %s91, 1
    %p95 = scmp.eq.s32.totalorder %s10, 1
    %p96 = scmp.ne.s32.totalorder %s91, %s93
    %p97 = scmp.eq.s32.totalorder %s10, 0
    %p98 = por %p96, %p97
    %p99 = scmp.ne.s32.totalorder %s91, %s93
    %p100 = scmp.eq.s32.totalorder %s15, 1
    %p101 = por %p99, %p100
    %p102 = scmp.ne.s32.totalorder %s93, %s94
    %p103 = scmp.eq.s32.totalorder %s15, 0
    %p104 = por %p102, %p103
    %p105 = scmp.ne.s32.totalorder %s93, %s94
    %p106 = scmp.eq.s32.totalorder %s16, 1
    %p107 = por %p105, %p106
    %p109 = scmp.ne.s32.totalorder %s94, %s108
    %p110 = scmp.eq.s32.totalorder %s16, 0
    %p111 = por %p109, %p110
    %s112 = ssub.s32 %s10, %s17
    %p113 = scmp.eq.s32.totalorder %s112, 0
    %s115 = sadd.s32 %s114, 1
    %s116 = scalar_select %p113, %s114, %s115
    %p119 = pneg %p113
    %p120 = scmp.eq.s32.totalorder %s10, 1
    %p121 = por %p119, %p120
    %p122 = scmp.ne.s32.totalorder %s114, %s117
    %p123 = scmp.eq.s32.totalorder %s10, 0
    %p124 = por %p122, %p123
    %p125 = scmp.ne.s32.totalorder %s114, %s117
    %p126 = scmp.eq.s32.totalorder %s15, 1
    %p127 = por %p125, %p126
    %p128 = scmp.ne.s32.totalorder %s117, %s118
    %p129 = scmp.eq.s32.totalorder %s15, 0
    %p130 = por %p128, %p129
    %p131 = scmp.ne.s32.totalorder %s117, %s118
    %p132 = scmp.eq.s32.totalorder %s16, 1
    %p133 = por %p131, %p132
    %p135 = scmp.ne.s32.totalorder %s118, %s134
    %p136 = scmp.eq.s32.totalorder %s16, 0
    %p137 = por %p135, %p136
    %p138 = scmp.le.s32.totalorder 1, %s10
    %p139 = scmp.lt.s32.totalorder %s10, 3
    %p140 = pnand %p138, %p139
    %p141 = pneg %p140
    // Predicated region
    $region9: #{conformer_forward.3} parent=5 // pred_check
      _
    $region10: #{conformer_forward.3} parent=5 // pred_check_branch
      %143 = sbr.rel (%p140) target = $region12
    $region11: #{conformer_forward.3} parent=5 // pred_region
      %s144 = ssub.s32 %s10, 1
      // Predicated region
      $region13: #{conformer_forward.3} parent=11 // pred_check
        %p145 = pneg %p83
      $region14: #{conformer_forward.3} parent=11 // pred_check_branch
        %147 = sbr.rel (%p145) target = $region16
      $region15: #{conformer_forward.3} parent=11 // pred_region
        _
      $region16: #{conformer_forward.3} parent=11 // pred_fallthru
        _
      // Predicated region
      $region17: #{conformer_forward.3} parent=11 // pred_check
        %p148 = pneg %p104
      $region18: #{conformer_forward.3} parent=11 // pred_check_branch
        %150 = sbr.rel (%p148) target = $region20
      $region19: #{conformer_forward.3} parent=11 // pred_region
        _
      $region20: #{conformer_forward.3} parent=11 // pred_fallthru
        _
    $region12: #{conformer_forward.3} parent=5 // pred_fallthru
      _
    %p151 = scmp.lt.s32.totalorder %s10, 2
    // Predicated region
    $region21: #{conformer_forward.3} parent=5 // pred_check
      %p152 = pneg %p151
    $region22: #{conformer_forward.3} parent=5 // pred_check_branch
      %154 = sbr.rel (%p152) target = $region24
    $region23: #{conformer_forward.3} parent=5 // pred_region
      // Predicated region
      $region25: #{conformer_forward.3} parent=23 // pred_check
        %p155 = pneg %p30
      $region26: #{conformer_forward.3} parent=23 // pred_check_branch
        %157 = sbr.rel (%p155) target = $region28
      $region27: #{conformer_forward.3} parent=23 // pred_region
        %s158 = smul.u32 2, %s10
        %p159 = scmp.lt.s32.totalorder %s158, 3
        %s160 = scalar_select %p159, %s158, 3
        %s161 = smul.addr %s160, 2
        %s162 = smul.addr %s161, 8
        %s163 = scalar_lea.vmem %s0, %s162
        %s164 = smul.u32 2, %s10
      $region28: #{conformer_forward.3} parent=23 // pred_fallthru
        _
      // Predicated region
      $region29: #{conformer_forward.3} parent=23 // pred_check
        %p165 = pneg %p56
      $region30: #{conformer_forward.3} parent=23 // pred_check_branch
        %167 = sbr.rel (%p165) target = $region32
      $region31: #{conformer_forward.3} parent=23 // pred_region
        %s168 = smul.u32 2, %s10
        %p169 = scmp.lt.s32.totalorder %s168, 3
        %s170 = scalar_select %p169, %s168, 3
        %s171 = smul.addr %s170, 2
        %s172 = smul.addr %s171, 8
        %s173 = scalar_lea.vmem %s1, %s172
        %s174 = smul.u32 2, %s10
      $region32: #{conformer_forward.3} parent=23 // pred_fallthru
        _
    $region24: #{conformer_forward.3} parent=5 // pred_fallthru
      _
    %p175 = scmp.le.s32.totalorder 1, %s10
    %p176 = scmp.lt.s32.totalorder %s10, 3
    %p177 = pnand %p175, %p176
    %p178 = pneg %p177
    // Predicated region
    $region33: #{conformer_forward.3} parent=5 // pred_check
      _
    $region34: #{conformer_forward.3} parent=5 // pred_check_branch
      %180 = sbr.rel (%p177) target = $region36
    $region35: #{conformer_forward.3} parent=5 // pred_region
      %s181 = ssub.s32 %s10, 1
      %s182 = smul.u32 2, %s15
      %p183 = scmp.lt.s32.totalorder %s182, 3
      %s184 = scalar_select %p183, %s182, 3
      %s185 = smul.addr %s184, 2
      %s186 = smul.addr %s185, 8
      %s187 = scalar_lea.vmem %s0, %s186
      %p188 = pneg %p36
      %p189 = pneg %p33
      %s190 = smul.u32 2, %s15
      %p191 = scmp.lt.s32.totalorder %s190, 3
      %s192 = scalar_select %p191, %s190, 3
      %s193 = smul.addr %s192, 2
      %s194 = smul.addr %s193, 8
      %s195 = scalar_lea.vmem %s1, %s194
      %p196 = pneg %p62
      %p197 = pneg %p59
      %p198 = pneg %p83
      %p199 = pneg %p80
      %p200 = pneg %p104
      %p201 = pneg %p101
      %p202 = pneg %p130
      %p203 = pneg %p127
      %s204 = smul.u32 2, %s15
      %p205 = scmp.lt.s32.totalorder %s204, 3
      %s206 = scalar_select %p205, %s204, 3
      %s207 = smul.addr %s206, 8
      %s208 = scalar_lea.vmem %s4, %s207
      %s209 = smul.u32 2, %s15
      %p210 = scmp.lt.s32.totalorder %s209, 3
      %s211 = scalar_select %p210, %s209, 3
      %s212 = smul.addr %s211, 2
      %s213 = smul.addr %s212, 8
      %s214 = scalar_lea.vmem %s0, %s213
      %s215 = smul.u32 2, %s15
      %s216 = smul.u32 2, %s15
      %p217 = scmp.lt.s32.totalorder %s216, 3
      %s218 = scalar_select %p217, %s216, 3
      %s219 = smul.addr %s218, 2
      %s220 = smul.addr %s219, 8
      %s221 = scalar_lea.vmem %s1, %s220
      %s222 = smul.u32 2, %s15
      %s223 = smul.u32 2, %s15
      %p224 = scmp.lt.s32.totalorder %s223, 3
      %s225 = scalar_select %p224, %s223, 3
      %s226 = smul.addr %s225, 8
      %s227 = scalar_lea.vmem %s4, %s226
      %s228 = smul.u32 2, %s15
      %v230 = vld [vmem:[%s214] sm:$0xff]
      %v231 = vld [vmem:[%s214 + $0x8] sm:$0x3]
      %v232 = vld [vmem:[%s214 + $0x10] sm:$0xff]
      %v233 = vld [vmem:[%s214 + $0x18] sm:$0x3]
      %v234 = vld [vmem:[%s221] sm:$0xff]
      %v235 = vld [vmem:[%s221 + $0x8] sm:$0x1]
      %v236 = vld [vmem:[%s221 + $0x10] sm:$0xff]
      %v237 = vld [vmem:[%s221 + $0x18] sm:$0x1]
      %240 = vrot.lane.b32.xlu0 %v234, 32
      %v241 = vpop.permute.xlu0 %240
      %242 = vrot.lane.b32.xlu0 %v236, 32
      %v243 = vpop.permute.xlu0 %242
      %vm250 = vcmask 1046528
      %v251 = vrot.slane %v230, 1
      %v252 = vrot.slane %v231, 1
      %v253 = vsel %vm250, %v251, %v252
      %v254 = vrot.slane %v232, 1
      %v255 = vrot.slane %v233, 1
      %v256 = vsel %vm250, %v254, %v255
      %257 = vrot.lane.b32.xlu0 %v253, 64
      %v258 = vpop.permute.xlu0 %257
      %259 = vrot.lane.b32.xlu0 %v256, 64
      %v260 = vpop.permute.xlu0 %259
      %v265 = vrot.slane %v234, 1
      %v266 = vrot.slane %v235, 1
      %v267 = vsel %vm250, %v265, %v266
      %v268 = vrot.slane %v236, 1
      %v269 = vrot.slane %v237, 1
      %v270 = vsel %vm250, %v268, %v269
      %271 = vrot.lane.b32.xlu0 %v267, 96
      %v272 = vpop.permute.xlu0 %271
      %273 = vrot.lane.b32.xlu0 %v270, 96
      %v274 = vpop.permute.xlu0 %273
      %vm277 = vcmask 1045504
      %v278 = vrot.slane %v230, 2
      %v279 = vrot.slane %v231, 2
      %v280 = vsel %vm277, %v278, %v279
      %v281 = vrot.slane %v232, 2
      %v282 = vrot.slane %v233, 2
      %v283 = vsel %vm277, %v281, %v282
      %vm286 = vcmask 261120
      %v287 = vsel %vm286, %v230, %v241
      %v288 = vsel %vm286, %v232, %v243
      %vm289 = vcmask 523264
      %v290 = vsel %vm289, %v287, %v258
      %v291 = vsel %vm289, %v288, %v260
      %vm292 = vcmask 785408
      %v293 = vsel %vm292, %v290, %v272
      %v294 = vsel %vm292, %v291, %v274
      %v295 = vpack.c.bf16 %v294, %v293
      %v296 = vpack.c.bf16 %v283, %v280
      %v297 = vld [vmem:[%s2] sm:$0xf]
      %v298 = vld [vmem:[%s2 + $0x4] sm:$0xf]
      %v299 = vld [vmem:[%s2 + $0x8] sm:$0xf]
      %v300 = vld [vmem:[%s2 + $0xc] sm:$0xf]
      %v301 = vld [vmem:[%s2 + $0x10] sm:$0xf]
      %v302 = vld [vmem:[%s2 + $0x14] sm:$0xf]
      %v303 = vld [vmem:[%s2 + $0x18] sm:$0xf]
      %v304 = vld [vmem:[%s2 + $0x1c] sm:$0xf]
      %v305 = vld [vmem:[%s2 + $0x20] sm:$0xf]
      %v306 = vld [vmem:[%s2 + $0x24] sm:$0xf]
      %v307 = vld [vmem:[%s2 + $0x28] sm:$0xf]
      %v308 = vld [vmem:[%s2 + $0x2c] sm:$0xf]
      %v309 = vld [vmem:[%s2 + $0x30] sm:$0xf]
      %v310 = vld [vmem:[%s2 + $0x34] sm:$0xf]
      %v311 = vld [vmem:[%s2 + $0x38] sm:$0xf]
      %v312 = vld [vmem:[%s2 + $0x3c] sm:$0xf]
      %v313 = vld [vmem:[%s2 + $0x40] sm:$0xf]
      %v314 = vld [vmem:[%s2 + $0x44] sm:$0xf]
      %v315 = vld [vmem:[%s2 + $0x48] sm:$0xf]
      %v316 = vld [vmem:[%s2 + $0x4c] sm:$0xf]
      %v317 = vld [vmem:[%s3] sm:$0x1]
      %v319 = vlaneseq
      %v320 = vshrl.u32 %v319, 7
      %v321 = vsub.s32 0, %v320
      %v322 = vrot.slane %v317, %v321
      %v344 = vunpack.c.l.b16 %v297
      %v345 = vunpack.c.l.b16 %v298
      %v346 = vunpack.c.l.b16 %v299
      %v347 = vunpack.c.l.b16 %v300
      %v348 = vunpack.c.l.b16 %v301
      %v349 = vunpack.c.l.b16 %v302
      %v350 = vunpack.c.l.b16 %v303
      %v351 = vunpack.c.l.b16 %v304
      %v352 = vunpack.c.l.b16 %v305
      %v353 = vunpack.c.l.b16 %v306
      %v354 = vunpack.c.l.b16 %v307
      %v355 = vunpack.c.l.b16 %v308
      %v356 = vunpack.c.l.b16 %v309
      %v357 = vunpack.c.l.b16 %v310
      %v358 = vunpack.c.l.b16 %v311
      %v359 = vunpack.c.l.b16 %v312
      %v360 = vunpack.c.l.b16 %v313
      %v361 = vunpack.c.l.b16 %v314
      %v362 = vunpack.c.l.b16 %v315
      %v363 = vunpack.c.l.b16 %v316
      %v364 = vpack.c.b16 %v345, %v344
      %v365 = vpack.c.b16 %v347, %v346
      %v366 = vpack.c.b16 %v349, %v348
      %v367 = vpack.c.b16 %v351, %v350
      %v368 = vpack.c.b16 %v353, %v352
      %v369 = vpack.c.b16 %v355, %v354
      %v370 = vpack.c.b16 %v357, %v356
      %v371 = vpack.c.b16 %v359, %v358
      %v372 = vpack.c.b16 %v361, %v360
      %v373 = vpack.c.b16 %v363, %v362
      %v385 = vsel %vm286, %v296, 0
      %387 = vmatprep.subr.bf16.mxu0 0
      %388 = vmatpush1.bf16.msra.mxu0 %v364
      %389 = vmatprep.subr.bf16.mxu0 0
      %390 = vmatpush1.bf16.msra.mxu0 %v365
      %391 = vmatprep.subr.bf16.mxu0 0
      %392 = vmatpush1.bf16.msra.mxu0 %v366
      %393 = vmatprep.subr.bf16.mxu0 0
      %394 = vmatpush1.bf16.msra.mxu0 %v367
      %395 = vmatprep.subr.bf16.mxu0 0
      %396 = vmatpush1.bf16.msra.mxu0 %v368
      %397 = vmatprep.subr.bf16.mxu0 0
      %398 = vmatpush1.bf16.msra.mxu0 %v369
      %399 = vmatprep.subr.bf16.mxu0 0
      %400 = vmatpush1.bf16.msra.mxu0 %v370
      %401 = vmatprep.subr.bf16.mxu0 0
      %402 = vmatpush1.bf16.msra.mxu0 %v371
      %403 = vmatprep.subr.bf16.mxu0 0
      %404 = vmatpush1.bf16.msra.mxu0 %v372
      %405 = vmatprep.subr.bf16.mxu0 0
      %406 = vmatpush1.bf16.msra.mxu0 %v373
      %407 = vmatprep.subr.bf16.mxu0 0
      %408 = vmatpush1.bf16.msra.mxu0 0
      %409 = vmatprep.subr.bf16.mxu0 0
      %410 = vmatpush1.bf16.msra.mxu0 0
      %411 = vmatprep.subr.bf16.mxu0 0
      %412 = vmatpush1.bf16.msra.mxu0 0
      %413 = vmatprep.subr.bf16.mxu0 0
      %414 = vmatpush1.bf16.msra.mxu0 0
      %415 = vmatprep.subr.bf16.mxu0 0
      %416 = vmatpush1.bf16.msra.mxu0 0
      %417 = vmatprep.subr.bf16.mxu0 0
      %418 = vmatpush1.bf16.msra.mxu0 0
      %419 = vmatprep.mubr.bf16.mxu0 %v385
      %420 = vmatmul.mubr.bf16.gmra.mrb[0].mxu0 %v295
      %v421 = vpop.f32.mrb[0].mxu0
      %v422 = vadd.f32 %v322, %v421
      %v423 = vpop.f32.mrb[0].mxu0
      %v424 = vpop.f32.mrb[0].mxu0
      %v425 = vadd.f32 %v322, %v424
      %v426 = vpop.f32.mrb[0].mxu0
      %427 = vdwg.mxu0
      %428 = vst.msk [vmem:[%s227] sm:$0xff] %vm286, %v422
      %429 = vst.msk [vmem:[%s227 + $0x8] sm:$0xff] %vm286, %v425
      %s430 = smul.u32 2, %s15
      %p431 = scmp.lt.s32.totalorder %s430, 3
      %s432 = scalar_select %p431, %s430, 3
      %s433 = smul.addr %s432, 8
      %s434 = scalar_lea.vmem %s4, %s433
      // Predicated region
      $region37: #{conformer_forward.3} parent=35 // pred_check
        %p435 = pneg %p127
      $region38: #{conformer_forward.3} parent=35 // pred_check_branch
        %437 = sbr.rel (%p435) target = $region40
      $region39: #{conformer_forward.3} parent=35 // pred_region
        %s438 = smul.u32 2, %s15
      $region40: #{conformer_forward.3} parent=35 // pred_fallthru
        _
    $region36: #{conformer_forward.3} parent=5 // pred_fallthru
      _
    %p439 = scmp.le.s32.totalorder 2, %s10
    // Predicated region
    $region41: #{conformer_forward.3} parent=5 // pred_check
      %p440 = pneg %p439
    $region42: #{conformer_forward.3} parent=5 // pred_check_branch
      %442 = sbr.rel (%p440) target = $region44
    $region43: #{conformer_forward.3} parent=5 // pred_region
      %s443 = ssub.s32 %s10, 2
      // Predicated region
      $region45: #{conformer_forward.3} parent=43 // pred_check
        %p444 = pneg %p133
      $region46: #{conformer_forward.3} parent=43 // pred_check_branch
        %446 = sbr.rel (%p444) target = $region48
      $region47: #{conformer_forward.3} parent=43 // pred_region
        %s447 = smul.u32 2, %s16
        %p448 = scmp.lt.s32.totalorder %s447, 3
        %s449 = scalar_select %p448, %s447, 3
        %s450 = smul.addr %s449, 8
        %s451 = scalar_lea.vmem %s4, %s450
      $region48: #{conformer_forward.3} parent=43 // pred_fallthru
        _
    $region44: #{conformer_forward.3} parent=5 // pred_fallthru
      _
  $region6: #{conformer_forward.3} parent=0 // loop_footer
    %s14 = sadd.s32 1, %s10
  $region7: #{conformer_forward.3} parent=0 // loop_footer_branch
    %9 = sbr.rel target = $region3
  $region8: #{conformer_forward.3} parent=0 // loop_exit
    _

// kernel: conformer_forward.5
$region0: #{conformer_forward.5}
  #allocation0 [shape = 'u32[]', space=smem, size = 0x4, offset = 0x4, fixed_abs, tag = 'smem constant byte address 0x4 - core index']
  #allocation1 [shape = 'u32[144,128]{1,0:T(1,128)}', space=vmem, size = 0x12000, scoped, tag = 'internal scratch']
  %s0 = inlined_call_operand.vmem [shape: f32[4,8,32], index: 0, kind: input, shape index: {}]
  %s1 = inlined_call_operand.vmem [shape: bf16[32,160], index: 1, kind: input, shape index: {}]
  %s2 = inlined_call_operand.vmem [shape: f32[1,32], index: 2, kind: input, shape index: {}]
  %s3 = inlined_call_operand.vmem [shape: f32[4,9,32], index: 3, kind: output, shape index: {0}]
  %s4 = inlined_call_operand.vmem [shape: f32[4,8,32], index: 4, kind: output, shape index: {1}]
  %5 = xla_tuple %s3, %s4
  %s6 = sld [smem:[#allocation0]]
  $region53: #{conformer_forward.5} parent=0
    _
  %s8 = ssub.s32 1, %s6
  %s9 = scalar_select 0, %s8, %s6
  loop: start=0, step=1, limit=4
  $region2: #{conformer_forward.5} parent=0 // loop_pre_header
    _
  $region3: #{conformer_forward.5} parent=0 // loop_header
    %s11 = sphi 0, %s15
    %p12 = scmp.ge.s32.totalorder %s11, 4
    %s21 = sphi 0, %s23
    %s24 = sphi 0, %s21
    %s25 = sphi 0, %s24
    %s41 = sphi 0, %s25
    %s45 = sphi 0, %s45
    %s47 = sphi 0, %s45
    %s48 = sphi 0, %s47
    %s62 = sphi 0, %s48
    %s66 = sphi 0, %s66
    %s68 = sphi 0, %s66
    %s69 = sphi 0, %s68
    %s83 = sphi 0, %s69
    %s89 = sphi 0, %s91
    %s92 = sphi 0, %s89
    %s93 = sphi 0, %s92
    %s109 = sphi 0, %s93
    %s115 = sphi 0, %s117
    %s118 = sphi 0, %s115
    %s119 = sphi 0, %s118
    %s135 = sphi 0, %s119
  $region4: #{conformer_forward.5} parent=0 // loop_header_branch
    %14 = sbr.rel (%p12) target = $region8
  $region5: #{conformer_forward.5} parent=0 // loop_body
    %s16 = ssub.s32 %s11, 1
    %s17 = ssub.s32 %s11, 2
    %s18 = sadd.s32 %s11, 1
    %s19 = ssub.s32 %s11, %s18
    %p20 = scmp.eq.s32.totalorder %s19, 0
    %s22 = sadd.s32 %s21, 1
    %s23 = scalar_select %p20, %s21, %s22
    %p26 = pneg %p20
    %p27 = scmp.eq.s32.totalorder %s11, 1
    %p28 = por %p26, %p27
    %p29 = scmp.ne.s32.totalorder %s21, %s24
    %p30 = scmp.eq.s32.totalorder %s11, 0
    %p31 = por %p29, %p30
    %p32 = scmp.ne.s32.totalorder %s21, %s24
    %p33 = scmp.eq.s32.totalorder %s16, 1
    %p34 = por %p32, %p33
    %p35 = scmp.ne.s32.totalorder %s24, %s25
    %p36 = scmp.eq.s32.totalorder %s16, 0
    %p37 = por %p35, %p36
    %p38 = scmp.ne.s32.totalorder %s24, %s25
    %p39 = scmp.eq.s32.totalorder %s17, 1
    %p40 = por %p38, %p39
    %p42 = scmp.ne.s32.totalorder %s25, %s41
    %p43 = scmp.eq.s32.totalorder %s17, 0
    %p44 = por %p42, %p43
    %s46 = sadd.s32 %s45, 1
    %p49 = scmp.eq.s32.totalorder %s11, 1
    %p50 = scmp.ne.s32.totalorder %s45, %s47
    %p51 = scmp.eq.s32.totalorder %s11, 0
    %p52 = por %p50, %p51
    %p53 = scmp.ne.s32.totalorder %s45, %s47
    %p54 = scmp.eq.s32.totalorder %s16, 1
    %p55 = por %p53, %p54
    %p56 = scmp.ne.s32.totalorder %s47, %s48
    %p57 = scmp.eq.s32.totalorder %s16, 0
    %p58 = por %p56, %p57
    %p59 = scmp.ne.s32.totalorder %s47, %s48
    %p60 = scmp.eq.s32.totalorder %s17, 1
    %p61 = por %p59, %p60
    %p63 = scmp.ne.s32.totalorder %s48, %s62
    %p64 = scmp.eq.s32.totalorder %s17, 0
    %p65 = por %p63, %p64
    %s67 = sadd.s32 %s66, 1
    %p70 = scmp.eq.s32.totalorder %s11, 1
    %p71 = scmp.ne.s32.totalorder %s66, %s68
    %p72 = scmp.eq.s32.totalorder %s11, 0
    %p73 = por %p71, %p72
    %p74 = scmp.ne.s32.totalorder %s66, %s68
    %p75 = scmp.eq.s32.totalorder %s16, 1
    %p76 = por %p74, %p75
    %p77 = scmp.ne.s32.totalorder %s68, %s69
    %p78 = scmp.eq.s32.totalorder %s16, 0
    %p79 = por %p77, %p78
    %p80 = scmp.ne.s32.totalorder %s68, %s69
    %p81 = scmp.eq.s32.totalorder %s17, 1
    %p82 = por %p80, %p81
    %p84 = scmp.ne.s32.totalorder %s69, %s83
    %p85 = scmp.eq.s32.totalorder %s17, 0
    %p86 = por %p84, %p85
    %s87 = ssub.s32 %s11, %s18
    %p88 = scmp.eq.s32.totalorder %s87, 0
    %s90 = sadd.s32 %s89, 1
    %s91 = scalar_select %p88, %s89, %s90
    %p94 = pneg %p88
    %p95 = scmp.eq.s32.totalorder %s11, 1
    %p96 = por %p94, %p95
    %p97 = scmp.ne.s32.totalorder %s89, %s92
    %p98 = scmp.eq.s32.totalorder %s11, 0
    %p99 = por %p97, %p98
    %p100 = scmp.ne.s32.totalorder %s89, %s92
    %p101 = scmp.eq.s32.totalorder %s16, 1
    %p102 = por %p100, %p101
    %p103 = scmp.ne.s32.totalorder %s92, %s93
    %p104 = scmp.eq.s32.totalorder %s16, 0
    %p105 = por %p103, %p104
    %p106 = scmp.ne.s32.totalorder %s92, %s93
    %p107 = scmp.eq.s32.totalorder %s17, 1
    %p108 = por %p106, %p107
    %p110 = scmp.ne.s32.totalorder %s93, %s109
    %p111 = scmp.eq.s32.totalorder %s17, 0
    %p112 = por %p110, %p111
    %s113 = ssub.s32 %s11, %s18
    %p114 = scmp.eq.s32.totalorder %s113, 0
    %s116 = sadd.s32 %s115, 1
    %s117 = scalar_select %p114, %s115, %s116
    %p120 = pneg %p114
    %p121 = scmp.eq.s32.totalorder %s11, 1
    %p122 = por %p120, %p121
    %p123 = scmp.ne.s32.totalorder %s115, %s118
    %p124 = scmp.eq.s32.totalorder %s11, 0
    %p125 = por %p123, %p124
    %p126 = scmp.ne.s32.totalorder %s115, %s118
    %p127 = scmp.eq.s32.totalorder %s16, 1
    %p128 = por %p126, %p127
    %p129 = scmp.ne.s32.totalorder %s118, %s119
    %p130 = scmp.eq.s32.totalorder %s16, 0
    %p131 = por %p129, %p130
    %p132 = scmp.ne.s32.totalorder %s118, %s119
    %p133 = scmp.eq.s32.totalorder %s17, 1
    %p134 = por %p132, %p133
    %p136 = scmp.ne.s32.totalorder %s119, %s135
    %p137 = scmp.eq.s32.totalorder %s17, 0
    %p138 = por %p136, %p137
    %p139 = scmp.le.s32.totalorder 1, %s11
    %p140 = scmp.lt.s32.totalorder %s11, 3
    %p141 = pnand %p139, %p140
    %p142 = pneg %p141
    // Predicated region
    $region9: #{conformer_forward.5} parent=5 // pred_check
      _
    $region10: #{conformer_forward.5} parent=5 // pred_check_branch
      %144 = sbr.rel (%p141) target = $region12
    $region11: #{conformer_forward.5} parent=5 // pred_region
      %s145 = ssub.s32 %s11, 1
      // Predicated region
      $region13: #{conformer_forward.5} parent=11 // pred_check
        %p146 = pneg %p58
      $region14: #{conformer_forward.5} parent=11 // pred_check_branch
        %148 = sbr.rel (%p146) target = $region16
      $region15: #{conformer_forward.5} parent=11 // pred_region
        _
      $region16: #{conformer_forward.5} parent=11 // pred_fallthru
        _
      // Predicated region
      $region17: #{conformer_forward.5} parent=11 // pred_check
        %p149 = pneg %p79
      $region18: #{conformer_forward.5} parent=11 // pred_check_branch
        %151 = sbr.rel (%p149) target = $region20
      $region19: #{conformer_forward.5} parent=11 // pred_region
        _
      $region20: #{conformer_forward.5} parent=11 // pred_fallthru
        _
    $region12: #{conformer_forward.5} parent=5 // pred_fallthru
      _
    %p152 = scmp.lt.s32.totalorder %s11, 2
    // Predicated region
    $region21: #{conformer_forward.5} parent=5 // pred_check
      %p153 = pneg %p152
    $region22: #{conformer_forward.5} parent=5 // pred_check_branch
      %155 = sbr.rel (%p153) target = $region24
    $region23: #{conformer_forward.5} parent=5 // pred_region
      // Predicated region
      $region25: #{conformer_forward.5} parent=23 // pred_check
        %p156 = pneg %p31
      $region26: #{conformer_forward.5} parent=23 // pred_check_branch
        %158 = sbr.rel (%p156) target = $region28
      $region27: #{conformer_forward.5} parent=23 // pred_region
        %s159 = smul.u32 2, %s11
        %p160 = scmp.lt.s32.totalorder %s159, 3
        %s161 = scalar_select %p160, %s159, 3
        %s162 = smul.addr %s161, 8
        %s163 = scalar_lea.vmem %s0, %s162
        %s164 = smul.u32 2, %s11
      $region28: #{conformer_forward.5} parent=23 // pred_fallthru
        _
    $region24: #{conformer_forward.5} parent=5 // pred_fallthru
      _
    %p165 = scmp.le.s32.totalorder 1, %s11
    %p166 = scmp.lt.s32.totalorder %s11, 3
    %p167 = pnand %p165, %p166
    %p168 = pneg %p167
    // Predicated region
    $region29: #{conformer_forward.5} parent=5 // pred_check
      _
    $region30: #{conformer_forward.5} parent=5 // pred_check_branch
      %170 = sbr.rel (%p167) target = $region32
    $region31: #{conformer_forward.5} parent=5 // pred_region
      %s171 = ssub.s32 %s11, 1
      %s172 = smul.u32 2, %s16
      %p173 = scmp.lt.s32.totalorder %s172, 3
      %s174 = scalar_select %p173, %s172, 3
      %s175 = smul.addr %s174, 8
      %s176 = scalar_lea.vmem %s0, %s175
      %p177 = pneg %p37
      %p178 = pneg %p34
      %p179 = pneg %p58
      %p180 = pneg %p55
      %p181 = pneg %p79
      %p182 = pneg %p76
      %p183 = pneg %p105
      %p184 = pneg %p102
      %s185 = smul.u32 2, %s16
      %p186 = scmp.lt.s32.totalorder %s185, 3
      %s187 = scalar_select %p186, %s185, 3
      %s188 = smul.addr %s187, 2
      %s189 = smul.addr %s188, 8
      %s190 = scalar_lea.vmem %s3, %s189
      %p191 = pneg %p131
      %p192 = pneg %p128
      %s193 = smul.u32 2, %s16
      %p194 = scmp.lt.s32.totalorder %s193, 3
      %s195 = scalar_select %p194, %s193, 3
      %s196 = smul.addr %s195, 8
      %s197 = scalar_lea.vmem %s4, %s196
      %s198 = smul.u32 2, %s16
      %p199 = scmp.lt.s32.totalorder %s198, 3
      %s200 = scalar_select %p199, %s198, 3
      %s201 = smul.addr %s200, 8
      %s202 = scalar_lea.vmem %s0, %s201
      %s203 = smul.u32 2, %s16
      %s204 = smul.u32 2, %s16
      %p205 = scmp.lt.s32.totalorder %s204, 3
      %s206 = scalar_select %p205, %s204, 3
      %s207 = smul.addr %s206, 2
      %s208 = smul.addr %s207, 8
      %s209 = scalar_lea.vmem %s3, %s208
      %s210 = smul.u32 2, %s16
      %s211 = smul.u32 2, %s16
      %p212 = scmp.lt.s32.totalorder %s211, 3
      %s213 = scalar_select %p212, %s211, 3
      %s214 = smul.addr %s213, 8
      %s215 = scalar_lea.vmem %s4, %s214
      %s216 = smul.u32 2, %s16
      %v218 = vld [vmem:[%s202] sm:$0xff]
      %v219 = vld [vmem:[%s202 + $0x8] sm:$0xff]
      %v220 = vpack.c.bf16 %v219, %v218
      %v221 = vld [vmem:[%s1] sm:$0xff]
      %v222 = vld [vmem:[%s1 + $0x8] sm:$0xff]
      %v223 = vld [vmem:[%s1 + $0x10] sm:$0xff]
      %v224 = vld [vmem:[%s1 + $0x18] sm:$0xff]
      %v229 = vunpack.c.l.b16 %v221
      %v230 = vunpack.c.h.b16 %v221
      %v231 = vunpack.c.l.b16 %v222
      %v232 = vunpack.c.h.b16 %v222
      %v233 = vunpack.c.l.b16 %v223
      %v234 = vunpack.c.h.b16 %v223
      %v235 = vunpack.c.l.b16 %v224
      %v236 = vunpack.c.h.b16 %v224
      %v237 = vpack.c.b16 %v231, %v229
      %v238 = vpack.c.b16 %v232, %v230
      %v239 = vpack.c.b16 %v235, %v233
      %v240 = vpack.c.b16 %v236, %v234
      %vm245 = vcmask 261120
      %v247 = vsel %vm245, %v220, 0
      %249 = vmatprep.subr.bf16.mxu0 %v238
      %250 = vmatpush1.bf16.msra.mxu0 %v237
      %251 = vmatprep.subr.bf16.mxu0 %v240
      %252 = vmatpush1.bf16.msra.mxu0 %v239
      %253 = vmatprep.subr.bf16.mxu0 0
      %254 = vmatpush1.bf16.msra.mxu0 0
      %255 = vmatprep.subr.bf16.mxu0 0
      %256 = vmatpush1.bf16.msra.mxu0 0
      %257 = vmatprep.subr.bf16.mxu0 0
      %258 = vmatpush1.bf16.msra.mxu0 0
      %259 = vmatprep.subr.bf16.mxu0 0
      %260 = vmatpush1.bf16.msra.mxu0 0
      %261 = vmatprep.subr.bf16.mxu0 0
      %262 = vmatpush1.bf16.msra.mxu0 0
      %263 = vmatprep.subr.bf16.mxu0 0
      %264 = vmatpush1.bf16.msra.mxu0 0
      %265 = vmatprep.subr.bf16.mxu0 0
      %266 = vmatpush1.bf16.msra.mxu0 0
      %267 = vmatprep.subr.bf16.mxu0 0
      %268 = vmatpush1.bf16.msra.mxu0 0
      %269 = vmatprep.subr.bf16.mxu0 0
      %270 = vmatpush1.bf16.msra.mxu0 0
      %271 = vmatprep.subr.bf16.mxu0 0
      %272 = vmatpush1.bf16.msra.mxu0 0
      %273 = vmatprep.subr.bf16.mxu0 0
      %274 = vmatpush1.bf16.msra.mxu0 0
      %275 = vmatprep.subr.bf16.mxu0 0
      %276 = vmatpush1.bf16.msra.mxu0 0
      %277 = vmatprep.subr.bf16.mxu0 0
      %278 = vmatpush1.bf16.msra.mxu0 0
      %279 = vmatprep.subr.bf16.mxu0 0
      %280 = vmatpush1.bf16.msra.mxu0 0
      %281 = vmatprep.mubr.bf16.mxu0 0
      %282 = vmatmul.mubr.bf16.gmra.mrb[0].mxu0 %v247
      %v283 = vpop.f32.mrb[0].mxu0
      %v284 = vadd.f32 0.0, %v283
      %v285 = vpop.f32.mrb[0].mxu0
      %v286 = vadd.f32 0.0, %v285
      %v287 = vpop.f32.mrb[0].mxu0
      %v288 = vadd.f32 0.0, %v287
      %v289 = vpop.f32.mrb[0].mxu0
      %v290 = vadd.f32 0.0, %v289
      %291 = vdwg.mxu0
      %v292 = vld [vmem:[%s2] sm:$0x1]
      %v294 = vlaneseq
      %v295 = vshrl.u32 %v294, 7
      %v296 = vsub.s32 0, %v295
      %v297 = vrot.slane %v292, %v296
      %302 = vrot.lane.b32.xlu0 %v284, 96
      %v303 = vpop.permute.xlu0 %302
      %304 = vrot.lane.b32.xlu0 0.0, 96
      %v305 = vpop.permute.xlu0 %304
      %306 = vrot.lane.b32.xlu0 %v288, 96
      %v307 = vpop.permute.xlu0 %306
      %v311 = vadd.f32 %v297, %v303
      %v312 = vadd.f32 %v297, %v305
      %v313 = vadd.f32 %v297, %v307
      %v314 = vrot.slane %v284, 7
      %v315 = vrot.slane %v288, 7
      %316 = vrot.lane.b32.xlu0 %v314, 32
      %v317 = vpop.permute.xlu0 %316
      %318 = vrot.lane.b32.xlu0 %v315, 32
      %v319 = vpop.permute.xlu0 %318
      %vm322 = vcmask 1040384
      %v323 = vsel %vm322, 0.0, %v317
      %v324 = vsel %vm322, 0.0, %v319
      %v325 = vadd.f32 %v311, %v323
      %v326 = vadd.f32 %v312, %v317
      %v327 = vadd.f32 %v313, %v324
      %v328 = vadd.f32 %v312, %v319
      %329 = vst.msk [vmem:[%s209] sm:$0xff] %vm245, %v325
      %vm330 = vcmask 253952
      %331 = vst.msk [vmem:[%s209 + $0x8] sm:$0x1] %vm330, %v326
      %332 = vst.msk [vmem:[%s209 + $0x10] sm:$0xff] %vm245, %v327
      %333 = vst.msk [vmem:[%s209 + $0x18] sm:$0x1] %vm330, %v328
      %334 = vrot.lane.b32.xlu0 %v284, 64
      %v335 = vpop.permute.xlu0 %334
      %336 = vrot.lane.b32.xlu0 %v288, 64
      %v337 = vpop.permute.xlu0 %336
      %v340 = vadd.f32 %v297, %v335
      %v341 = vadd.f32 %v297, %v337
      %v342 = vrot.slane %v284, 1
      %v343 = vrot.slane %v288, 1
      %vm346 = vcmask 1046528
      %v347 = vsel %vm346, %v342, 0.0
      %v348 = vsel %vm346, %v343, 0.0
      %v349 = vadd.f32 %v340, %v347
      %v350 = vadd.f32 %v341, %v348
      %v353 = vrot.slane %v286, 7
      %v354 = vrot.slane %v290, 7
      %v357 = vsel %vm322, 0.0, %v353
      %v358 = vsel %vm322, 0.0, %v354
      %v359 = vadd.f32 %v349, %v357
      %v360 = vadd.f32 %v350, %v358
      %361 = vst.msk [vmem:[%s215] sm:$0xff] %vm245, %v359
      %362 = vst.msk [vmem:[%s215 + $0x8] sm:$0xff] %vm245, %v360
      %s363 = smul.u32 2, %s16
      %p364 = scmp.lt.s32.totalorder %s363, 3
      %s365 = scalar_select %p364, %s363, 3
      %s366 = smul.addr %s365, 2
      %s367 = smul.addr %s366, 8
      %s368 = scalar_lea.vmem %s3, %s367
      %s369 = smul.u32 2, %s16
      %p370 = scmp.lt.s32.totalorder %s369, 3
      %s371 = scalar_select %p370, %s369, 3
      %s372 = smul.addr %s371, 8
      %s373 = scalar_lea.vmem %s4, %s372
      // Predicated region
      $region33: #{conformer_forward.5} parent=31 // pred_check
        %p374 = pneg %p102
      $region34: #{conformer_forward.5} parent=31 // pred_check_branch
        %376 = sbr.rel (%p374) target = $region36
      $region35: #{conformer_forward.5} parent=31 // pred_region
        %s377 = smul.u32 2, %s16
      $region36: #{conformer_forward.5} parent=31 // pred_fallthru
        _
      // Predicated region
      $region37: #{conformer_forward.5} parent=31 // pred_check
        %p378 = pneg %p128
      $region38: #{conformer_forward.5} parent=31 // pred_check_branch
        %380 = sbr.rel (%p378) target = $region40
      $region39: #{conformer_forward.5} parent=31 // pred_region
        %s381 = smul.u32 2, %s16
      $region40: #{conformer_forward.5} parent=31 // pred_fallthru
        _
    $region32: #{conformer_forward.5} parent=5 // pred_fallthru
      _
    %p382 = scmp.le.s32.totalorder 2, %s11
    // Predicated region
    $region41: #{conformer_forward.5} parent=5 // pred_check
      %p383 = pneg %p382
    $region42: #{conformer_forward.5} parent=5 // pred_check_branch
      %385 = sbr.rel (%p383) target = $region44
    $region43: #{conformer_forward.5} parent=5 // pred_region
      %s386 = ssub.s32 %s11, 2
      // Predicated region
      $region45: #{conformer_forward.5} parent=43 // pred_check
        %p387 = pneg %p108
      $region46: #{conformer_forward.5} parent=43 // pred_check_branch
        %389 = sbr.rel (%p387) target = $region48
      $region47: #{conformer_forward.5} parent=43 // pred_region
        %s390 = smul.u32 2, %s17
        %p391 = scmp.lt.s32.totalorder %s390, 3
        %s392 = scalar_select %p391, %s390, 3
        %s393 = smul.addr %s392, 2
        %s394 = smul.addr %s393, 8
        %s395 = scalar_lea.vmem %s3, %s394
      $region48: #{conformer_forward.5} parent=43 // pred_fallthru
        _
      // Predicated region
      $region49: #{conformer_forward.5} parent=43 // pred_check
        %p396 = pneg %p134
      $region50: #{conformer_forward.5} parent=43 // pred_check_branch
        %398 = sbr.rel (%p396) target = $region52
      $region51: #{conformer_forward.5} parent=43 // pred_region
        %s399 = smul.u32 2, %s17
        %p400 = scmp.lt.s32.totalorder %s399, 3
        %s401 = scalar_select %p400, %s399, 3
        %s402 = smul.addr %s401, 8
        %s403 = scalar_lea.vmem %s4, %s402
      $region52: #{conformer_forward.5} parent=43 // pred_fallthru
        _
    $region44: #{conformer_forward.5} parent=5 // pred_fallthru
      _
  $region6: #{conformer_forward.5} parent=0 // loop_footer
    %s15 = sadd.s32 1, %s11
  $region7: #{conformer_forward.5} parent=0 // loop_footer_branch
    %10 = sbr.rel target = $region3
  $region8: #{conformer_forward.5} parent=0 // loop_exit
    _

// kernel: conformer_forward.4
$region0: #{conformer_forward.4}
  #allocation0 [shape = 'u32[]', space=smem, size = 0x4, offset = 0x4, fixed_abs, tag = 'smem constant byte address 0x4 - core index']
  #allocation1 [shape = 'u32[144,128]{1,0:T(1,128)}', space=vmem, size = 0x12000, scoped, tag = 'internal scratch']
  %s0 = inlined_call_operand.vmem [shape: f32[4,8,32], index: 0, kind: input, shape index: {}]
  %s1 = inlined_call_operand.vmem [shape: f32[4,1,8], index: 1, kind: input, shape index: {}]
  %s2 = inlined_call_operand.vmem [shape: f32[2,20,32], index: 2, kind: input, shape index: {}]
  %s3 = inlined_call_operand.vmem [shape: f32[2,2,64], index: 3, kind: input, shape index: {}]
  %s4 = inlined_call_operand.vmem [shape: bf16[2,32,64], index: 4, kind: input, shape index: {}]
  %s5 = inlined_call_operand.vmem [shape: bf16[2,64,32], index: 5, kind: input, shape index: {}]
  %s6 = inlined_call_operand.vmem [shape: bf16[2,32,64], index: 6, kind: input, shape index: {}]
  %s7 = inlined_call_operand.vmem [shape: f32[2,7,32], index: 7, kind: input, shape index: {}]
  %s8 = inlined_call_operand.vmem [shape: bf16[2,32,32], index: 8, kind: input, shape index: {}]
  %s9 = inlined_call_operand.vmem [shape: bf16[2,32,96], index: 9, kind: input, shape index: {}]
  %s10 = inlined_call_operand.vmem [shape: bf16[2,32,32], index: 10, kind: input, shape index: {}]
  %s11 = inlined_call_operand.vmem [shape: bf16[2,32,64], index: 11, kind: input, shape index: {}]
  %s12 = inlined_call_operand.vmem [shape: bf16[2,64,32], index: 12, kind: input, shape index: {}]
  %s13 = inlined_call_operand.vmem [shape: f32[4,8,32], index: 13, kind: output, shape index: {}]
  %s14 = sld [smem:[#allocation0]]
  $region89: #{conformer_forward.4} parent=0
    _
  %s16 = ssub.s32 1, %s14
  %s17 = scalar_select 0, %s16, %s14
  loop: start=0, step=1, limit=6
  $region2: #{conformer_forward.4} parent=0 // loop_pre_header
    _
  $region3: #{conformer_forward.4} parent=0 // loop_header
    %s19 = sphi 0, %s23
    %p20 = scmp.ge.s32.totalorder %s19, 6
    %s26 = sphi 0, %s38
    %s27 = sphi 0, %s34
    %s28 = sphi 0, %s26
    %s29 = sphi 0, %s27
    %s30 = sphi 0, %s28
    %s31 = sphi 0, %s29
    %s41 = sphi 0, %s43
    %s44 = sphi 0, %s41
    %s45 = sphi 0, %s44
    %s61 = sphi 0, %s45
    %s67 = sphi 0, %s69
    %s70 = sphi 0, %s67
    %s71 = sphi 0, %s70
    %s87 = sphi 0, %s71
    %s93 = sphi 0, %s95
    %s96 = sphi 0, %s93
    %s97 = sphi 0, %s96
    %s113 = sphi 0, %s97
    %s119 = sphi 0, %s121
    %s122 = sphi 0, %s119
    %s123 = sphi 0, %s122
    %s139 = sphi 0, %s123
    %s145 = sphi 0, %s147
    %s148 = sphi 0, %s145
    %s149 = sphi 0, %s148
    %s165 = sphi 0, %s149
    %s171 = sphi 0, %s173
    %s174 = sphi 0, %s171
    %s175 = sphi 0, %s174
    %s191 = sphi 0, %s175
    %s197 = sphi 0, %s199
    %s200 = sphi 0, %s197
    %s201 = sphi 0, %s200
    %s217 = sphi 0, %s201
    %s223 = sphi 0, %s225
    %s226 = sphi 0, %s223
    %s227 = sphi 0, %s226
    %s243 = sphi 0, %s227
    %s249 = sphi 0, %s251
    %s252 = sphi 0, %s249
    %s253 = sphi 0, %s252
    %s269 = sphi 0, %s253
    %s275 = sphi 0, %s277
    %s278 = sphi 0, %s275
    %s279 = sphi 0, %s278
    %s295 = sphi 0, %s279
    %s301 = sphi 0, %s303
    %s304 = sphi 0, %s301
    %s305 = sphi 0, %s304
    %s321 = sphi 0, %s305
    %s327 = sphi 0, %s329
    %s330 = sphi 0, %s327
    %s331 = sphi 0, %s330
    %s347 = sphi 0, %s331
    %s353 = sphi 0, %s355
    %s356 = sphi 0, %s353
    %s357 = sphi 0, %s356
    %s373 = sphi 0, %s357
    %s379 = sphi 0, %s381
    %s382 = sphi 0, %s379
    %s383 = sphi 0, %s382
    %s399 = sphi 0, %s383
  $region4: #{conformer_forward.4} parent=0 // loop_header_branch
    %22 = sbr.rel (%p20) target = $region8
  $region5: #{conformer_forward.4} parent=0 // loop_body
    %s24 = ssub.s32 %s19, 1
    %s25 = ssub.s32 %s19, 2
    %s32 = sadd.s32 1, %s27
    %p33 = scmp.ge.s32.totalorder %s32, 2
    %s34 = scalar_select %p33, 0, %s32
    %s35 = sadd.s32 1, %s26
    %s36 = scalar_select %p33, %s35, %s26
    %p37 = scmp.ge.s32.totalorder %s36, 2
    %s38 = scalar_select %p37, 0, %s36
    %s39 = ssub.s32 %s26, %s38
    %p40 = scmp.eq.s32.totalorder %s39, 0
    %s42 = sadd.s32 %s41, 1
    %s43 = scalar_select %p40, %s41, %s42
    %p46 = pneg %p40
    %p47 = scmp.eq.s32.totalorder %s19, 3
    %p48 = por %p46, %p47
    %p49 = scmp.ne.s32.totalorder %s41, %s44
    %p50 = scmp.eq.s32.totalorder %s19, 0
    %p51 = por %p49, %p50
    %p52 = scmp.ne.s32.totalorder %s41, %s44
    %p53 = scmp.eq.s32.totalorder %s24, 3
    %p54 = por %p52, %p53
    %p55 = scmp.ne.s32.totalorder %s44, %s45
    %p56 = scmp.eq.s32.totalorder %s24, 0
    %p57 = por %p55, %p56
    %p58 = scmp.ne.s32.totalorder %s44, %s45
    %p59 = scmp.eq.s32.totalorder %s25, 3
    %p60 = por %p58, %p59
    %p62 = scmp.ne.s32.totalorder %s45, %s61
    %p63 = scmp.eq.s32.totalorder %s25, 0
    %p64 = por %p62, %p63
    %s65 = ssub.s32 %s26, %s38
    %p66 = scmp.eq.s32.totalorder %s65, 0
    %s68 = sadd.s32 %s67, 1
    %s69 = scalar_select %p66, %s67, %s68
    %p72 = pneg %p66
    %p73 = scmp.eq.s32.totalorder %s19, 3
    %p74 = por %p72, %p73
    %p75 = scmp.ne.s32.totalorder %s67, %s70
    %p76 = scmp.eq.s32.totalorder %s19, 0
    %p77 = por %p75, %p76
    %p78 = scmp.ne.s32.totalorder %s67, %s70
    %p79 = scmp.eq.s32.totalorder %s24, 3
    %p80 = por %p78, %p79
    %p81 = scmp.ne.s32.totalorder %s70, %s71
    %p82 = scmp.eq.s32.totalorder %s24, 0
    %p83 = por %p81, %p82
    %p84 = scmp.ne.s32.totalorder %s70, %s71
    %p85 = scmp.eq.s32.totalorder %s25, 3
    %p86 = por %p84, %p85
    %p88 = scmp.ne.s32.totalorder %s71, %s87
    %p89 = scmp.eq.s32.totalorder %s25, 0
    %p90 = por %p88, %p89
    %s91 = ssub.s32 %s27, %s34
    %p92 = scmp.eq.s32.totalorder %s91, 0
    %s94 = sadd.s32 %s93, 1
    %s95 = scalar_select %p92, %s93, %s94
    %p98 = pneg %p92
    %p99 = scmp.eq.s32.totalorder %s19, 3
    %p100 = por %p98, %p99
    %p101 = scmp.ne.s32.totalorder %s93, %s96
    %p102 = scmp.eq.s32.totalorder %s19, 0
    %p103 = por %p101, %p102
    %p104 = scmp.ne.s32.totalorder %s93, %s96
    %p105 = scmp.eq.s32.totalorder %s24, 3
    %p106 = por %p104, %p105
    %p107 = scmp.ne.s32.totalorder %s96, %s97
    %p108 = scmp.eq.s32.totalorder %s24, 0
    %p109 = por %p107, %p108
    %p110 = scmp.ne.s32.totalorder %s96, %s97
    %p111 = scmp.eq.s32.totalorder %s25, 3
    %p112 = por %p110, %p111
    %p114 = scmp.ne.s32.totalorder %s97, %s113
    %p115 = scmp.eq.s32.totalorder %s25, 0
    %p116 = por %p114, %p115
    %s117 = ssub.s32 %s27, %s34
    %p118 = scmp.eq.s32.totalorder %s117, 0
    %s120 = sadd.s32 %s119, 1
    %s121 = scalar_select %p118, %s119, %s120
    %p124 = pneg %p118
    %p125 = scmp.eq.s32.totalorder %s19, 3
    %p126 = por %p124, %p125
    %p127 = scmp.ne.s32.totalorder %s119, %s122
    %p128 = scmp.eq.s32.totalorder %s19, 0
    %p129 = por %p127, %p128
    %p130 = scmp.ne.s32.totalorder %s119, %s122
    %p131 = scmp.eq.s32.totalorder %s24, 3
    %p132 = por %p130, %p131
    %p133 = scmp.ne.s32.totalorder %s122, %s123
    %p134 = scmp.eq.s32.totalorder %s24, 0
    %p135 = por %p133, %p134
    %p136 = scmp.ne.s32.totalorder %s122, %s123
    %p137 = scmp.eq.s32.totalorder %s25, 3
    %p138 = por %p136, %p137
    %p140 = scmp.ne.s32.totalorder %s123, %s139
    %p141 = scmp.eq.s32.totalorder %s25, 0
    %p142 = por %p140, %p141
    %s143 = ssub.s32 %s27, %s34
    %p144 = scmp.eq.s32.totalorder %s143, 0
    %s146 = sadd.s32 %s145, 1
    %s147 = scalar_select %p144, %s145, %s146
    %p150 = pneg %p144
    %p151 = scmp.eq.s32.totalorder %s19, 3
    %p152 = por %p150, %p151
    %p153 = scmp.ne.s32.totalorder %s145, %s148
    %p154 = scmp.eq.s32.totalorder %s19, 0
    %p155 = por %p153, %p154
    %p156 = scmp.ne.s32.totalorder %s145, %s148
    %p157 = scmp.eq.s32.totalorder %s24, 3
    %p158 = por %p156, %p157
    %p159 = scmp.ne.s32.totalorder %s148, %s149
    %p160 = scmp.eq.s32.totalorder %s24, 0
    %p161 = por %p159, %p160
    %p162 = scmp.ne.s32.totalorder %s148, %s149
    %p163 = scmp.eq.s32.totalorder %s25, 3
    %p164 = por %p162, %p163
    %p166 = scmp.ne.s32.totalorder %s149, %s165
    %p167 = scmp.eq.s32.totalorder %s25, 0
    %p168 = por %p166, %p167
    %s169 = ssub.s32 %s27, %s34
    %p170 = scmp.eq.s32.totalorder %s169, 0
    %s172 = sadd.s32 %s171, 1
    %s173 = scalar_select %p170, %s171, %s172
    %p176 = pneg %p170
    %p177 = scmp.eq.s32.totalorder %s19, 3
    %p178 = por %p176, %p177
    %p179 = scmp.ne.s32.totalorder %s171, %s174
    %p180 = scmp.eq.s32.totalorder %s19, 0
    %p181 = por %p179, %p180
    %p182 = scmp.ne.s32.totalorder %s171, %s174
    %p183 = scmp.eq.s32.totalorder %s24, 3
    %p184 = por %p182, %p183
    %p185 = scmp.ne.s32.totalorder %s174, %s175
    %p186 = scmp.eq.s32.totalorder %s24, 0
    %p187 = por %p185, %p186
    %p188 = scmp.ne.s32.totalorder %s174, %s175
    %p189 = scmp.eq.s32.totalorder %s25, 3
    %p190 = por %p188, %p189
    %p192 = scmp.ne.s32.totalorder %s175, %s191
    %p193 = scmp.eq.s32.totalorder %s25, 0
    %p194 = por %p192, %p193
    %s195 = ssub.s32 %s27, %s34
    %p196 = scmp.eq.s32.totalorder %s195, 0
    %s198 = sadd.s32 %s197, 1
    %s199 = scalar_select %p196, %s197, %s198
    %p202 = pneg %p196
    %p203 = scmp.eq.s32.totalorder %s19, 3
    %p204 = por %p202, %p203
    %p205 = scmp.ne.s32.totalorder %s197, %s200
    %p206 = scmp.eq.s32.totalorder %s19, 0
    %p207 = por %p205, %p206
    %p208 = scmp.ne.s32.totalorder %s197, %s200
    %p209 = scmp.eq.s32.totalorder %s24, 3
    %p210 = por %p208, %p209
    %p211 = scmp.ne.s32.totalorder %s200, %s201
    %p212 = scmp.eq.s32.totalorder %s24, 0
    %p213 = por %p211, %p212
    %p214 = scmp.ne.s32.totalorder %s200, %s201
    %p215 = scmp.eq.s32.totalorder %s25, 3
    %p216 = por %p214, %p215
    %p218 = scmp.ne.s32.totalorder %s201, %s217
    %p219 = scmp.eq.s32.totalorder %s25, 0
    %p220 = por %p218, %p219
    %s221 = ssub.s32 %s27, %s34
    %p222 = scmp.eq.s32.totalorder %s221, 0
    %s224 = sadd.s32 %s223, 1
    %s225 = scalar_select %p222, %s223, %s224
    %p228 = pneg %p222
    %p229 = scmp.eq.s32.totalorder %s19, 3
    %p230 = por %p228, %p229
    %p231 = scmp.ne.s32.totalorder %s223, %s226
    %p232 = scmp.eq.s32.totalorder %s19, 0
    %p233 = por %p231, %p232
    %p234 = scmp.ne.s32.totalorder %s223, %s226
    %p235 = scmp.eq.s32.totalorder %s24, 3
    %p236 = por %p234, %p235
    %p237 = scmp.ne.s32.totalorder %s226, %s227
    %p238 = scmp.eq.s32.totalorder %s24, 0
    %p239 = por %p237, %p238
    %p240 = scmp.ne.s32.totalorder %s226, %s227
    %p241 = scmp.eq.s32.totalorder %s25, 3
    %p242 = por %p240, %p241
    %p244 = scmp.ne.s32.totalorder %s227, %s243
    %p245 = scmp.eq.s32.totalorder %s25, 0
    %p246 = por %p244, %p245
    %s247 = ssub.s32 %s27, %s34
    %p248 = scmp.eq.s32.totalorder %s247, 0
    %s250 = sadd.s32 %s249, 1
    %s251 = scalar_select %p248, %s249, %s250
    %p254 = pneg %p248
    %p255 = scmp.eq.s32.totalorder %s19, 3
    %p256 = por %p254, %p255
    %p257 = scmp.ne.s32.totalorder %s249, %s252
    %p258 = scmp.eq.s32.totalorder %s19, 0
    %p259 = por %p257, %p258
    %p260 = scmp.ne.s32.totalorder %s249, %s252
    %p261 = scmp.eq.s32.totalorder %s24, 3
    %p262 = por %p260, %p261
    %p263 = scmp.ne.s32.totalorder %s252, %s253
    %p264 = scmp.eq.s32.totalorder %s24, 0
    %p265 = por %p263, %p264
    %p266 = scmp.ne.s32.totalorder %s252, %s253
    %p267 = scmp.eq.s32.totalorder %s25, 3
    %p268 = por %p266, %p267
    %p270 = scmp.ne.s32.totalorder %s253, %s269
    %p271 = scmp.eq.s32.totalorder %s25, 0
    %p272 = por %p270, %p271
    %s273 = ssub.s32 %s27, %s34
    %p274 = scmp.eq.s32.totalorder %s273, 0
    %s276 = sadd.s32 %s275, 1
    %s277 = scalar_select %p274, %s275, %s276
    %p280 = pneg %p274
    %p281 = scmp.eq.s32.totalorder %s19, 3
    %p282 = por %p280, %p281
    %p283 = scmp.ne.s32.totalorder %s275, %s278
    %p284 = scmp.eq.s32.totalorder %s19, 0
    %p285 = por %p283, %p284
    %p286 = scmp.ne.s32.totalorder %s275, %s278
    %p287 = scmp.eq.s32.totalorder %s24, 3
    %p288 = por %p286, %p287
    %p289 = scmp.ne.s32.totalorder %s278, %s279
    %p290 = scmp.eq.s32.totalorder %s24, 0
    %p291 = por %p289, %p290
    %p292 = scmp.ne.s32.totalorder %s278, %s279
    %p293 = scmp.eq.s32.totalorder %s25, 3
    %p294 = por %p292, %p293
    %p296 = scmp.ne.s32.totalorder %s279, %s295
    %p297 = scmp.eq.s32.totalorder %s25, 0
    %p298 = por %p296, %p297
    %s299 = ssub.s32 %s27, %s34
    %p300 = scmp.eq.s32.totalorder %s299, 0
    %s302 = sadd.s32 %s301, 1
    %s303 = scalar_select %p300, %s301, %s302
    %p306 = pneg %p300
    %p307 = scmp.eq.s32.totalorder %s19, 3
    %p308 = por %p306, %p307
    %p309 = scmp.ne.s32.totalorder %s301, %s304
    %p310 = scmp.eq.s32.totalorder %s19, 0
    %p311 = por %p309, %p310
    %p312 = scmp.ne.s32.totalorder %s301, %s304
    %p313 = scmp.eq.s32.totalorder %s24, 3
    %p314 = por %p312, %p313
    %p315 = scmp.ne.s32.totalorder %s304, %s305
    %p316 = scmp.eq.s32.totalorder %s24, 0
    %p317 = por %p315, %p316
    %p318 = scmp.ne.s32.totalorder %s304, %s305
    %p319 = scmp.eq.s32.totalorder %s25, 3
    %p320 = por %p318, %p319
    %p322 = scmp.ne.s32.totalorder %s305, %s321
    %p323 = scmp.eq.s32.totalorder %s25, 0
    %p324 = por %p322, %p323
    %s325 = ssub.s32 %s27, %s34
    %p326 = scmp.eq.s32.totalorder %s325, 0
    %s328 = sadd.s32 %s327, 1
    %s329 = scalar_select %p326, %s327, %s328
    %p332 = pneg %p326
    %p333 = scmp.eq.s32.totalorder %s19, 3
    %p334 = por %p332, %p333
    %p335 = scmp.ne.s32.totalorder %s327, %s330
    %p336 = scmp.eq.s32.totalorder %s19, 0
    %p337 = por %p335, %p336
    %p338 = scmp.ne.s32.totalorder %s327, %s330
    %p339 = scmp.eq.s32.totalorder %s24, 3
    %p340 = por %p338, %p339
    %p341 = scmp.ne.s32.totalorder %s330, %s331
    %p342 = scmp.eq.s32.totalorder %s24, 0
    %p343 = por %p341, %p342
    %p344 = scmp.ne.s32.totalorder %s330, %s331
    %p345 = scmp.eq.s32.totalorder %s25, 3
    %p346 = por %p344, %p345
    %p348 = scmp.ne.s32.totalorder %s331, %s347
    %p349 = scmp.eq.s32.totalorder %s25, 0
    %p350 = por %p348, %p349
    %s351 = ssub.s32 %s27, %s34
    %p352 = scmp.eq.s32.totalorder %s351, 0
    %s354 = sadd.s32 %s353, 1
    %s355 = scalar_select %p352, %s353, %s354
    %p358 = pneg %p352
    %p359 = scmp.eq.s32.totalorder %s19, 3
    %p360 = por %p358, %p359
    %p361 = scmp.ne.s32.totalorder %s353, %s356
    %p362 = scmp.eq.s32.totalorder %s19, 0
    %p363 = por %p361, %p362
    %p364 = scmp.ne.s32.totalorder %s353, %s356
    %p365 = scmp.eq.s32.totalorder %s24, 3
    %p366 = por %p364, %p365
    %p367 = scmp.ne.s32.totalorder %s356, %s357
    %p368 = scmp.eq.s32.totalorder %s24, 0
    %p369 = por %p367, %p368
    %p370 = scmp.ne.s32.totalorder %s356, %s357
    %p371 = scmp.eq.s32.totalorder %s25, 3
    %p372 = por %p370, %p371
    %p374 = scmp.ne.s32.totalorder %s357, %s373
    %p375 = scmp.eq.s32.totalorder %s25, 0
    %p376 = por %p374, %p375
    %s377 = ssub.s32 %s26, %s38
    %p378 = scmp.eq.s32.totalorder %s377, 0
    %s380 = sadd.s32 %s379, 1
    %s381 = scalar_select %p378, %s379, %s380
    %p384 = pneg %p378
    %p385 = scmp.eq.s32.totalorder %s19, 3
    %p386 = por %p384, %p385
    %p387 = scmp.ne.s32.totalorder %s379, %s382
    %p388 = scmp.eq.s32.totalorder %s19, 0
    %p389 = por %p387, %p388
    %p390 = scmp.ne.s32.totalorder %s379, %s382
    %p391 = scmp.eq.s32.totalorder %s24, 3
    %p392 = por %p390, %p391
    %p393 = scmp.ne.s32.totalorder %s382, %s383
    %p394 = scmp.eq.s32.totalorder %s24, 0
    %p395 = por %p393, %p394
    %p396 = scmp.ne.s32.totalorder %s382, %s383
    %p397 = scmp.eq.s32.totalorder %s25, 3
    %p398 = por %p396, %p397
    %p400 = scmp.ne.s32.totalorder %s383, %s399
    %p401 = scmp.eq.s32.totalorder %s25, 0
    %p402 = por %p400, %p401
    %p403 = scmp.le.s32.totalorder 1, %s19
    %p404 = scmp.lt.s32.totalorder %s19, 5
    %p405 = pnand %p403, %p404
    %p406 = pneg %p405
    // Predicated region
    $region9: #{conformer_forward.4} parent=5 // pred_check
      _
    $region10: #{conformer_forward.4} parent=5 // pred_check_branch
      %408 = sbr.rel (%p405) target = $region12
    $region11: #{conformer_forward.4} parent=5 // pred_region
      %s409 = ssub.s32 %s19, 1
    $region12: #{conformer_forward.4} parent=5 // pred_fallthru
      _
    %p410 = scmp.lt.s32.totalorder %s19, 4
    // Predicated region
    $region13: #{conformer_forward.4} parent=5 // pred_check
      %p411 = pneg %p410
    $region14: #{conformer_forward.4} parent=5 // pred_check_branch
      %413 = sbr.rel (%p411) target = $region16
    $region15: #{conformer_forward.4} parent=5 // pred_region
      // Predicated region
      $region17: #{conformer_forward.4} parent=15 // pred_check
        %p414 = pneg %p51
      $region18: #{conformer_forward.4} parent=15 // pred_check_branch
        %416 = sbr.rel (%p414) target = $region20
      $region19: #{conformer_forward.4} parent=15 // pred_region
        %s417 = smul.u32 2, %s26
        %p418 = scmp.lt.s32.totalorder %s417, 3
        %s419 = scalar_select %p418, %s417, 3
        %s420 = smul.addr %s419, 8
        %s421 = scalar_lea.vmem %s0, %s420
        %s422 = smul.u32 2, %s26
      $region20: #{conformer_forward.4} parent=15 // pred_fallthru
        _
      // Predicated region
      $region21: #{conformer_forward.4} parent=15 // pred_check
        %p423 = pneg %p77
      $region22: #{conformer_forward.4} parent=15 // pred_check_branch
        %425 = sbr.rel (%p423) target = $region24
      $region23: #{conformer_forward.4} parent=15 // pred_region
        %s426 = smul.u32 2, %s26
        %p427 = scmp.lt.s32.totalorder %s426, 3
        %s428 = scalar_select %p427, %s426, 3
        %s429 = scalar_lea.vmem %s1, %s428
        %s430 = smul.u32 2, %s26
      $region24: #{conformer_forward.4} parent=15 // pred_fallthru
        _
      // Predicated region
      $region25: #{conformer_forward.4} parent=15 // pred_check
        %p431 = pneg %p103
      $region26: #{conformer_forward.4} parent=15 // pred_check_branch
        %433 = sbr.rel (%p431) target = $region28
      $region27: #{conformer_forward.4} parent=15 // pred_region
        %p434 = scmp.lt.s32.totalorder %s27, 1
        %s435 = scalar_select %p434, %s27, 1
        %s436 = smul.addr %s435, 3
        %s437 = smul.addr %s436, 8
        %s438 = scalar_lea.vmem %s2, %s437
      $region28: #{conformer_forward.4} parent=15 // pred_fallthru
        _
      // Predicated region
      $region29: #{conformer_forward.4} parent=15 // pred_check
        %p439 = pneg %p129
      $region30: #{conformer_forward.4} parent=15 // pred_check_branch
        %441 = sbr.rel (%p439) target = $region32
      $region31: #{conformer_forward.4} parent=15 // pred_region
        %p442 = scmp.lt.s32.totalorder %s27, 1
        %s443 = scalar_select %p442, %s27, 1
        %s444 = smul.addr %s443, 2
        %s445 = scalar_lea.vmem %s3, %s444
      $region32: #{conformer_forward.4} parent=15 // pred_fallthru
        _
      // Predicated region
      $region33: #{conformer_forward.4} parent=15 // pred_check
        %p446 = pneg %p155
      $region34: #{conformer_forward.4} parent=15 // pred_check_branch
        %448 = sbr.rel (%p446) target = $region36
      $region35: #{conformer_forward.4} parent=15 // pred_region
        %p449 = scmp.lt.s32.totalorder %s27, 1
        %s450 = scalar_select %p449, %s27, 1
        %s451 = smul.addr %s450, 4
        %s452 = smul.addr %s451, 4
        %s453 = scalar_lea.vmem %s4, %s452
      $region36: #{conformer_forward.4} parent=15 // pred_fallthru
        _
      // Predicated region
      $region37: #{conformer_forward.4} parent=15 // pred_check
        %p454 = pneg %p181
      $region38: #{conformer_forward.4} parent=15 // pred_check_branch
        %456 = sbr.rel (%p454) target = $region40
      $region39: #{conformer_forward.4} parent=15 // pred_region
        %p457 = scmp.lt.s32.totalorder %s27, 1
        %s458 = scalar_select %p457, %s27, 1
        %s459 = smul.addr %s458, 8
        %s460 = smul.addr %s459, 4
        %s461 = scalar_lea.vmem %s5, %s460
      $region40: #{conformer_forward.4} parent=15 // pred_fallthru
        _
      // Predicated region
      $region41: #{conformer_forward.4} parent=15 // pred_check
        %p462 = pneg %p207
      $region42: #{conformer_forward.4} parent=15 // pred_check_branch
        %464 = sbr.rel (%p462) target = $region44
      $region43: #{conformer_forward.4} parent=15 // pred_region
        %p465 = scmp.lt.s32.totalorder %s27, 1
        %s466 = scalar_select %p465, %s27, 1
        %s467 = smul.addr %s466, 4
        %s468 = smul.addr %s467, 4
        %s469 = scalar_lea.vmem %s6, %s468
      $region44: #{conformer_forward.4} parent=15 // pred_fallthru
        _
      // Predicated region
      $region45: #{conformer_forward.4} parent=15 // pred_check
        %p470 = pneg %p233
      $region46: #{conformer_forward.4} parent=15 // pred_check_branch
        %472 = sbr.rel (%p470) target = $region48
      $region47: #{conformer_forward.4} parent=15 // pred_region
        %p473 = scmp.lt.s32.totalorder %s27, 1
        %s474 = scalar_select %p473, %s27, 1
        %s475 = smul.addr %s474, 8
        %s476 = scalar_lea.vmem %s7, %s475
      $region48: #{conformer_forward.4} parent=15 // pred_fallthru
        _
      // Predicated region
      $region49: #{conformer_forward.4} parent=15 // pred_check
        %p477 = pneg %p259
      $region50: #{conformer_forward.4} parent=15 // pred_check_branch
        %479 = sbr.rel (%p477) target = $region52
      $region51: #{conformer_forward.4} parent=15 // pred_region
        %p480 = scmp.lt.s32.totalorder %s27, 1
        %s481 = scalar_select %p480, %s27, 1
        %s482 = smul.addr %s481, 4
        %s483 = smul.addr %s482, 4
        %s484 = scalar_lea.vmem %s8, %s483
      $region52: #{conformer_forward.4} parent=15 // pred_fallthru
        _
      // Predicated region
      $region53: #{conformer_forward.4} parent=15 // pred_check
        %p485 = pneg %p285
      $region54: #{conformer_forward.4} parent=15 // pred_check_branch
        %487 = sbr.rel (%p485) target = $region56
      $region55: #{conformer_forward.4} parent=15 // pred_region
        %p488 = scmp.lt.s32.totalorder %s27, 1
        %s489 = scalar_select %p488, %s27, 1
        %s490 = smul.addr %s489, 4
        %s491 = smul.addr %s490, 4
        %s492 = scalar_lea.vmem %s9, %s491
      $region56: #{conformer_forward.4} parent=15 // pred_fallthru
        _
      // Predicated region
      $region57: #{conformer_forward.4} parent=15 // pred_check
        %p493 = pneg %p311
      $region58: #{conformer_forward.4} parent=15 // pred_check_branch
        %495 = sbr.rel (%p493) target = $region60
      $region59: #{conformer_forward.4} parent=15 // pred_region
        %p496 = scmp.lt.s32.totalorder %s27, 1
        %s497 = scalar_select %p496, %s27, 1
        %s498 = smul.addr %s497, 4
        %s499 = smul.addr %s498, 4
        %s500 = scalar_lea.vmem %s10, %s499
      $region60: #{conformer_forward.4} parent=15 // pred_fallthru
        _
      // Predicated region
      $region61: #{conformer_forward.4} parent=15 // pred_check
        %p501 = pneg %p337
      $region62: #{conformer_forward.4} parent=15 // pred_check_branch
        %503 = sbr.rel (%p501) target = $region64
      $region63: #{conformer_forward.4} parent=15 // pred_region
        %p504 = scmp.lt.s32.totalorder %s27, 1
        %s505 = scalar_select %p504, %s27, 1
        %s506 = smul.addr %s505, 4
        %s507 = smul.addr %s506, 4
        %s508 = scalar_lea.vmem %s11, %s507
      $region64: #{conformer_forward.4} parent=15 // pred_fallthru
        _
      // Predicated region
      $region65: #{conformer_forward.4} parent=15 // pred_check
        %p509 = pneg %p363
      $region66: #{conformer_forward.4} parent=15 // pred_check_branch
        %511 = sbr.rel (%p509) target = $region68
      $region67: #{conformer_forward.4} parent=15 // pred_region
        %p512 = scmp.lt.s32.totalorder %s27, 1
        %s513 = scalar_select %p512, %s27, 1
        %s514 = smul.addr %s513, 8
        %s515 = smul.addr %s514, 4
        %s516 = scalar_lea.vmem %s12, %s515
      $region68: #{conformer_forward.4} parent=15 // pred_fallthru
        _
    $region16: #{conformer_forward.4} parent=5 // pred_fallthru
      _
    %p517 = scmp.le.s32.totalorder 1, %s19
    %p518 = scmp.lt.s32.totalorder %s19, 5
    %p519 = pnand %p517, %p518
    %p520 = pneg %p519
    // Predicated region
    $region69: #{conformer_forward.4} parent=5 // pred_check
      _
    $region70: #{conformer_forward.4} parent=5 // pred_check_branch
      %522 = sbr.rel (%p519) target = $region72
    $region71: #{conformer_forward.4} parent=5 // pred_region
      %s523 = ssub.s32 %s19, 1
      %s524 = smul.u32 2, %s28
      %p525 = scmp.lt.s32.totalorder %s524, 3
      %s526 = scalar_select %p525, %s524, 3
      %s527 = smul.addr %s526, 8
      %s528 = scalar_lea.vmem %s0, %s527
      %p529 = pneg %p57
      %p530 = pneg %p54
      %s531 = smul.u32 2, %s28
      %p532 = scmp.lt.s32.totalorder %s531, 3
      %s533 = scalar_select %p532, %s531, 3
      %s534 = scalar_lea.vmem %s1, %s533
      %p535 = pneg %p83
      %p536 = pneg %p80
      %p537 = scmp.lt.s32.totalorder %s29, 1
      %s538 = scalar_select %p537, %s29, 1
      %s539 = smul.addr %s538, 3
      %s540 = smul.addr %s539, 8
      %s541 = scalar_lea.vmem %s2, %s540
      %p542 = pneg %p109
      %p543 = pneg %p106
      %p544 = scmp.lt.s32.totalorder %s29, 1
      %s545 = scalar_select %p544, %s29, 1
      %s546 = smul.addr %s545, 2
      %s547 = scalar_lea.vmem %s3, %s546
      %p548 = pneg %p135
      %p549 = pneg %p132
      %p550 = scmp.lt.s32.totalorder %s29, 1
      %s551 = scalar_select %p550, %s29, 1
      %s552 = smul.addr %s551, 4
      %s553 = smul.addr %s552, 4
      %s554 = scalar_lea.vmem %s4, %s553
      %p555 = pneg %p161
      %p556 = pneg %p158
      %p557 = scmp.lt.s32.totalorder %s29, 1
      %s558 = scalar_select %p557, %s29, 1
      %s559 = smul.addr %s558, 8
      %s560 = smul.addr %s559, 4
      %s561 = scalar_lea.vmem %s5, %s560
      %p562 = pneg %p187
      %p563 = pneg %p184
      %p564 = scmp.lt.s32.totalorder %s29, 1
      %s565 = scalar_select %p564, %s29, 1
      %s566 = smul.addr %s565, 4
      %s567 = smul.addr %s566, 4
      %s568 = scalar_lea.vmem %s6, %s567
      %p569 = pneg %p213
      %p570 = pneg %p210
      %p571 = scmp.lt.s32.totalorder %s29, 1
      %s572 = scalar_select %p571, %s29, 1
      %s573 = smul.addr %s572, 8
      %s574 = scalar_lea.vmem %s7, %s573
      %p575 = pneg %p239
      %p576 = pneg %p236
      %p577 = scmp.lt.s32.totalorder %s29, 1
      %s578 = scalar_select %p577, %s29, 1
      %s579 = smul.addr %s578, 4
      %s580 = smul.addr %s579, 4
      %s581 = scalar_lea.vmem %s8, %s580
      %p582 = pneg %p265
      %p583 = pneg %p262
      %p584 = scmp.lt.s32.totalorder %s29, 1
      %s585 = scalar_select %p584, %s29, 1
      %s586 = smul.addr %s585, 4
      %s587 = smul.addr %s586, 4
      %s588 = scalar_lea.vmem %s9, %s587
      %p589 = pneg %p291
      %p590 = pneg %p288
      %p591 = scmp.lt.s32.totalorder %s29, 1
      %s592 = scalar_select %p591, %s29, 1
      %s593 = smul.addr %s592, 4
      %s594 = smul.addr %s593, 4
      %s595 = scalar_lea.vmem %s10, %s594
      %p596 = pneg %p317
      %p597 = pneg %p314
      %p598 = scmp.lt.s32.totalorder %s29, 1
      %s599 = scalar_select %p598, %s29, 1
      %s600 = smul.addr %s599, 4
      %s601 = smul.addr %s600, 4
      %s602 = scalar_lea.vmem %s11, %s601
      %p603 = pneg %p343
      %p604 = pneg %p340
      %p605 = scmp.lt.s32.totalorder %s29, 1
      %s606 = scalar_select %p605, %s29, 1
      %s607 = smul.addr %s606, 8
      %s608 = smul.addr %s607, 4
      %s609 = scalar_lea.vmem %s12, %s608
      %p610 = pneg %p369
      %p611 = pneg %p366
      %p612 = pneg %p395
      %p613 = pneg %p392
      %s614 = smul.u32 2, %s28
      %p615 = scmp.lt.s32.totalorder %s614, 3
      %s616 = scalar_select %p615, %s614, 3
      %s617 = smul.addr %s616, 8
      %s618 = scalar_lea.vmem %s13, %s617
      %s619 = smul.u32 2, %s28
      %p620 = scmp.lt.s32.totalorder %s619, 3
      %s621 = scalar_select %p620, %s619, 3
      %s622 = smul.addr %s621, 8
      %s623 = scalar_lea.vmem %s0, %s622
      %s624 = smul.u32 2, %s28
      %s625 = smul.u32 2, %s28
      %p626 = scmp.lt.s32.totalorder %s625, 3
      %s627 = scalar_select %p626, %s625, 3
      %s628 = scalar_lea.vmem %s1, %s627
      %s629 = smul.u32 2, %s28
      %p630 = scmp.lt.s32.totalorder %s29, 1
      %s631 = scalar_select %p630, %s29, 1
      %s632 = smul.addr %s631, 3
      %s633 = smul.addr %s632, 8
      %s634 = scalar_lea.vmem %s2, %s633
      %p635 = scmp.lt.s32.totalorder %s29, 1
      %s636 = scalar_select %p635, %s29, 1
      %s637 = smul.addr %s636, 2
      %s638 = scalar_lea.vmem %s3, %s637
      %p639 = scmp.lt.s32.totalorder %s29, 1
      %s640 = scalar_select %p639, %s29, 1
      %s641 = smul.addr %s640, 4
      %s642 = smul.addr %s641, 4
      %s643 = scalar_lea.vmem %s4, %s642
      %p644 = scmp.lt.s32.totalorder %s29, 1
      %s645 = scalar_select %p644, %s29, 1
      %s646 = smul.addr %s645, 8
      %s647 = smul.addr %s646, 4
      %s648 = scalar_lea.vmem %s5, %s647
      %p649 = scmp.lt.s32.totalorder %s29, 1
      %s650 = scalar_select %p649, %s29, 1
      %s651 = smul.addr %s650, 4
      %s652 = smul.addr %s651, 4
      %s653 = scalar_lea.vmem %s6, %s652
      %p654 = scmp.lt.s32.totalorder %s29, 1
      %s655 = scalar_select %p654, %s29, 1
      %s656 = smul.addr %s655, 8
      %s657 = scalar_lea.vmem %s7, %s656
      %p658 = scmp.lt.s32.totalorder %s29, 1
      %s659 = scalar_select %p658, %s29, 1
      %s660 = smul.addr %s659, 4
      %s661 = smul.addr %s660, 4
      %s662 = scalar_lea.vmem %s8, %s661
      %p663 = scmp.lt.s32.totalorder %s29, 1
      %s664 = scalar_select %p663, %s29, 1
      %s665 = smul.addr %s664, 4
      %s666 = smul.addr %s665, 4
      %s667 = scalar_lea.vmem %s9, %s666
      %p668 = scmp.lt.s32.totalorder %s29, 1
      %s669 = scalar_select %p668, %s29, 1
      %s670 = smul.addr %s669, 4
      %s671 = smul.addr %s670, 4
      %s672 = scalar_lea.vmem %s10, %s671
      %p673 = scmp.lt.s32.totalorder %s29, 1
      %s674 = scalar_select %p673, %s29, 1
      %s675 = smul.addr %s674, 4
      %s676 = smul.addr %s675, 4
      %s677 = scalar_lea.vmem %s11, %s676
      %p678 = scmp.lt.s32.totalorder %s29, 1
      %s679 = scalar_select %p678, %s29, 1
      %s680 = smul.addr %s679, 8
      %s681 = smul.addr %s680, 4
      %s682 = scalar_lea.vmem %s12, %s681
      %s683 = smul.u32 2, %s28
      %p684 = scmp.lt.s32.totalorder %s683, 3
      %s685 = scalar_select %p684, %s683, 3
      %s686 = smul.addr %s685, 8
      %s687 = scalar_lea.vmem %s13, %s686
      %s688 = smul.u32 2, %s28
      %p690 = scmp.eq.s32.totalorder %s29, 0
      // Predicated region
      $region73: #{conformer_forward.4} parent=71 // pred_check
        %p691 = pneg %p690
      $region74: #{conformer_forward.4} parent=71 // pred_check_branch
        %693 = sbr.rel (%p691) target = $region76
      $region75: #{conformer_forward.4} parent=71 // pred_region
        %v694 = vld [vmem:[%s623] sm:$0xff]
        %v695 = vld [vmem:[%s623 + $0x8] sm:$0xff]
        %vm696 = vcmask 261120
        %697 = vst.msk [vmem:[%s687] sm:$0xff] %vm696, %v694
        %698 = vst.msk [vmem:[%s687 + $0x8] sm:$0xff] %vm696, %v695
      $region76: #{conformer_forward.4} parent=71 // pred_fallthru
        _
      %v699 = vld [vmem:[%s687] sm:$0xff]
      %v700 = vld [vmem:[%s687 + $0x8] sm:$0xff]
      %v701 = vld [vmem:[%s634] sm:$0xff]
      %v702 = vld [vmem:[%s634 + $0x8] sm:$0xff]
      %v703 = vld [vmem:[%s634 + $0x10] sm:$0xf]
      %v704 = vld [vmem:[%s638] sm:$0x3]
      %vm705 = vcmask 261120
      %v706 = vsel %vm705, %v699, 0.0
      %707 = vadd.xlane.f32.xlu0 %v706
      %v708 = vpop.xlane.xlu0 %707
      %v709 = vsel %vm705, %v700, 0.0
      %710 = vadd.xlane.f32.xlu0 %v709
      %v711 = vpop.xlane.xlu0 %710
      %v712 = vrcp.pop 32.0
      %v713 = vmul.f32 %v708, %v712
      %v714 = vmul.f32 %v711, %v712
      %v715 = vsub.f32 %v699, %v713
      %v716 = vsub.f32 %v700, %v714
      %v717 = vmul.f32 %v715, %v715
      %v718 = vmul.f32 %v716, %v716
      %v719 = vsel %vm705, %v717, 0.0
      %720 = vadd.xlane.f32.xlu0 %v719
      %v721 = vpop.xlane.xlu0 %720
      %v722 = vsel %vm705, %v718, 0.0
      %723 = vadd.xlane.f32.xlu0 %v722
      %v724 = vpop.xlane.xlu0 %723
      %v725 = vmul.f32 %v721, %v712
      %v726 = vmul.f32 %v724, %v712
      %v727 = vadd.f32 %v725, 1e-05
      %v728 = vadd.f32 %v726, 1e-05
      %v729 = vrsqrt.pop %v727
      %v730 = vrsqrt.pop %v728
      %v731 = vmul.f32 %v715, %v729
      %v732 = vmul.f32 %v716, %v730
      %v733 = vlaneseq
      %v734 = vshrl.u32 %v733, 7
      %v735 = vsub.s32 0, %v734
      %v736 = vrot.slane %v701, %v735
      %v737 = vmul.f32 %v731, %v736
      %v738 = vmul.f32 %v732, %v736
      %v739 = vlaneseq
      %v740 = vshrl.u32 %v739, 7
      %v741 = vsub.s32 1, %v740
      %v742 = vrot.slane %v701, %v741
      %v743 = vadd.f32 %v737, %v742
      %v744 = vadd.f32 %v738, %v742
      %v745 = vpack.c.bf16 %v744, %v743
      %v746 = vld [vmem:[%s643] sm:$0xf]
      %v747 = vld [vmem:[%s643 + $0x4] sm:$0xf]
      %v748 = vld [vmem:[%s643 + $0x8] sm:$0xf]
      %v749 = vld [vmem:[%s643 + $0xc] sm:$0xf]
      %v750 = vlaneseq
      %v751 = vshrl.u32 %v750, 7
      %v752 = vsub.s32 0, %v751
      %v753 = vrot.slane %v704, %v752
      %v758 = vunpack.c.l.b16 %v746
      %v759 = vunpack.c.l.b16 %v747
      %v760 = vunpack.c.l.b16 %v748
      %v761 = vunpack.c.l.b16 %v749
      %v762 = vpack.c.b16 %v759, %v758
      %v763 = vpack.c.b16 %v761, %v760
      %v767 = vsel %vm705, %v745, 0
      %769 = vmatprep.subr.bf16.mxu0 0
      %770 = vmatpush1.bf16.msra.mxu0 %v762
      %771 = vmatprep.subr.bf16.mxu0 0
      %772 = vmatpush1.bf16.msra.mxu0 %v763
      %773 = vmatprep.subr.bf16.mxu0 0
      %774 = vmatpush1.bf16.msra.mxu0 0
      %775 = vmatprep.subr.bf16.mxu0 0
      %776 = vmatpush1.bf16.msra.mxu0 0
      %777 = vmatprep.subr.bf16.mxu0 0
      %778 = vmatpush1.bf16.msra.mxu0 0
      %779 = vmatprep.subr.bf16.mxu0 0
      %780 = vmatpush1.bf16.msra.mxu0 0
      %781 = vmatprep.subr.bf16.mxu0 0
      %782 = vmatpush1.bf16.msra.mxu0 0
      %783 = vmatprep.subr.bf16.mxu0 0
      %784 = vmatpush1.bf16.msra.mxu0 0
      %785 = vmatprep.subr.bf16.mxu0 0
      %786 = vmatpush1.bf16.msra.mxu0 0
      %787 = vmatprep.subr.bf16.mxu0 0
      %788 = vmatpush1.bf16.msra.mxu0 0
      %789 = vmatprep.subr.bf16.mxu0 0
      %790 = vmatpush1.bf16.msra.mxu0 0
      %791 = vmatprep.subr.bf16.mxu0 0
      %792 = vmatpush1.bf16.msra.mxu0 0
      %793 = vmatprep.subr.bf16.mxu0 0
      %794 = vmatpush1.bf16.msra.mxu0 0
      %795 = vmatprep.subr.bf16.mxu0 0
      %796 = vmatpush1.bf16.msra.mxu0 0
      %797 = vmatprep.subr.bf16.mxu0 0
      %798 = vmatpush1.bf16.msra.mxu0 0
      %799 = vmatprep.subr.bf16.mxu0 0
      %800 = vmatpush1.bf16.msra.mxu0 0
      %801 = vmatprep.mubr.bf16.mxu0 0
      %802 = vmatmul.mubr.bf16.gmra.mrb[0].mxu0 %v767
      %v803 = vpop.f32.mrb[0].mxu0
      %v804 = vadd.f32 %v753, %v803
      %v805 = vpop.f32.mrb[0].mxu0
      %v806 = vpop.f32.mrb[0].mxu0
      %v807 = vadd.f32 %v753, %v806
      %v808 = vpop.f32.mrb[0].mxu0
      %809 = vdwg.mxu0
      %v810 = vsub.f32 0.0, %v804
      %v811 = vsub.f32 0.0, %v807
      %v812 = vmul.f32 %v810, 1.442695
      %v813 = vpow.pop %v812
      %v814 = vmul.f32 %v811, 1.442695
      %v815 = vpow.pop %v814
      %v816 = vadd.f32 %v813, 1.0
      %v817 = vadd.f32 %v815, 1.0
      %v818 = vrcp.pop %v816
      %v819 = vrcp.pop %v817
      %v820 = vmul.f32 %v804, %v818
      %v821 = vmul.f32 %v807, %v819
      %v822 = vpack.c.bf16 %v821, %v820
      %v823 = vld [vmem:[%s648] sm:$0xf]
      %v824 = vld [vmem:[%s648 + $0x4] sm:$0xf]
      %v825 = vld [vmem:[%s648 + $0x8] sm:$0xf]
      %v826 = vld [vmem:[%s648 + $0xc] sm:$0xf]
      %v827 = vld [vmem:[%s648 + $0x10] sm:$0xf]
      %v828 = vld [vmem:[%s648 + $0x14] sm:$0xf]
      %v829 = vld [vmem:[%s648 + $0x18] sm:$0xf]
      %v830 = vld [vmem:[%s648 + $0x1c] sm:$0xf]
      %v831 = vlaneseq
      %v832 = vshrl.u32 %v831, 7
      %v833 = vsub.s32 2, %v832
      %v834 = vrot.slane %v701, %v833
      %v843 = vunpack.c.l.b16 %v823
      %v844 = vunpack.c.l.b16 %v824
      %v845 = vunpack.c.l.b16 %v825
      %v846 = vunpack.c.l.b16 %v826
      %v847 = vunpack.c.l.b16 %v827
      %v848 = vunpack.c.l.b16 %v828
      %v849 = vunpack.c.l.b16 %v829
      %v850 = vunpack.c.l.b16 %v830
      %v851 = vpack.c.b16 %v844, %v843
      %v852 = vpack.c.b16 %v846, %v845
      %v853 = vpack.c.b16 %v848, %v847
      %v854 = vpack.c.b16 %v850, %v849
      %vm859 = vcmask 523264
      %v861 = vsel %vm859, %v822, 0
      %863 = vmatprep.subr.bf16.mxu0 0
      %864 = vmatpush1.bf16.msra.mxu0 %v851
      %865 = vmatprep.subr.bf16.mxu0 0
      %866 = vmatpush1.bf16.msra.mxu0 %v852
      %867 = vmatprep.subr.bf16.mxu0 0
      %868 = vmatpush1.bf16.msra.mxu0 %v853
      %869 = vmatprep.subr.bf16.mxu0 0
      %870 = vmatpush1.bf16.msra.mxu0 %v854
      %871 = vmatprep.subr.bf16.mxu0 0
      %872 = vmatpush1.bf16.msra.mxu0 0
      %873 = vmatprep.subr.bf16.mxu0 0
      %874 = vmatpush1.bf16.msra.mxu0 0
      %875 = vmatprep.subr.bf16.mxu0 0
      %876 = vmatpush1.bf16.msra.mxu0 0
      %877 = vmatprep.subr.bf16.mxu0 0
      %878 = vmatpush1.bf16.msra.mxu0 0
      %879 = vmatprep.subr.bf16.mxu0 0
      %880 = vmatpush1.bf16.msra.mxu0 0
      %881 = vmatprep.subr.bf16.mxu0 0
      %882 = vmatpush1.bf16.msra.mxu0 0
      %883 = vmatprep.subr.bf16.mxu0 0
      %884 = vmatpush1.bf16.msra.mxu0 0
      %885 = vmatprep.subr.bf16.mxu0 0
      %886 = vmatpush1.bf16.msra.mxu0 0
      %887 = vmatprep.subr.bf16.mxu0 0
      %888 = vmatpush1.bf16.msra.mxu0 0
      %889 = vmatprep.subr.bf16.mxu0 0
      %890 = vmatpush1.bf16.msra.mxu0 0
      %891 = vmatprep.subr.bf16.mxu0 0
      %892 = vmatpush1.bf16.msra.mxu0 0
      %893 = vmatprep.subr.bf16.mxu0 0
      %894 = vmatpush1.bf16.msra.mxu0 0
      %895 = vmatprep.mubr.bf16.mxu0 0
      %896 = vmatmul.mubr.bf16.gmra.mrb[0].mxu0 %v861
      %v897 = vpop.f32.mrb[0].mxu0
      %v898 = vadd.f32 %v834, %v897
      %v899 = vpop.f32.mrb[0].mxu0
      %v900 = vpop.f32.mrb[0].mxu0
      %v901 = vadd.f32 %v834, %v900
      %v902 = vpop.f32.mrb[0].mxu0
      %903 = vdwg.mxu0
      %v904 = vmul.f32 %v898, 0.5
      %v905 = vmul.f32 %v901, 0.5
      %v906 = vadd.f32 %v904, %v699
      %v907 = vadd.f32 %v905, %v700
      %v908 = vsel %vm705, %v906, 0.0
      %909 = vadd.xlane.f32.xlu0 %v908
      %v910 = vpop.xlane.xlu0 %909
      %v911 = vsel %vm705, %v907, 0.0
      %912 = vadd.xlane.f32.xlu0 %v911
      %v913 = vpop.xlane.xlu0 %912
      %v914 = vmul.f32 %v910, %v712
      %v915 = vmul.f32 %v913, %v712
      %v916 = vsub.f32 %v906, %v914
      %v917 = vsub.f32 %v907, %v915
      %v918 = vmul.f32 %v916, %v916
      %v919 = vmul.f32 %v917, %v917
      %v920 = vsel %vm705, %v918, 0.0
      %921 = vadd.xlane.f32.xlu0 %v920
      %v922 = vpop.xlane.xlu0 %921
      %v923 = vsel %vm705, %v919, 0.0
      %924 = vadd.xlane.f32.xlu0 %v923
      %v925 = vpop.xlane.xlu0 %924
      %v926 = vmul.f32 %v922, %v712
      %v927 = vmul.f32 %v925, %v712
      %v928 = vadd.f32 %v926, 1e-05
      %v929 = vadd.f32 %v927, 1e-05
      %v930 = vrsqrt.pop %v928
      %v931 = vrsqrt.pop %v929
      %v932 = vmul.f32 %v916, %v930
      %v933 = vmul.f32 %v917, %v931
      %v934 = vlaneseq
      %v935 = vshrl.u32 %v934, 7
      %v936 = vsub.s32 3, %v935
      %v937 = vrot.slane %v701, %v936
      %v938 = vmul.f32 %v932, %v937
      %v939 = vmul.f32 %v933, %v937
      %v940 = vlaneseq
      %v941 = vshrl.u32 %v940, 7
      %v942 = vsub.s32 4, %v941
      %v943 = vrot.slane %v701, %v942
      %v944 = vadd.f32 %v938, %v943
      %v945 = vadd.f32 %v939, %v943
      %v946 = vpack.c.bf16 %v945, %v944
      %v947 = vld [vmem:[%s653] sm:$0xf]
      %v948 = vld [vmem:[%s653 + $0x4] sm:$0xf]
      %v949 = vld [vmem:[%s653 + $0x8] sm:$0xf]
      %v950 = vld [vmem:[%s653 + $0xc] sm:$0xf]
      %v955 = vunpack.c.l.b16 %v947
      %v956 = vunpack.c.l.b16 %v948
      %v957 = vunpack.c.l.b16 %v949
      %v958 = vunpack.c.l.b16 %v950
      %v959 = vpack.c.b16 %v956, %v955
      %v960 = vpack.c.b16 %v958, %v957
      %v964 = vsel %vm705, %v946, 0
      %966 = vmatprep.subr.bf16.mxu0 0
      %967 = vmatpush1.bf16.msra.mxu0 %v959
      %968 = vmatprep.subr.bf16.mxu0 0
      %969 = vmatpush1.bf16.msra.mxu0 %v960
      %970 = vmatprep.subr.bf16.mxu0 0
      %971 = vmatpush1.bf16.msra.mxu0 0
      %972 = vmatprep.subr.bf16.mxu0 0
      %973 = vmatpush1.bf16.msra.mxu0 0
      %974 = vmatprep.subr.bf16.mxu0 0
      %975 = vmatpush1.bf16.msra.mxu0 0
      %976 = vmatprep.subr.bf16.mxu0 0
      %977 = vmatpush1.bf16.msra.mxu0 0
      %978 = vmatprep.subr.bf16.mxu0 0
      %979 = vmatpush1.bf16.msra.mxu0 0
      %980 = vmatprep.subr.bf16.mxu0 0
      %981 = vmatpush1.bf16.msra.mxu0 0
      %982 = vmatprep.subr.bf16.mxu0 0
      %983 = vmatpush1.bf16.msra.mxu0 0
      %984 = vmatprep.subr.bf16.mxu0 0
      %985 = vmatpush1.bf16.msra.mxu0 0
      %986 = vmatprep.subr.bf16.mxu0 0
      %987 = vmatpush1.bf16.msra.mxu0 0
      %988 = vmatprep.subr.bf16.mxu0 0
      %989 = vmatpush1.bf16.msra.mxu0 0
      %990 = vmatprep.subr.bf16.mxu0 0
      %991 = vmatpush1.bf16.msra.mxu0 0
      %992 = vmatprep.subr.bf16.mxu0 0
      %993 = vmatpush1.bf16.msra.mxu0 0
      %994 = vmatprep.subr.bf16.mxu0 0
      %995 = vmatpush1.bf16.msra.mxu0 0
      %996 = vmatprep.subr.bf16.mxu0 0
      %997 = vmatpush1.bf16.msra.mxu0 0
      %998 = vmatprep.mubr.bf16.mxu0 0
      %999 = vmatmul.mubr.bf16.gmra.mrb[0].mxu0 %v964
      %v1000 = vpop.f32.mrb[0].mxu0
      %v1001 = vadd.f32 0.0, %v1000
      %v1002 = vpop.f32.mrb[0].mxu0
      %v1003 = vpop.f32.mrb[0].mxu0
      %v1004 = vadd.f32 0.0, %v1003
      %v1005 = vpop.f32.mrb[0].mxu0
      %1006 = vdwg.mxu0
      %v1007 = vlaneseq
      %v1008 = vshrl.u32 %v1007, 7
      %v1009 = vsub.s32 5, %v1008
      %v1010 = vrot.slane %v701, %v1009
      %v1011 = vadd.f32 %v1001, %v1010
      %v1012 = vadd.f32 %v1004, %v1010
      %v1013 = vlaneseq
      %v1014 = vshrl.u32 %v1013, 7
      %v1015 = vsub.s32 6, %v1014
      %v1016 = vrot.slane %v701, %v1015
      %1018 = vrot.lane.b32.xlu0 %v1016, 32
      %v1019 = vpop.permute.xlu0 %1018
      %v1021 = vadd.f32 %v1001, %v1019
      %v1022 = vadd.f32 %v1004, %v1019
      %v1023 = vsub.f32 0.0, %v1021
      %v1024 = vsub.f32 0.0, %v1022
      %v1025 = vmul.f32 %v1023, 1.442695
      %v1026 = vpow.pop %v1025
      %v1027 = vmul.f32 %v1024, 1.442695
      %v1028 = vpow.pop %v1027
      %v1029 = vadd.f32 %v1026, 1.0
      %v1030 = vadd.f32 %v1028, 1.0
      %v1031 = vrcp.pop %v1029
      %v1032 = vrcp.pop %v1030
      %1035 = vrot.lane.b32.xlu0 %v1031, 96
      %v1036 = vpop.permute.xlu0 %1035
      %1037 = vrot.lane.b32.xlu0 %v1032, 96
      %v1038 = vpop.permute.xlu0 %1037
      %v1041 = vmul.f32 %v1011, %v1036
      %v1042 = vmul.f32 %v1012, %v1038
      %v1043 = vld [vmem:[%s657] sm:$0x7f]
      %v1046 = vrot.slane %v1041, 5
      %v1047 = vrot.slane %v1042, 5
      %vm1050 = vcmask 1042432
      %v1051 = vsel %vm1050, 0.0, %v1046
      %v1052 = vsel %vm1050, 0.0, %v1047
      %v1053 = vsel %vm1050, %v1046, 0.0
      %v1054 = vsel %vm1050, %v1047, 0.0
      %v1055 = vlaneseq
      %v1056 = vshrl.u32 %v1055, 7
      %v1057 = vsub.s32 7, %v1056
      %v1058 = vrot.slane %v701, %v1057
      %v1059 = vadd.f32 %v1058, 0.0
      %v1060 = vlaneseq
      %v1061 = vshrl.u32 %v1060, 7
      %v1062 = vsub.s32 0, %v1061
      %v1063 = vrot.slane %v1043, %v1062
      %v1064 = vmul.f32 %v1051, %v1063
      %v1065 = vmul.f32 %v1052, %v1063
      %v1066 = vadd.f32 %v1059, %v1064
      %v1067 = vadd.f32 %v1059, %v1065
      %v1068 = vlaneseq
      %v1069 = vshrl.u32 %v1068, 7
      %v1070 = vsub.s32 1, %v1069
      %v1071 = vrot.slane %v1043, %v1070
      %v1072 = vmul.f32 %v1051, %v1071
      %v1073 = vmul.f32 %v1053, %v1071
      %v1074 = vmul.f32 %v1052, %v1071
      %v1075 = vmul.f32 %v1054, %v1071
      %vm1080 = vcmask 1046528
      %v1081 = vrot.slane %v1072, 1
      %v1082 = vrot.slane %v1073, 1
      %v1083 = vsel %vm1080, %v1081, %v1082
      %v1084 = vrot.slane %v1074, 1
      %v1085 = vrot.slane %v1075, 1
      %v1086 = vsel %vm1080, %v1084, %v1085
      %v1089 = vadd.f32 %v1066, %v1083
      %v1090 = vadd.f32 %v1067, %v1086
      %v1091 = vlaneseq
      %v1092 = vshrl.u32 %v1091, 7
      %v1093 = vsub.s32 2, %v1092
      %v1094 = vrot.slane %v1043, %v1093
      %v1095 = vmul.f32 %v1051, %v1094
      %v1096 = vmul.f32 %v1053, %v1094
      %v1097 = vmul.f32 %v1052, %v1094
      %v1098 = vmul.f32 %v1054, %v1094
      %vm1103 = vcmask 1045504
      %v1104 = vrot.slane %v1095, 2
      %v1105 = vrot.slane %v1096, 2
      %v1106 = vsel %vm1103, %v1104, %v1105
      %v1107 = vrot.slane %v1097, 2
      %v1108 = vrot.slane %v1098, 2
      %v1109 = vsel %vm1103, %v1107, %v1108
      %v1112 = vadd.f32 %v1089, %v1106
      %v1113 = vadd.f32 %v1090, %v1109
      %v1114 = vlaneseq
      %v1115 = vshrl.u32 %v1114, 7
      %v1116 = vsub.s32 3, %v1115
      %v1117 = vrot.slane %v1043, %v1116
      %v1118 = vmul.f32 %v1051, %v1117
      %v1119 = vmul.f32 %v1053, %v1117
      %v1120 = vmul.f32 %v1052, %v1117
      %v1121 = vmul.f32 %v1054, %v1117
      %vm1126 = vcmask 1044480
      %v1127 = vrot.slane %v1118, 3
      %v1128 = vrot.slane %v1119, 3
      %v1129 = vsel %vm1126, %v1127, %v1128
      %v1130 = vrot.slane %v1120, 3
      %v1131 = vrot.slane %v1121, 3
      %v1132 = vsel %vm1126, %v1130, %v1131
      %v1135 = vadd.f32 %v1112, %v1129
      %v1136 = vadd.f32 %v1113, %v1132
      %v1137 = vlaneseq
      %v1138 = vshrl.u32 %v1137, 7
      %v1139 = vsub.s32 4, %v1138
      %v1140 = vrot.slane %v1043, %v1139
      %v1141 = vmul.f32 %v1051, %v1140
      %v1142 = vmul.f32 %v1053, %v1140
      %v1143 = vmul.f32 %v1052, %v1140
      %v1144 = vmul.f32 %v1054, %v1140
      %vm1149 = vcmask 1043456
      %v1150 = vrot.slane %v1141, 4
      %v1151 = vrot.slane %v1142, 4
      %v1152 = vsel %vm1149, %v1150, %v1151
      %v1153 = vrot.slane %v1143, 4
      %v1154 = vrot.slane %v1144, 4
      %v1155 = vsel %vm1149, %v1153, %v1154
      %v1158 = vadd.f32 %v1135, %v1152
      %v1159 = vadd.f32 %v1136, %v1155
      %v1160 = vlaneseq
      %v1161 = vshrl.u32 %v1160, 7
      %v1162 = vsub.s32 5, %v1161
      %v1163 = vrot.slane %v1043, %v1162
      %v1164 = vmul.f32 %v1051, %v1163
      %v1165 = vmul.f32 %v1053, %v1163
      %v1166 = vmul.f32 %v1052, %v1163
      %v1167 = vmul.f32 %v1054, %v1163
      %v1172 = vrot.slane %v1164, 5
      %v1173 = vrot.slane %v1165, 5
      %v1174 = vsel %vm1050, %v1172, %v1173
      %v1175 = vrot.slane %v1166, 5
      %v1176 = vrot.slane %v1167, 5
      %v1177 = vsel %vm1050, %v1175, %v1176
      %v1180 = vadd.f32 %v1158, %v1174
      %v1181 = vadd.f32 %v1159, %v1177
      %v1182 = vlaneseq
      %v1183 = vshrl.u32 %v1182, 7
      %v1184 = vsub.s32 6, %v1183
      %v1185 = vrot.slane %v1043, %v1184
      %v1186 = vmul.f32 %v1051, %v1185
      %v1187 = vmul.f32 %v1053, %v1185
      %v1188 = vmul.f32 %v1052, %v1185
      %v1189 = vmul.f32 %v1054, %v1185
      %vm1194 = vcmask 1041408
      %v1195 = vrot.slane %v1186, 6
      %v1196 = vrot.slane %v1187, 6
      %v1197 = vsel %vm1194, %v1195, %v1196
      %v1198 = vrot.slane %v1188, 6
      %v1199 = vrot.slane %v1189, 6
      %v1200 = vsel %vm1194, %v1198, %v1199
      %v1203 = vadd.f32 %v1180, %v1197
      %v1204 = vadd.f32 %v1181, %v1200
      %v1205 = vsub.f32 0.0, %v1203
      %v1206 = vsub.f32 0.0, %v1204
      %v1207 = vmul.f32 %v1205, 1.442695
      %v1208 = vpow.pop %v1207
      %v1209 = vmul.f32 %v1206, 1.442695
      %v1210 = vpow.pop %v1209
      %v1211 = vadd.f32 %v1208, 1.0
      %v1212 = vadd.f32 %v1210, 1.0
      %v1213 = vrcp.pop %v1211
      %v1214 = vrcp.pop %v1212
      %v1215 = vmul.f32 %v1203, %v1213
      %v1216 = vmul.f32 %v1204, %v1214
      %v1217 = vpack.c.bf16 %v1216, %v1215
      %v1218 = vld [vmem:[%s662] sm:$0xf]
      %v1219 = vld [vmem:[%s662 + $0x4] sm:$0xf]
      %v1220 = vld [vmem:[%s662 + $0x8] sm:$0xf]
      %v1221 = vld [vmem:[%s662 + $0xc] sm:$0xf]
      %v1222 = vlaneseq
      %v1223 = vshrl.u32 %v1222, 7
      %v1224 = vsub.s32 0, %v1223
      %v1225 = vrot.slane %v702, %v1224
      %v1230 = vunpack.c.l.b16 %v1218
      %v1231 = vunpack.c.l.b16 %v1219
      %v1232 = vunpack.c.l.b16 %v1220
      %v1233 = vunpack.c.l.b16 %v1221
      %v1234 = vpack.c.b16 %v1231, %v1230
      %v1235 = vpack.c.b16 %v1233, %v1232
      %v1239 = vsel %vm705, %v1217, 0
      %1241 = vmatprep.subr.bf16.mxu0 0
      %1242 = vmatpush1.bf16.msra.mxu0 %v1234
      %1243 = vmatprep.subr.bf16.mxu0 0
      %1244 = vmatpush1.bf16.msra.mxu0 %v1235
      %1245 = vmatprep.subr.bf16.mxu0 0
      %1246 = vmatpush1.bf16.msra.mxu0 0
      %1247 = vmatprep.subr.bf16.mxu0 0
      %1248 = vmatpush1.bf16.msra.mxu0 0
      %1249 = vmatprep.subr.bf16.mxu0 0
      %1250 = vmatpush1.bf16.msra.mxu0 0
      %1251 = vmatprep.subr.bf16.mxu0 0
      %1252 = vmatpush1.bf16.msra.mxu0 0
      %1253 = vmatprep.subr.bf16.mxu0 0
      %1254 = vmatpush1.bf16.msra.mxu0 0
      %1255 = vmatprep.subr.bf16.mxu0 0
      %1256 = vmatpush1.bf16.msra.mxu0 0
      %1257 = vmatprep.subr.bf16.mxu0 0
      %1258 = vmatpush1.bf16.msra.mxu0 0
      %1259 = vmatprep.subr.bf16.mxu0 0
      %1260 = vmatpush1.bf16.msra.mxu0 0
      %1261 = vmatprep.subr.bf16.mxu0 0
      %1262 = vmatpush1.bf16.msra.mxu0 0
      %1263 = vmatprep.subr.bf16.mxu0 0
      %1264 = vmatpush1.bf16.msra.mxu0 0
      %1265 = vmatprep.subr.bf16.mxu0 0
      %1266 = vmatpush1.bf16.msra.mxu0 0
      %1267 = vmatprep.subr.bf16.mxu0 0
      %1268 = vmatpush1.bf16.msra.mxu0 0
      %1269 = vmatprep.subr.bf16.mxu0 0
      %1270 = vmatpush1.bf16.msra.mxu0 0
      %1271 = vmatprep.subr.bf16.mxu0 0
      %1272 = vmatpush1.bf16.msra.mxu0 0
      %1273 = vmatprep.mubr.bf16.mxu0 0
      %1274 = vmatmul.mubr.bf16.gmra.mrb[0].mxu0 %v1239
      %v1275 = vpop.f32.mrb[0].mxu0
      %v1276 = vadd.f32 %v1225, %v1275
      %v1277 = vpop.f32.mrb[0].mxu0
      %v1278 = vpop.f32.mrb[0].mxu0
      %v1279 = vadd.f32 %v1225, %v1278
      %v1280 = vpop.f32.mrb[0].mxu0
      %1281 = vdwg.mxu0
      %v1282 = vadd.f32 %v1276, %v906
      %v1283 = vadd.f32 %v1279, %v907
      %v1284 = vsel %vm705, %v1282, 0.0
      %1285 = vadd.xlane.f32.xlu0 %v1284
      %v1286 = vpop.xlane.xlu0 %1285
      %v1287 = vsel %vm705, %v1283, 0.0
      %1288 = vadd.xlane.f32.xlu0 %v1287
      %v1289 = vpop.xlane.xlu0 %1288
      %v1290 = vmul.f32 %v1286, %v712
      %v1291 = vmul.f32 %v1289, %v712
      %v1292 = vsub.f32 %v1282, %v1290
      %v1293 = vsub.f32 %v1283, %v1291
      %v1294 = vmul.f32 %v1292, %v1292
      %v1295 = vmul.f32 %v1293, %v1293
      %v1296 = vsel %vm705, %v1294, 0.0
      %1297 = vadd.xlane.f32.xlu0 %v1296
      %v1298 = vpop.xlane.xlu0 %1297
      %v1299 = vsel %vm705, %v1295, 0.0
      %1300 = vadd.xlane.f32.xlu0 %v1299
      %v1301 = vpop.xlane.xlu0 %1300
      %v1302 = vmul.f32 %v1298, %v712
      %v1303 = vmul.f32 %v1301, %v712
      %v1304 = vadd.f32 %v1302, 1e-05
      %v1305 = vadd.f32 %v1303, 1e-05
      %v1306 = vrsqrt.pop %v1304
      %v1307 = vrsqrt.pop %v1305
      %v1308 = vmul.f32 %v1292, %v1306
      %v1309 = vmul.f32 %v1293, %v1307
      %v1310 = vlaneseq
      %v1311 = vshrl.u32 %v1310, 7
      %v1312 = vsub.s32 1, %v1311
      %v1313 = vrot.slane %v702, %v1312
      %v1314 = vmul.f32 %v1308, %v1313
      %v1315 = vmul.f32 %v1309, %v1313
      %v1316 = vlaneseq
      %v1317 = vshrl.u32 %v1316, 7
      %v1318 = vsub.s32 2, %v1317
      %v1319 = vrot.slane %v702, %v1318
      %v1320 = vadd.f32 %v1314, %v1319
      %v1321 = vadd.f32 %v1315, %v1319
      %v1322 = vpack.c.bf16 %v1321, %v1320
      %v1323 = vld [vmem:[%s667] sm:$0xf]
      %v1324 = vld [vmem:[%s667 + $0x4] sm:$0xf]
      %v1325 = vld [vmem:[%s667 + $0x8] sm:$0xf]
      %v1326 = vld [vmem:[%s667 + $0xc] sm:$0xf]
      %v1331 = vunpack.c.l.b16 %v1323
      %v1332 = vunpack.c.l.b16 %v1324
      %v1333 = vunpack.c.l.b16 %v1325
      %v1334 = vunpack.c.l.b16 %v1326
      %v1335 = vpack.c.b16 %v1332, %v1331
      %v1336 = vpack.c.b16 %v1334, %v1333
      %v1340 = vsel %vm705, %v1322, 0
      %1342 = vmatprep.subr.bf16.mxu0 0
      %1343 = vmatpush1.bf16.msra.mxu0 %v1335
      %1344 = vmatprep.subr.bf16.mxu0 0
      %1345 = vmatpush1.bf16.msra.mxu0 %v1336
      %1346 = vmatprep.subr.bf16.mxu0 0
      %1347 = vmatpush1.bf16.msra.mxu0 0
      %1348 = vmatprep.subr.bf16.mxu0 0
      %1349 = vmatpush1.bf16.msra.mxu0 0
      %1350 = vmatprep.subr.bf16.mxu0 0
      %1351 = vmatpush1.bf16.msra.mxu0 0
      %1352 = vmatprep.subr.bf16.mxu0 0
      %1353 = vmatpush1.bf16.msra.mxu0 0
      %1354 = vmatprep.subr.bf16.mxu0 0
      %1355 = vmatpush1.bf16.msra.mxu0 0
      %1356 = vmatprep.subr.bf16.mxu0 0
      %1357 = vmatpush1.bf16.msra.mxu0 0
      %1358 = vmatprep.subr.bf16.mxu0 0
      %1359 = vmatpush1.bf16.msra.mxu0 0
      %1360 = vmatprep.subr.bf16.mxu0 0
      %1361 = vmatpush1.bf16.msra.mxu0 0
      %1362 = vmatprep.subr.bf16.mxu0 0
      %1363 = vmatpush1.bf16.msra.mxu0 0
      %1364 = vmatprep.subr.bf16.mxu0 0
      %1365 = vmatpush1.bf16.msra.mxu0 0
      %1366 = vmatprep.subr.bf16.mxu0 0
      %1367 = vmatpush1.bf16.msra.mxu0 0
      %1368 = vmatprep.subr.bf16.mxu0 0
      %1369 = vmatpush1.bf16.msra.mxu0 0
      %1370 = vmatprep.subr.bf16.mxu0 0
      %1371 = vmatpush1.bf16.msra.mxu0 0
      %1372 = vmatprep.subr.bf16.mxu0 0
      %1373 = vmatpush1.bf16.msra.mxu0 0
      %1374 = vmatprep.mubr.bf16.mxu0 0
      %1375 = vmatmul.mubr.bf16.gmra.mrb[0].mxu0 %v1340
      %v1376 = vpop.f32.mrb[0].mxu0
      %v1377 = vadd.f32 0.0, %v1376
      %v1378 = vpop.f32.mrb[0].mxu0
      %v1379 = vpop.f32.mrb[0].mxu0
      %v1380 = vadd.f32 0.0, %v1379
      %v1381 = vpop.f32.mrb[0].mxu0
      %1382 = vdwg.mxu0
      %v1383 = vlaneseq
      %v1384 = vshrl.u32 %v1383, 7
      %v1385 = vsub.s32 3, %v1384
      %v1386 = vrot.slane %v702, %v1385
      %v1387 = vadd.f32 %v1377, %v1386
      %v1388 = vadd.f32 %v1380, %v1386
      %v1389 = vlaneseq
      %v1390 = vshrl.u32 %v1389, 7
      %v1391 = vsub.s32 4, %v1390
      %v1392 = vrot.slane %v702, %v1391
      %1394 = vrot.lane.b32.xlu0 %v1392, 32
      %v1395 = vpop.permute.xlu0 %1394
      %v1397 = vadd.f32 %v1377, %v1395
      %v1398 = vadd.f32 %v1380, %v1395
      %v1399 = vlaneseq
      %v1400 = vshrl.u32 %v1399, 7
      %v1401 = vsub.s32 5, %v1400
      %v1402 = vrot.slane %v702, %v1401
      %1404 = vrot.lane.b32.xlu0 %v1402, 64
      %v1405 = vpop.permute.xlu0 %1404
      %v1407 = vadd.f32 %v1377, %v1405
      %v1408 = vadd.f32 %v1380, %v1405
      %v1409 = vld [vmem:[%s628] sm:$0x1]
      %v1410 = vld [vmem:[%s628 + $0x1] sm:$0x1]
      %v1411 = vpack.c.bf16 %v1387, %v1387
      %v1412 = vpack.c.bf16 %v1388, %v1388
      %v1413 = vpack.c.bf16 %v1397, %v1397
      %v1414 = vpack.c.bf16 %v1398, %v1398
      %v1415 = vpack.c.bf16 %v1407, %v1407
      %v1416 = vpack.c.bf16 %v1408, %v1408
      %v1419 = vlaneseq
      %v1420 = vshrl.u32 %v1419, 7
      %v1421 = vsub.s32 0, %v1420
      %v1422 = vrot.slane %v1409, %v1421
      %v1423 = vlaneseq
      %v1424 = vshrl.u32 %v1423, 7
      %v1425 = vsub.s32 0, %v1424
      %v1426 = vrot.slane %v1410, %v1425
      %1430 = vrot.lane.b32.xlu0 %v1413, 96
      %v1431 = vpop.permute.xlu0 %1430
      %vm1432 = vcmask 64512
      %v1434 = vsel %vm1432, %v1411, 0
      %v1437 = vsel %vm1432, %v1431, 0
      %1439 = vmatprep.subr.bf16.mxu0 0
      %1440 = vmatpush1.bf16.xpose.msra.mxu0 %v1437
      %1441 = vmatprep.subr.bf16.mxu0 0
      %1442 = vmatpush1.bf16.xpose.msra.mxu0 0
      %1443 = vmatprep.subr.bf16.mxu0 0
      %1444 = vmatpush1.bf16.xpose.msra.mxu0 0
      %1445 = vmatprep.subr.bf16.mxu0 0
      %1446 = vmatpush1.bf16.xpose.msra.mxu0 0
      %1447 = vmatprep.subr.bf16.mxu0 0
      %1448 = vmatpush1.bf16.xpose.msra.mxu0 0
      %1449 = vmatprep.subr.bf16.mxu0 0
      %1450 = vmatpush1.bf16.xpose.msra.mxu0 0
      %1451 = vmatprep.subr.bf16.mxu0 0
      %1452 = vmatpush1.bf16.xpose.msra.mxu0 0
      %1453 = vmatprep.subr.bf16.mxu0 0
      %1454 = vmatpush1.bf16.xpose.msra.mxu0 0
      %1455 = vmatprep.subr.bf16.mxu0 0
      %1456 = vmatpush1.bf16.xpose.msra.mxu0 0
      %1457 = vmatprep.subr.bf16.mxu0 0
      %1458 = vmatpush1.bf16.xpose.msra.mxu0 0
      %1459 = vmatprep.subr.bf16.mxu0 0
      %1460 = vmatpush1.bf16.xpose.msra.mxu0 0
      %1461 = vmatprep.subr.bf16.mxu0 0
      %1462 = vmatpush1.bf16.xpose.msra.mxu0 0
      %1463 = vmatprep.subr.bf16.mxu0 0
      %1464 = vmatpush1.bf16.xpose.msra.mxu0 0
      %1465 = vmatprep.subr.bf16.mxu0 0
      %1466 = vmatpush1.bf16.xpose.msra.mxu0 0
      %1467 = vmatprep.subr.bf16.mxu0 0
      %1468 = vmatpush1.bf16.xpose.msra.mxu0 0
      %1469 = vmatprep.subr.bf16.mxu0 0
      %1470 = vmatpush1.bf16.xpose.msra.mxu0 0
      %1471 = vmatprep.mubr.bf16.mxu0 0
      %1472 = vmatmul.mubr.bf16.gmra.mrb[0].mxu0 %v1434
      %v1473 = vpop.f32.mrb[0].mxu0
      %v1474 = vadd.f32 %v1422, %v1473
      %v1475 = vpop.f32.mrb[0].mxu0
      %v1476 = vpop.f32.mrb[0].mxu0
      %v1477 = vpop.f32.mrb[0].mxu0
      %1478 = vdwg.mxu0
      %1480 = vrot.lane.b32.xlu0 %v1414, 96
      %v1481 = vpop.permute.xlu0 %1480
      %v1483 = vsel %vm1432, %v1412, 0
      %v1486 = vsel %vm1432, %v1481, 0
      %1488 = vmatprep.subr.bf16.mxu0 0
      %1489 = vmatpush1.bf16.xpose.msra.mxu0 %v1486
      %1490 = vmatprep.subr.bf16.mxu0 0
      %1491 = vmatpush1.bf16.xpose.msra.mxu0 0
      %1492 = vmatprep.subr.bf16.mxu0 0
      %1493 = vmatpush1.bf16.xpose.msra.mxu0 0
      %1494 = vmatprep.subr.bf16.mxu0 0
      %1495 = vmatpush1.bf16.xpose.msra.mxu0 0
      %1496 = vmatprep.subr.bf16.mxu0 0
      %1497 = vmatpush1.bf16.xpose.msra.mxu0 0
      %1498 = vmatprep.subr.bf16.mxu0 0
      %1499 = vmatpush1.bf16.xpose.msra.mxu0 0
      %1500 = vmatprep.subr.bf16.mxu0 0
      %1501 = vmatpush1.bf16.xpose.msra.mxu0 0
      %1502 = vmatprep.subr.bf16.mxu0 0
      %1503 = vmatpush1.bf16.xpose.msra.mxu0 0
      %1504 = vmatprep.subr.bf16.mxu0 0
      %1505 = vmatpush1.bf16.xpose.msra.mxu0 0
      %1506 = vmatprep.subr.bf16.mxu0 0
      %1507 = vmatpush1.bf16.xpose.msra.mxu0 0
      %1508 = vmatprep.subr.bf16.mxu0 0
      %1509 = vmatpush1.bf16.xpose.msra.mxu0 0
      %1510 = vmatprep.subr.bf16.mxu0 0
      %1511 = vmatpush1.bf16.xpose.msra.mxu0 0
      %1512 = vmatprep.subr.bf16.mxu0 0
      %1513 = vmatpush1.bf16.xpose.msra.mxu0 0
      %1514 = vmatprep.subr.bf16.mxu0 0
      %1515 = vmatpush1.bf16.xpose.msra.mxu0 0
      %1516 = vmatprep.subr.bf16.mxu0 0
      %1517 = vmatpush1.bf16.xpose.msra.mxu0 0
      %1518 = vmatprep.subr.bf16.mxu0 0
      %1519 = vmatpush1.bf16.xpose.msra.mxu0 0
      %1520 = vmatprep.mubr.bf16.mxu0 0
      %1521 = vmatmul.mubr.bf16.gmra.mrb[0].mxu0 %v1483
      %v1522 = vpop.f32.mrb[0].mxu0
      %v1523 = vadd.f32 %v1426, %v1522
      %v1524 = vpop.f32.mrb[0].mxu0
      %v1525 = vpop.f32.mrb[0].mxu0
      %v1526 = vpop.f32.mrb[0].mxu0
      %1527 = vdwg.mxu0
      %v1528 = vsel %vm1432, %v1474, -inf
      %1529 = vmax.xlane.f32.xlu0 %v1528
      %v1530 = vpop.xlane.xlu0 %1529
      %v1531 = vsel %vm1432, %v1523, -inf
      %1532 = vmax.xlane.f32.xlu0 %v1531
      %v1533 = vpop.xlane.xlu0 %1532
      %v1534 = vsub.f32 %v1474, %v1530
      %v1535 = vsub.f32 %v1523, %v1533
      %v1536 = vmul.f32 %v1534, 1.442695
      %v1537 = vpow.pop %v1536
      %v1538 = vmul.f32 %v1535, 1.442695
      %v1539 = vpow.pop %v1538
      %v1540 = vsel %vm1432, %v1537, 0.0
      %1541 = vadd.xlane.f32.xlu0 %v1540
      %v1542 = vpop.xlane.xlu0 %1541
      %v1543 = vsel %vm1432, %v1539, 0.0
      %1544 = vadd.xlane.f32.xlu0 %v1543
      %v1545 = vpop.xlane.xlu0 %1544
      %v1546 = vrcp.pop %v1542
      %v1547 = vrcp.pop %v1545
      %v1548 = vmul.f32 %v1537, %v1546
      %v1549 = vmul.f32 %v1539, %v1547
      %v1550 = vpack.c.bf16 %v1548, %v1548
      %v1551 = vpack.c.bf16 %v1549, %v1549
      %1553 = vrot.lane.b32.xlu0 %v1415, 64
      %v1554 = vpop.permute.xlu0 %1553
      %v1556 = vsel %vm1432, %v1550, 0
      %v1559 = vsel %vm1149, %v1554, 0
      %1561 = vmatprep.subr.bf16.mxu0 0
      %1562 = vmatpush1.bf16.msra.mxu0 %v1559
      %1563 = vmatprep.subr.bf16.mxu0 0
      %1564 = vmatpush1.bf16.msra.mxu0 0
      %1565 = vmatprep.subr.bf16.mxu0 0
      %1566 = vmatpush1.bf16.msra.mxu0 0
      %1567 = vmatprep.subr.bf16.mxu0 0
      %1568 = vmatpush1.bf16.msra.mxu0 0
      %1569 = vmatprep.subr.bf16.mxu0 0
      %1570 = vmatpush1.bf16.msra.mxu0 0
      %1571 = vmatprep.subr.bf16.mxu0 0
      %1572 = vmatpush1.bf16.msra.mxu0 0
      %1573 = vmatprep.subr.bf16.mxu0 0
      %1574 = vmatpush1.bf16.msra.mxu0 0
      %1575 = vmatprep.subr.bf16.mxu0 0
      %1576 = vmatpush1.bf16.msra.mxu0 0
      %1577 = vmatprep.subr.bf16.mxu0 0
      %1578 = vmatpush1.bf16.msra.mxu0 0
      %1579 = vmatprep.subr.bf16.mxu0 0
      %1580 = vmatpush1.bf16.msra.mxu0 0
      %1581 = vmatprep.subr.bf16.mxu0 0
      %1582 = vmatpush1.bf16.msra.mxu0 0
      %1583 = vmatprep.subr.bf16.mxu0 0
      %1584 = vmatpush1.bf16.msra.mxu0 0
      %1585 = vmatprep.subr.bf16.mxu0 0
      %1586 = vmatpush1.bf16.msra.mxu0 0
      %1587 = vmatprep.subr.bf16.mxu0 0
      %1588 = vmatpush1.bf16.msra.mxu0 0
      %1589 = vmatprep.subr.bf16.mxu0 0
      %1590 = vmatpush1.bf16.msra.mxu0 0
      %1591 = vmatprep.subr.bf16.mxu0 0
      %1592 = vmatpush1.bf16.msra.mxu0 0
      %1593 = vmatprep.mubr.bf16.mxu0 0
      %1594 = vmatmul.mubr.bf16.gmra.mrb[0].mxu0 %v1556
      %v1595 = vpop.f32.mrb[0].mxu0
      %v1596 = vadd.f32 0.0, %v1595
      %v1597 = vpop.f32.mrb[0].mxu0
      %v1598 = vpop.f32.mrb[0].mxu0
      %v1599 = vpop.f32.mrb[0].mxu0
      %1600 = vdwg.mxu0
      %1602 = vrot.lane.b32.xlu0 %v1416, 64
      %v1603 = vpop.permute.xlu0 %1602
      %v1605 = vsel %vm1432, %v1551, 0
      %v1608 = vsel %vm1149, %v1603, 0
      %1610 = vmatprep.subr.bf16.mxu0 0
      %1611 = vmatpush1.bf16.msra.mxu0 %v1608
      %1612 = vmatprep.subr.bf16.mxu0 0
      %1613 = vmatpush1.bf16.msra.mxu0 0
      %1614 = vmatprep.subr.bf16.mxu0 0
      %1615 = vmatpush1.bf16.msra.mxu0 0
      %1616 = vmatprep.subr.bf16.mxu0 0
      %1617 = vmatpush1.bf16.msra.mxu0 0
      %1618 = vmatprep.subr.bf16.mxu0 0
      %1619 = vmatpush1.bf16.msra.mxu0 0
      %1620 = vmatprep.subr.bf16.mxu0 0
      %1621 = vmatpush1.bf16.msra.mxu0 0
      %1622 = vmatprep.subr.bf16.mxu0 0
      %1623 = vmatpush1.bf16.msra.mxu0 0
      %1624 = vmatprep.subr.bf16.mxu0 0
      %1625 = vmatpush1.bf16.msra.mxu0 0
      %1626 = vmatprep.subr.bf16.mxu0 0
      %1627 = vmatpush1.bf16.msra.mxu0 0
      %1628 = vmatprep.subr.bf16.mxu0 0
      %1629 = vmatpush1.bf16.msra.mxu0 0
      %1630 = vmatprep.subr.bf16.mxu0 0
      %1631 = vmatpush1.bf16.msra.mxu0 0
      %1632 = vmatprep.subr.bf16.mxu0 0
      %1633 = vmatpush1.bf16.msra.mxu0 0
      %1634 = vmatprep.subr.bf16.mxu0 0
      %1635 = vmatpush1.bf16.msra.mxu0 0
      %1636 = vmatprep.subr.bf16.mxu0 0
      %1637 = vmatpush1.bf16.msra.mxu0 0
      %1638 = vmatprep.subr.bf16.mxu0 0
      %1639 = vmatpush1.bf16.msra.mxu0 0
      %1640 = vmatprep.subr.bf16.mxu0 0
      %1641 = vmatpush1.bf16.msra.mxu0 0
      %1642 = vmatprep.mubr.bf16.mxu0 0
      %1643 = vmatmul.mubr.bf16.gmra.mrb[0].mxu0 %v1605
      %v1644 = vpop.f32.mrb[0].mxu0
      %v1645 = vadd.f32 0.0, %v1644
      %v1646 = vpop.f32.mrb[0].mxu0
      %v1647 = vpop.f32.mrb[0].mxu0
      %v1648 = vpop.f32.mrb[0].mxu0
      %1649 = vdwg.mxu0
      %1651 = vrot.lane.b32.xlu0 %v1411, 120
      %v1652 = vpop.permute.xlu0 %1651
      %1653 = vrot.lane.b32.xlu0 %v1413, 88
      %v1654 = vpop.permute.xlu0 %1653
      %v1656 = vsel %vm1432, %v1652, 0
      %v1659 = vsel %vm1432, %v1654, 0
      %1661 = vmatprep.subr.bf16.mxu0 0
      %1662 = vmatpush1.bf16.xpose.msra.mxu0 %v1659
      %1663 = vmatprep.subr.bf16.mxu0 0
      %1664 = vmatpush1.bf16.xpose.msra.mxu0 0
      %1665 = vmatprep.subr.bf16.mxu0 0
      %1666 = vmatpush1.bf16.xpose.msra.mxu0 0
      %1667 = vmatprep.subr.bf16.mxu0 0
      %1668 = vmatpush1.bf16.xpose.msra.mxu0 0
      %1669 = vmatprep.subr.bf16.mxu0 0
      %1670 = vmatpush1.bf16.xpose.msra.mxu0 0
      %1671 = vmatprep.subr.bf16.mxu0 0
      %1672 = vmatpush1.bf16.xpose.msra.mxu0 0
      %1673 = vmatprep.subr.bf16.mxu0 0
      %1674 = vmatpush1.bf16.xpose.msra.mxu0 0
      %1675 = vmatprep.subr.bf16.mxu0 0
      %1676 = vmatpush1.bf16.xpose.msra.mxu0 0
      %1677 = vmatprep.subr.bf16.mxu0 0
      %1678 = vmatpush1.bf16.xpose.msra.mxu0 0
      %1679 = vmatprep.subr.bf16.mxu0 0
      %1680 = vmatpush1.bf16.xpose.msra.mxu0 0
      %1681 = vmatprep.subr.bf16.mxu0 0
      %1682 = vmatpush1.bf16.xpose.msra.mxu0 0
      %1683 = vmatprep.subr.bf16.mxu0 0
      %1684 = vmatpush1.bf16.xpose.msra.mxu0 0
      %1685 = vmatprep.subr.bf16.mxu0 0
      %1686 = vmatpush1.bf16.xpose.msra.mxu0 0
      %1687 = vmatprep.subr.bf16.mxu0 0
      %1688 = vmatpush1.bf16.xpose.msra.mxu0 0
      %1689 = vmatprep.subr.bf16.mxu0 0
      %1690 = vmatpush1.bf16.xpose.msra.mxu0 0
      %1691 = vmatprep.subr.bf16.mxu0 0
      %1692 = vmatpush1.bf16.xpose.msra.mxu0 0
      %1693 = vmatprep.mubr.bf16.mxu0 0
      %1694 = vmatmul.mubr.bf16.gmra.mrb[0].mxu0 %v1656
      %v1695 = vpop.f32.mrb[0].mxu0
      %v1696 = vadd.f32 %v1422, %v1695
      %v1697 = vpop.f32.mrb[0].mxu0
      %v1698 = vpop.f32.mrb[0].mxu0
      %v1699 = vpop.f32.mrb[0].mxu0
      %1700 = vdwg.mxu0
      %1702 = vrot.lane.b32.xlu0 %v1412, 120
      %v1703 = vpop.permute.xlu0 %1702
      %1704 = vrot.lane.b32.xlu0 %v1414, 88
      %v1705 = vpop.permute.xlu0 %1704
      %v1707 = vsel %vm1432, %v1703, 0
      %v1710 = vsel %vm1432, %v1705, 0
      %1712 = vmatprep.subr.bf16.mxu0 0
      %1713 = vmatpush1.bf16.xpose.msra.mxu0 %v1710
      %1714 = vmatprep.subr.bf16.mxu0 0
      %1715 = vmatpush1.bf16.xpose.msra.mxu0 0
      %1716 = vmatprep.subr.bf16.mxu0 0
      %1717 = vmatpush1.bf16.xpose.msra.mxu0 0
      %1718 = vmatprep.subr.bf16.mxu0 0
      %1719 = vmatpush1.bf16.xpose.msra.mxu0 0
      %1720 = vmatprep.subr.bf16.mxu0 0
      %1721 = vmatpush1.bf16.xpose.msra.mxu0 0
      %1722 = vmatprep.subr.bf16.mxu0 0
      %1723 = vmatpush1.bf16.xpose.msra.mxu0 0
      %1724 = vmatprep.subr.bf16.mxu0 0
      %1725 = vmatpush1.bf16.xpose.msra.mxu0 0
      %1726 = vmatprep.subr.bf16.mxu0 0
      %1727 = vmatpush1.bf16.xpose.msra.mxu0 0
      %1728 = vmatprep.subr.bf16.mxu0 0
      %1729 = vmatpush1.bf16.xpose.msra.mxu0 0
      %1730 = vmatprep.subr.bf16.mxu0 0
      %1731 = vmatpush1.bf16.xpose.msra.mxu0 0
      %1732 = vmatprep.subr.bf16.mxu0 0
      %1733 = vmatpush1.bf16.xpose.msra.mxu0 0
      %1734 = vmatprep.subr.bf16.mxu0 0
      %1735 = vmatpush1.bf16.xpose.msra.mxu0 0
      %1736 = vmatprep.subr.bf16.mxu0 0
      %1737 = vmatpush1.bf16.xpose.msra.mxu0 0
      %1738 = vmatprep.subr.bf16.mxu0 0
      %1739 = vmatpush1.bf16.xpose.msra.mxu0 0
      %1740 = vmatprep.subr.bf16.mxu0 0
      %1741 = vmatpush1.bf16.xpose.msra.mxu0 0
      %1742 = vmatprep.subr.bf16.mxu0 0
      %1743 = vmatpush1.bf16.xpose.msra.mxu0 0
      %1744 = vmatprep.mubr.bf16.mxu0 0
      %1745 = vmatmul.mubr.bf16.gmra.mrb[0].mxu0 %v1707
      %v1746 = vpop.f32.mrb[0].mxu0
      %v1747 = vadd.f32 %v1426, %v1746
      %v1748 = vpop.f32.mrb[0].mxu0
      %v1749 = vpop.f32.mrb[0].mxu0
      %v1750 = vpop.f32.mrb[0].mxu0
      %1751 = vdwg.mxu0
      %v1752 = vsel %vm1432, %v1696, -inf
      %1753 = vmax.xlane.f32.xlu0 %v1752
      %v1754 = vpop.xlane.xlu0 %1753
      %v1755 = vsel %vm1432, %v1747, -inf
      %1756 = vmax.xlane.f32.xlu0 %v1755
      %v1757 = vpop.xlane.xlu0 %1756
      %v1758 = vsub.f32 %v1696, %v1754
      %v1759 = vsub.f32 %v1747, %v1757
      %v1760 = vmul.f32 %v1758, 1.442695
      %v1761 = vpow.pop %v1760
      %v1762 = vmul.f32 %v1759, 1.442695
      %v1763 = vpow.pop %v1762
      %v1764 = vsel %vm1432, %v1761, 0.0
      %1765 = vadd.xlane.f32.xlu0 %v1764
      %v1766 = vpop.xlane.xlu0 %1765
      %v1767 = vsel %vm1432, %v1763, 0.0
      %1768 = vadd.xlane.f32.xlu0 %v1767
      %v1769 = vpop.xlane.xlu0 %1768
      %v1770 = vrcp.pop %v1766
      %v1771 = vrcp.pop %v1769
      %v1772 = vmul.f32 %v1761, %v1770
      %v1773 = vmul.f32 %v1763, %v1771
      %v1774 = vpack.c.bf16 %v1772, %v1772
      %v1775 = vpack.c.bf16 %v1773, %v1773
      %1776 = vrot.lane.b32.xlu0 %v1415, 56
      %v1777 = vpop.permute.xlu0 %1776
      %v1779 = vsel %vm1432, %v1774, 0
      %v1782 = vsel %vm1149, %v1777, 0
      %1784 = vmatprep.subr.bf16.mxu0 0
      %1785 = vmatpush1.bf16.msra.mxu0 %v1782
      %1786 = vmatprep.subr.bf16.mxu0 0
      %1787 = vmatpush1.bf16.msra.mxu0 0
      %1788 = vmatprep.subr.bf16.mxu0 0
      %1789 = vmatpush1.bf16.msra.mxu0 0
      %1790 = vmatprep.subr.bf16.mxu0 0
      %1791 = vmatpush1.bf16.msra.mxu0 0
      %1792 = vmatprep.subr.bf16.mxu0 0
      %1793 = vmatpush1.bf16.msra.mxu0 0
      %1794 = vmatprep.subr.bf16.mxu0 0
      %1795 = vmatpush1.bf16.msra.mxu0 0
      %1796 = vmatprep.subr.bf16.mxu0 0
      %1797 = vmatpush1.bf16.msra.mxu0 0
      %1798 = vmatprep.subr.bf16.mxu0 0
      %1799 = vmatpush1.bf16.msra.mxu0 0
      %1800 = vmatprep.subr.bf16.mxu0 0
      %1801 = vmatpush1.bf16.msra.mxu0 0
      %1802 = vmatprep.subr.bf16.mxu0 0
      %1803 = vmatpush1.bf16.msra.mxu0 0
      %1804 = vmatprep.subr.bf16.mxu0 0
      %1805 = vmatpush1.bf16.msra.mxu0 0
      %1806 = vmatprep.subr.bf16.mxu0 0
      %1807 = vmatpush1.bf16.msra.mxu0 0
      %1808 = vmatprep.subr.bf16.mxu0 0
      %1809 = vmatpush1.bf16.msra.mxu0 0
      %1810 = vmatprep.subr.bf16.mxu0 0
      %1811 = vmatpush1.bf16.msra.mxu0 0
      %1812 = vmatprep.subr.bf16.mxu0 0
      %1813 = vmatpush1.bf16.msra.mxu0 0
      %1814 = vmatprep.subr.bf16.mxu0 0
      %1815 = vmatpush1.bf16.msra.mxu0 0
      %1816 = vmatprep.mubr.bf16.mxu0 0
      %1817 = vmatmul.mubr.bf16.gmra.mrb[0].mxu0 %v1779
      %v1818 = vpop.f32.mrb[0].mxu0
      %v1819 = vadd.f32 0.0, %v1818
      %v1820 = vpop.f32.mrb[0].mxu0
      %v1821 = vpop.f32.mrb[0].mxu0
      %v1822 = vpop.f32.mrb[0].mxu0
      %1823 = vdwg.mxu0
      %1824 = vrot.lane.b32.xlu0 %v1416, 56
      %v1825 = vpop.permute.xlu0 %1824
      %v1827 = vsel %vm1432, %v1775, 0
      %v1830 = vsel %vm1149, %v1825, 0
      %1832 = vmatprep.subr.bf16.mxu0 0
      %1833 = vmatpush1.bf16.msra.mxu0 %v1830
      %1834 = vmatprep.subr.bf16.mxu0 0
      %1835 = vmatpush1.bf16.msra.mxu0 0
      %1836 = vmatprep.subr.bf16.mxu0 0
      %1837 = vmatpush1.bf16.msra.mxu0 0
      %1838 = vmatprep.subr.bf16.mxu0 0
      %1839 = vmatpush1.bf16.msra.mxu0 0
      %1840 = vmatprep.subr.bf16.mxu0 0
      %1841 = vmatpush1.bf16.msra.mxu0 0
      %1842 = vmatprep.subr.bf16.mxu0 0
      %1843 = vmatpush1.bf16.msra.mxu0 0
      %1844 = vmatprep.subr.bf16.mxu0 0
      %1845 = vmatpush1.bf16.msra.mxu0 0
      %1846 = vmatprep.subr.bf16.mxu0 0
      %1847 = vmatpush1.bf16.msra.mxu0 0
      %1848 = vmatprep.subr.bf16.mxu0 0
      %1849 = vmatpush1.bf16.msra.mxu0 0
      %1850 = vmatprep.subr.bf16.mxu0 0
      %1851 = vmatpush1.bf16.msra.mxu0 0
      %1852 = vmatprep.subr.bf16.mxu0 0
      %1853 = vmatpush1.bf16.msra.mxu0 0
      %1854 = vmatprep.subr.bf16.mxu0 0
      %1855 = vmatpush1.bf16.msra.mxu0 0
      %1856 = vmatprep.subr.bf16.mxu0 0
      %1857 = vmatpush1.bf16.msra.mxu0 0
      %1858 = vmatprep.subr.bf16.mxu0 0
      %1859 = vmatpush1.bf16.msra.mxu0 0
      %1860 = vmatprep.subr.bf16.mxu0 0
      %1861 = vmatpush1.bf16.msra.mxu0 0
      %1862 = vmatprep.subr.bf16.mxu0 0
      %1863 = vmatpush1.bf16.msra.mxu0 0
      %1864 = vmatprep.mubr.bf16.mxu0 0
      %1865 = vmatmul.mubr.bf16.gmra.mrb[0].mxu0 %v1827
      %v1866 = vpop.f32.mrb[0].mxu0
      %v1867 = vadd.f32 0.0, %v1866
      %v1868 = vpop.f32.mrb[0].mxu0
      %v1869 = vpop.f32.mrb[0].mxu0
      %v1870 = vpop.f32.mrb[0].mxu0
      %1871 = vdwg.mxu0
      %1872 = vrot.lane.b32.xlu0 %v1411, 112
      %v1873 = vpop.permute.xlu0 %1872
      %1874 = vrot.lane.b32.xlu0 %v1413, 80
      %v1875 = vpop.permute.xlu0 %1874
      %v1877 = vsel %vm1432, %v1873, 0
      %v1880 = vsel %vm1432, %v1875, 0
      %1882 = vmatprep.subr.bf16.mxu0 0
      %1883 = vmatpush1.bf16.xpose.msra.mxu0 %v1880
      %1884 = vmatprep.subr.bf16.mxu0 0
      %1885 = vmatpush1.bf16.xpose.msra.mxu0 0
      %1886 = vmatprep.subr.bf16.mxu0 0
      %1887 = vmatpush1.bf16.xpose.msra.mxu0 0
      %1888 = vmatprep.subr.bf16.mxu0 0
      %1889 = vmatpush1.bf16.xpose.msra.mxu0 0
      %1890 = vmatprep.subr.bf16.mxu0 0
      %1891 = vmatpush1.bf16.xpose.msra.mxu0 0
      %1892 = vmatprep.subr.bf16.mxu0 0
      %1893 = vmatpush1.bf16.xpose.msra.mxu0 0
      %1894 = vmatprep.subr.bf16.mxu0 0
      %1895 = vmatpush1.bf16.xpose.msra.mxu0 0
      %1896 = vmatprep.subr.bf16.mxu0 0
      %1897 = vmatpush1.bf16.xpose.msra.mxu0 0
      %1898 = vmatprep.subr.bf16.mxu0 0
      %1899 = vmatpush1.bf16.xpose.msra.mxu0 0
      %1900 = vmatprep.subr.bf16.mxu0 0
      %1901 = vmatpush1.bf16.xpose.msra.mxu0 0
      %1902 = vmatprep.subr.bf16.mxu0 0
      %1903 = vmatpush1.bf16.xpose.msra.mxu0 0
      %1904 = vmatprep.subr.bf16.mxu0 0
      %1905 = vmatpush1.bf16.xpose.msra.mxu0 0
      %1906 = vmatprep.subr.bf16.mxu0 0
      %1907 = vmatpush1.bf16.xpose.msra.mxu0 0
      %1908 = vmatprep.subr.bf16.mxu0 0
      %1909 = vmatpush1.bf16.xpose.msra.mxu0 0
      %1910 = vmatprep.subr.bf16.mxu0 0
      %1911 = vmatpush1.bf16.xpose.msra.mxu0 0
      %1912 = vmatprep.subr.bf16.mxu0 0
      %1913 = vmatpush1.bf16.xpose.msra.mxu0 0
      %1914 = vmatprep.mubr.bf16.mxu0 0
      %1915 = vmatmul.mubr.bf16.gmra.mrb[0].mxu0 %v1877
      %v1916 = vpop.f32.mrb[0].mxu0
      %v1917 = vadd.f32 %v1422, %v1916
      %v1918 = vpop.f32.mrb[0].mxu0
      %v1919 = vpop.f32.mrb[0].mxu0
      %v1920 = vpop.f32.mrb[0].mxu0
      %1921 = vdwg.mxu0
      %1922 = vrot.lane.b32.xlu0 %v1412, 112
      %v1923 = vpop.permute.xlu0 %1922
      %1924 = vrot.lane.b32.xlu0 %v1414, 80
      %v1925 = vpop.permute.xlu0 %1924
      %v1927 = vsel %vm1432, %v1923, 0
      %v1930 = vsel %vm1432, %v1925, 0
      %1932 = vmatprep.subr.bf16.mxu0 0
      %1933 = vmatpush1.bf16.xpose.msra.mxu0 %v1930
      %1934 = vmatprep.subr.bf16.mxu0 0
      %1935 = vmatpush1.bf16.xpose.msra.mxu0 0
      %1936 = vmatprep.subr.bf16.mxu0 0
      %1937 = vmatpush1.bf16.xpose.msra.mxu0 0
      %1938 = vmatprep.subr.bf16.mxu0 0
      %1939 = vmatpush1.bf16.xpose.msra.mxu0 0
      %1940 = vmatprep.subr.bf16.mxu0 0
      %1941 = vmatpush1.bf16.xpose.msra.mxu0 0
      %1942 = vmatprep.subr.bf16.mxu0 0
      %1943 = vmatpush1.bf16.xpose.msra.mxu0 0
      %1944 = vmatprep.subr.bf16.mxu0 0
      %1945 = vmatpush1.bf16.xpose.msra.mxu0 0
      %1946 = vmatprep.subr.bf16.mxu0 0
      %1947 = vmatpush1.bf16.xpose.msra.mxu0 0
      %1948 = vmatprep.subr.bf16.mxu0 0
      %1949 = vmatpush1.bf16.xpose.msra.mxu0 0
      %1950 = vmatprep.subr.bf16.mxu0 0
      %1951 = vmatpush1.bf16.xpose.msra.mxu0 0
      %1952 = vmatprep.subr.bf16.mxu0 0
      %1953 = vmatpush1.bf16.xpose.msra.mxu0 0
      %1954 = vmatprep.subr.bf16.mxu0 0
      %1955 = vmatpush1.bf16.xpose.msra.mxu0 0
      %1956 = vmatprep.subr.bf16.mxu0 0
      %1957 = vmatpush1.bf16.xpose.msra.mxu0 0
      %1958 = vmatprep.subr.bf16.mxu0 0
      %1959 = vmatpush1.bf16.xpose.msra.mxu0 0
      %1960 = vmatprep.subr.bf16.mxu0 0
      %1961 = vmatpush1.bf16.xpose.msra.mxu0 0
      %1962 = vmatprep.subr.bf16.mxu0 0
      %1963 = vmatpush1.bf16.xpose.msra.mxu0 0
      %1964 = vmatprep.mubr.bf16.mxu0 0
      %1965 = vmatmul.mubr.bf16.gmra.mrb[0].mxu0 %v1927
      %v1966 = vpop.f32.mrb[0].mxu0
      %v1967 = vadd.f32 %v1426, %v1966
      %v1968 = vpop.f32.mrb[0].mxu0
      %v1969 = vpop.f32.mrb[0].mxu0
      %v1970 = vpop.f32.mrb[0].mxu0
      %1971 = vdwg.mxu0
      %v1972 = vsel %vm1432, %v1917, -inf
      %1973 = vmax.xlane.f32.xlu0 %v1972
      %v1974 = vpop.xlane.xlu0 %1973
      %v1975 = vsel %vm1432, %v1967, -inf
      %1976 = vmax.xlane.f32.xlu0 %v1975
      %v1977 = vpop.xlane.xlu0 %1976
      %v1978 = vsub.f32 %v1917, %v1974
      %v1979 = vsub.f32 %v1967, %v1977
      %v1980 = vmul.f32 %v1978, 1.442695
      %v1981 = vpow.pop %v1980
      %v1982 = vmul.f32 %v1979, 1.442695
      %v1983 = vpow.pop %v1982
      %v1984 = vsel %vm1432, %v1981, 0.0
      %1985 = vadd.xlane.f32.xlu0 %v1984
      %v1986 = vpop.xlane.xlu0 %1985
      %v1987 = vsel %vm1432, %v1983, 0.0
      %1988 = vadd.xlane.f32.xlu0 %v1987
      %v1989 = vpop.xlane.xlu0 %1988
      %v1990 = vrcp.pop %v1986
      %v1991 = vrcp.pop %v1989
      %v1992 = vmul.f32 %v1981, %v1990
      %v1993 = vmul.f32 %v1983, %v1991
      %v1994 = vpack.c.bf16 %v1992, %v1992
      %v1995 = vpack.c.bf16 %v1993, %v1993
      %1996 = vrot.lane.b32.xlu0 %v1415, 48
      %v1997 = vpop.permute.xlu0 %1996
      %v1999 = vsel %vm1432, %v1994, 0
      %v2002 = vsel %vm1149, %v1997, 0
      %2004 = vmatprep.subr.bf16.mxu0 0
      %2005 = vmatpush1.bf16.msra.mxu0 %v2002
      %2006 = vmatprep.subr.bf16.mxu0 0
      %2007 = vmatpush1.bf16.msra.mxu0 0
      %2008 = vmatprep.subr.bf16.mxu0 0
      %2009 = vmatpush1.bf16.msra.mxu0 0
      %2010 = vmatprep.subr.bf16.mxu0 0
      %2011 = vmatpush1.bf16.msra.mxu0 0
      %2012 = vmatprep.subr.bf16.mxu0 0
      %2013 = vmatpush1.bf16.msra.mxu0 0
      %2014 = vmatprep.subr.bf16.mxu0 0
      %2015 = vmatpush1.bf16.msra.mxu0 0
      %2016 = vmatprep.subr.bf16.mxu0 0
      %2017 = vmatpush1.bf16.msra.mxu0 0
      %2018 = vmatprep.subr.bf16.mxu0 0
      %2019 = vmatpush1.bf16.msra.mxu0 0
      %2020 = vmatprep.subr.bf16.mxu0 0
      %2021 = vmatpush1.bf16.msra.mxu0 0
      %2022 = vmatprep.subr.bf16.mxu0 0
      %2023 = vmatpush1.bf16.msra.mxu0 0
      %2024 = vmatprep.subr.bf16.mxu0 0
      %2025 = vmatpush1.bf16.msra.mxu0 0
      %2026 = vmatprep.subr.bf16.mxu0 0
      %2027 = vmatpush1.bf16.msra.mxu0 0
      %2028 = vmatprep.subr.bf16.mxu0 0
      %2029 = vmatpush1.bf16.msra.mxu0 0
      %2030 = vmatprep.subr.bf16.mxu0 0
      %2031 = vmatpush1.bf16.msra.mxu0 0
      %2032 = vmatprep.subr.bf16.mxu0 0
      %2033 = vmatpush1.bf16.msra.mxu0 0
      %2034 = vmatprep.subr.bf16.mxu0 0
      %2035 = vmatpush1.bf16.msra.mxu0 0
      %2036 = vmatprep.mubr.bf16.mxu0 0
      %2037 = vmatmul.mubr.bf16.gmra.mrb[0].mxu0 %v1999
      %v2038 = vpop.f32.mrb[0].mxu0
      %v2039 = vadd.f32 0.0, %v2038
      %v2040 = vpop.f32.mrb[0].mxu0
      %v2041 = vpop.f32.mrb[0].mxu0
      %v2042 = vpop.f32.mrb[0].mxu0
      %2043 = vdwg.mxu0
      %2044 = vrot.lane.b32.xlu0 %v1416, 48
      %v2045 = vpop.permute.xlu0 %2044
      %v2047 = vsel %vm1432, %v1995, 0
      %v2050 = vsel %vm1149, %v2045, 0
      %2052 = vmatprep.subr.bf16.mxu0 0
      %2053 = vmatpush1.bf16.msra.mxu0 %v2050
      %2054 = vmatprep.subr.bf16.mxu0 0
      %2055 = vmatpush1.bf16.msra.mxu0 0
      %2056 = vmatprep.subr.bf16.mxu0 0
      %2057 = vmatpush1.bf16.msra.mxu0 0
      %2058 = vmatprep.subr.bf16.mxu0 0
      %2059 = vmatpush1.bf16.msra.mxu0 0
      %2060 = vmatprep.subr.bf16.mxu0 0
      %2061 = vmatpush1.bf16.msra.mxu0 0
      %2062 = vmatprep.subr.bf16.mxu0 0
      %2063 = vmatpush1.bf16.msra.mxu0 0
      %2064 = vmatprep.subr.bf16.mxu0 0
      %2065 = vmatpush1.bf16.msra.mxu0 0
      %2066 = vmatprep.subr.bf16.mxu0 0
      %2067 = vmatpush1.bf16.msra.mxu0 0
      %2068 = vmatprep.subr.bf16.mxu0 0
      %2069 = vmatpush1.bf16.msra.mxu0 0
      %2070 = vmatprep.subr.bf16.mxu0 0
      %2071 = vmatpush1.bf16.msra.mxu0 0
      %2072 = vmatprep.subr.bf16.mxu0 0
      %2073 = vmatpush1.bf16.msra.mxu0 0
      %2074 = vmatprep.subr.bf16.mxu0 0
      %2075 = vmatpush1.bf16.msra.mxu0 0
      %2076 = vmatprep.subr.bf16.mxu0 0
      %2077 = vmatpush1.bf16.msra.mxu0 0
      %2078 = vmatprep.subr.bf16.mxu0 0
      %2079 = vmatpush1.bf16.msra.mxu0 0
      %2080 = vmatprep.subr.bf16.mxu0 0
      %2081 = vmatpush1.bf16.msra.mxu0 0
      %2082 = vmatprep.subr.bf16.mxu0 0
      %2083 = vmatpush1.bf16.msra.mxu0 0
      %2084 = vmatprep.mubr.bf16.mxu0 0
      %2085 = vmatmul.mubr.bf16.gmra.mrb[0].mxu0 %v2047
      %v2086 = vpop.f32.mrb[0].mxu0
      %v2087 = vadd.f32 0.0, %v2086
      %v2088 = vpop.f32.mrb[0].mxu0
      %v2089 = vpop.f32.mrb[0].mxu0
      %v2090 = vpop.f32.mrb[0].mxu0
      %2091 = vdwg.mxu0
      %2092 = vrot.lane.b32.xlu0 %v1411, 104
      %v2093 = vpop.permute.xlu0 %2092
      %2094 = vrot.lane.b32.xlu0 %v1413, 72
      %v2095 = vpop.permute.xlu0 %2094
      %v2097 = vsel %vm1432, %v2093, 0
      %v2100 = vsel %vm1432, %v2095, 0
      %2102 = vmatprep.subr.bf16.mxu0 0
      %2103 = vmatpush1.bf16.xpose.msra.mxu0 %v2100
      %2104 = vmatprep.subr.bf16.mxu0 0
      %2105 = vmatpush1.bf16.xpose.msra.mxu0 0
      %2106 = vmatprep.subr.bf16.mxu0 0
      %2107 = vmatpush1.bf16.xpose.msra.mxu0 0
      %2108 = vmatprep.subr.bf16.mxu0 0
      %2109 = vmatpush1.bf16.xpose.msra.mxu0 0
      %2110 = vmatprep.subr.bf16.mxu0 0
      %2111 = vmatpush1.bf16.xpose.msra.mxu0 0
      %2112 = vmatprep.subr.bf16.mxu0 0
      %2113 = vmatpush1.bf16.xpose.msra.mxu0 0
      %2114 = vmatprep.subr.bf16.mxu0 0
      %2115 = vmatpush1.bf16.xpose.msra.mxu0 0
      %2116 = vmatprep.subr.bf16.mxu0 0
      %2117 = vmatpush1.bf16.xpose.msra.mxu0 0
      %2118 = vmatprep.subr.bf16.mxu0 0
      %2119 = vmatpush1.bf16.xpose.msra.mxu0 0
      %2120 = vmatprep.subr.bf16.mxu0 0
      %2121 = vmatpush1.bf16.xpose.msra.mxu0 0
      %2122 = vmatprep.subr.bf16.mxu0 0
      %2123 = vmatpush1.bf16.xpose.msra.mxu0 0
      %2124 = vmatprep.subr.bf16.mxu0 0
      %2125 = vmatpush1.bf16.xpose.msra.mxu0 0
      %2126 = vmatprep.subr.bf16.mxu0 0
      %2127 = vmatpush1.bf16.xpose.msra.mxu0 0
      %2128 = vmatprep.subr.bf16.mxu0 0
      %2129 = vmatpush1.bf16.xpose.msra.mxu0 0
      %2130 = vmatprep.subr.bf16.mxu0 0
      %2131 = vmatpush1.bf16.xpose.msra.mxu0 0
      %2132 = vmatprep.subr.bf16.mxu0 0
      %2133 = vmatpush1.bf16.xpose.msra.mxu0 0
      %2134 = vmatprep.mubr.bf16.mxu0 0
      %2135 = vmatmul.mubr.bf16.gmra.mrb[0].mxu0 %v2097
      %v2136 = vpop.f32.mrb[0].mxu0
      %v2137 = vadd.f32 %v1422, %v2136
      %v2138 = vpop.f32.mrb[0].mxu0
      %v2139 = vpop.f32.mrb[0].mxu0
      %v2140 = vpop.f32.mrb[0].mxu0
      %2141 = vdwg.mxu0
      %2142 = vrot.lane.b32.xlu0 %v1412, 104
      %v2143 = vpop.permute.xlu0 %2142
      %2144 = vrot.lane.b32.xlu0 %v1414, 72
      %v2145 = vpop.permute.xlu0 %2144
      %v2147 = vsel %vm1432, %v2143, 0
      %v2150 = vsel %vm1432, %v2145, 0
      %2152 = vmatprep.subr.bf16.mxu0 0
      %2153 = vmatpush1.bf16.xpose.msra.mxu0 %v2150
      %2154 = vmatprep.subr.bf16.mxu0 0
      %2155 = vmatpush1.bf16.xpose.msra.mxu0 0
      %2156 = vmatprep.subr.bf16.mxu0 0
      %2157 = vmatpush1.bf16.xpose.msra.mxu0 0
      %2158 = vmatprep.subr.bf16.mxu0 0
      %2159 = vmatpush1.bf16.xpose.msra.mxu0 0
      %2160 = vmatprep.subr.bf16.mxu0 0
      %2161 = vmatpush1.bf16.xpose.msra.mxu0 0
      %2162 = vmatprep.subr.bf16.mxu0 0
      %2163 = vmatpush1.bf16.xpose.msra.mxu0 0
      %2164 = vmatprep.subr.bf16.mxu0 0
      %2165 = vmatpush1.bf16.xpose.msra.mxu0 0
      %2166 = vmatprep.subr.bf16.mxu0 0
      %2167 = vmatpush1.bf16.xpose.msra.mxu0 0
      %2168 = vmatprep.subr.bf16.mxu0 0
      %2169 = vmatpush1.bf16.xpose.msra.mxu0 0
      %2170 = vmatprep.subr.bf16.mxu0 0
      %2171 = vmatpush1.bf16.xpose.msra.mxu0 0
      %2172 = vmatprep.subr.bf16.mxu0 0
      %2173 = vmatpush1.bf16.xpose.msra.mxu0 0
      %2174 = vmatprep.subr.bf16.mxu0 0
      %2175 = vmatpush1.bf16.xpose.msra.mxu0 0
      %2176 = vmatprep.subr.bf16.mxu0 0
      %2177 = vmatpush1.bf16.xpose.msra.mxu0 0
      %2178 = vmatprep.subr.bf16.mxu0 0
      %2179 = vmatpush1.bf16.xpose.msra.mxu0 0
      %2180 = vmatprep.subr.bf16.mxu0 0
      %2181 = vmatpush1.bf16.xpose.msra.mxu0 0
      %2182 = vmatprep.subr.bf16.mxu0 0
      %2183 = vmatpush1.bf16.xpose.msra.mxu0 0
      %2184 = vmatprep.mubr.bf16.mxu0 0
      %2185 = vmatmul.mubr.bf16.gmra.mrb[0].mxu0 %v2147
      %v2186 = vpop.f32.mrb[0].mxu0
      %v2187 = vadd.f32 %v1426, %v2186
      %v2188 = vpop.f32.mrb[0].mxu0
      %v2189 = vpop.f32.mrb[0].mxu0
      %v2190 = vpop.f32.mrb[0].mxu0
      %2191 = vdwg.mxu0
      %v2192 = vsel %vm1432, %v2137, -inf
      %2193 = vmax.xlane.f32.xlu0 %v2192
      %v2194 = vpop.xlane.xlu0 %2193
      %v2195 = vsel %vm1432, %v2187, -inf
      %2196 = vmax.xlane.f32.xlu0 %v2195
      %v2197 = vpop.xlane.xlu0 %2196
      %v2198 = vsub.f32 %v2137, %v2194
      %v2199 = vsub.f32 %v2187, %v2197
      %v2200 = vmul.f32 %v2198, 1.442695
      %v2201 = vpow.pop %v2200
      %v2202 = vmul.f32 %v2199, 1.442695
      %v2203 = vpow.pop %v2202
      %v2204 = vsel %vm1432, %v2201, 0.0
      %2205 = vadd.xlane.f32.xlu0 %v2204
      %v2206 = vpop.xlane.xlu0 %2205
      %v2207 = vsel %vm1432, %v2203, 0.0
      %2208 = vadd.xlane.f32.xlu0 %v2207
      %v2209 = vpop.xlane.xlu0 %2208
      %v2210 = vrcp.pop %v2206
      %v2211 = vrcp.pop %v2209
      %v2212 = vmul.f32 %v2201, %v2210
      %v2213 = vmul.f32 %v2203, %v2211
      %v2214 = vpack.c.bf16 %v2212, %v2212
      %v2215 = vpack.c.bf16 %v2213, %v2213
      %2216 = vrot.lane.b32.xlu0 %v1415, 40
      %v2217 = vpop.permute.xlu0 %2216
      %v2219 = vsel %vm1432, %v2214, 0
      %v2222 = vsel %vm1149, %v2217, 0
      %2224 = vmatprep.subr.bf16.mxu0 0
      %2225 = vmatpush1.bf16.msra.mxu0 %v2222
      %2226 = vmatprep.subr.bf16.mxu0 0
      %2227 = vmatpush1.bf16.msra.mxu0 0
      %2228 = vmatprep.subr.bf16.mxu0 0
      %2229 = vmatpush1.bf16.msra.mxu0 0
      %2230 = vmatprep.subr.bf16.mxu0 0
      %2231 = vmatpush1.bf16.msra.mxu0 0
      %2232 = vmatprep.subr.bf16.mxu0 0
      %2233 = vmatpush1.bf16.msra.mxu0 0
      %2234 = vmatprep.subr.bf16.mxu0 0
      %2235 = vmatpush1.bf16.msra.mxu0 0
      %2236 = vmatprep.subr.bf16.mxu0 0
      %2237 = vmatpush1.bf16.msra.mxu0 0
      %2238 = vmatprep.subr.bf16.mxu0 0
      %2239 = vmatpush1.bf16.msra.mxu0 0
      %2240 = vmatprep.subr.bf16.mxu0 0
      %2241 = vmatpush1.bf16.msra.mxu0 0
      %2242 = vmatprep.subr.bf16.mxu0 0
      %2243 = vmatpush1.bf16.msra.mxu0 0
      %2244 = vmatprep.subr.bf16.mxu0 0
      %2245 = vmatpush1.bf16.msra.mxu0 0
      %2246 = vmatprep.subr.bf16.mxu0 0
      %2247 = vmatpush1.bf16.msra.mxu0 0
      %2248 = vmatprep.subr.bf16.mxu0 0
      %2249 = vmatpush1.bf16.msra.mxu0 0
      %2250 = vmatprep.subr.bf16.mxu0 0
      %2251 = vmatpush1.bf16.msra.mxu0 0
      %2252 = vmatprep.subr.bf16.mxu0 0
      %2253 = vmatpush1.bf16.msra.mxu0 0
      %2254 = vmatprep.subr.bf16.mxu0 0
      %2255 = vmatpush1.bf16.msra.mxu0 0
      %2256 = vmatprep.mubr.bf16.mxu0 0
      %2257 = vmatmul.mubr.bf16.gmra.mrb[0].mxu0 %v2219
      %v2258 = vpop.f32.mrb[0].mxu0
      %v2259 = vadd.f32 0.0, %v2258
      %v2260 = vpop.f32.mrb[0].mxu0
      %v2261 = vpop.f32.mrb[0].mxu0
      %v2262 = vpop.f32.mrb[0].mxu0
      %2263 = vdwg.mxu0
      %2264 = vrot.lane.b32.xlu0 %v1416, 40
      %v2265 = vpop.permute.xlu0 %2264
      %v2267 = vsel %vm1432, %v2215, 0
      %v2270 = vsel %vm1149, %v2265, 0
      %2272 = vmatprep.subr.bf16.mxu0 0
      %2273 = vmatpush1.bf16.msra.mxu0 %v2270
      %2274 = vmatprep.subr.bf16.mxu0 0
      %2275 = vmatpush1.bf16.msra.mxu0 0
      %2276 = vmatprep.subr.bf16.mxu0 0
      %2277 = vmatpush1.bf16.msra.mxu0 0
      %2278 = vmatprep.subr.bf16.mxu0 0
      %2279 = vmatpush1.bf16.msra.mxu0 0
      %2280 = vmatprep.subr.bf16.mxu0 0
      %2281 = vmatpush1.bf16.msra.mxu0 0
      %2282 = vmatprep.subr.bf16.mxu0 0
      %2283 = vmatpush1.bf16.msra.mxu0 0
      %2284 = vmatprep.subr.bf16.mxu0 0
      %2285 = vmatpush1.bf16.msra.mxu0 0
      %2286 = vmatprep.subr.bf16.mxu0 0
      %2287 = vmatpush1.bf16.msra.mxu0 0
      %2288 = vmatprep.subr.bf16.mxu0 0
      %2289 = vmatpush1.bf16.msra.mxu0 0
      %2290 = vmatprep.subr.bf16.mxu0 0
      %2291 = vmatpush1.bf16.msra.mxu0 0
      %2292 = vmatprep.subr.bf16.mxu0 0
      %2293 = vmatpush1.bf16.msra.mxu0 0
      %2294 = vmatprep.subr.bf16.mxu0 0
      %2295 = vmatpush1.bf16.msra.mxu0 0
      %2296 = vmatprep.subr.bf16.mxu0 0
      %2297 = vmatpush1.bf16.msra.mxu0 0
      %2298 = vmatprep.subr.bf16.mxu0 0
      %2299 = vmatpush1.bf16.msra.mxu0 0
      %2300 = vmatprep.subr.bf16.mxu0 0
      %2301 = vmatpush1.bf16.msra.mxu0 0
      %2302 = vmatprep.subr.bf16.mxu0 0
      %2303 = vmatpush1.bf16.msra.mxu0 0
      %2304 = vmatprep.mubr.bf16.mxu0 0
      %2305 = vmatmul.mubr.bf16.gmra.mrb[0].mxu0 %v2267
      %v2306 = vpop.f32.mrb[0].mxu0
      %v2307 = vadd.f32 0.0, %v2306
      %v2308 = vpop.f32.mrb[0].mxu0
      %v2309 = vpop.f32.mrb[0].mxu0
      %v2310 = vpop.f32.mrb[0].mxu0
      %2311 = vdwg.mxu0
      %2314 = vrot.lane.b32.xlu0 %v1819, 8
      %v2315 = vpop.permute.xlu0 %2314
      %2316 = vrot.lane.b32.xlu0 %v1867, 8
      %v2317 = vpop.permute.xlu0 %2316
      %2322 = vrot.lane.b32.xlu0 %v2039, 16
      %v2323 = vpop.permute.xlu0 %2322
      %2324 = vrot.lane.b32.xlu0 %v2087, 16
      %v2325 = vpop.permute.xlu0 %2324
      %2330 = vrot.lane.b32.xlu0 %v2259, 24
      %v2331 = vpop.permute.xlu0 %2330
      %2332 = vrot.lane.b32.xlu0 %v2307, 24
      %v2333 = vpop.permute.xlu0 %2332
      %v2336 = vsel %vm1432, %v1596, %v2315
      %v2337 = vsel %vm1432, %v1645, %v2317
      %vm2338 = vcmask 130048
      %v2339 = vsel %vm2338, %v2336, %v2323
      %v2340 = vsel %vm2338, %v2337, %v2325
      %vm2341 = vcmask 195584
      %v2342 = vsel %vm2341, %v2339, %v2331
      %v2343 = vsel %vm2341, %v2340, %v2333
      %v2344 = vpack.c.bf16 %v2343, %v2342
      %v2345 = vld [vmem:[%s672] sm:$0xf]
      %v2346 = vld [vmem:[%s672 + $0x4] sm:$0xf]
      %v2347 = vld [vmem:[%s672 + $0x8] sm:$0xf]
      %v2348 = vld [vmem:[%s672 + $0xc] sm:$0xf]
      %v2349 = vlaneseq
      %v2350 = vshrl.u32 %v2349, 7
      %v2351 = vsub.s32 6, %v2350
      %v2352 = vrot.slane %v702, %v2351
      %v2357 = vunpack.c.l.b16 %v2345
      %v2358 = vunpack.c.l.b16 %v2346
      %v2359 = vunpack.c.l.b16 %v2347
      %v2360 = vunpack.c.l.b16 %v2348
      %v2361 = vpack.c.b16 %v2358, %v2357
      %v2362 = vpack.c.b16 %v2360, %v2359
      %v2366 = vsel %vm705, %v2344, 0
      %2368 = vmatprep.subr.bf16.mxu0 0
      %2369 = vmatpush1.bf16.msra.mxu0 %v2361
      %2370 = vmatprep.subr.bf16.mxu0 0
      %2371 = vmatpush1.bf16.msra.mxu0 %v2362
      %2372 = vmatprep.subr.bf16.mxu0 0
      %2373 = vmatpush1.bf16.msra.mxu0 0
      %2374 = vmatprep.subr.bf16.mxu0 0
      %2375 = vmatpush1.bf16.msra.mxu0 0
      %2376 = vmatprep.subr.bf16.mxu0 0
      %2377 = vmatpush1.bf16.msra.mxu0 0
      %2378 = vmatprep.subr.bf16.mxu0 0
      %2379 = vmatpush1.bf16.msra.mxu0 0
      %2380 = vmatprep.subr.bf16.mxu0 0
      %2381 = vmatpush1.bf16.msra.mxu0 0
      %2382 = vmatprep.subr.bf16.mxu0 0
      %2383 = vmatpush1.bf16.msra.mxu0 0
      %2384 = vmatprep.subr.bf16.mxu0 0
      %2385 = vmatpush1.bf16.msra.mxu0 0
      %2386 = vmatprep.subr.bf16.mxu0 0
      %2387 = vmatpush1.bf16.msra.mxu0 0
      %2388 = vmatprep.subr.bf16.mxu0 0
      %2389 = vmatpush1.bf16.msra.mxu0 0
      %2390 = vmatprep.subr.bf16.mxu0 0
      %2391 = vmatpush1.bf16.msra.mxu0 0
      %2392 = vmatprep.subr.bf16.mxu0 0
      %2393 = vmatpush1.bf16.msra.mxu0 0
      %2394 = vmatprep.subr.bf16.mxu0 0
      %2395 = vmatpush1.bf16.msra.mxu0 0
      %2396 = vmatprep.subr.bf16.mxu0 0
      %2397 = vmatpush1.bf16.msra.mxu0 0
      %2398 = vmatprep.subr.bf16.mxu0 0
      %2399 = vmatpush1.bf16.msra.mxu0 0
      %2400 = vmatprep.mubr.bf16.mxu0 0
      %2401 = vmatmul.mubr.bf16.gmra.mrb[0].mxu0 %v2366
      %v2402 = vpop.f32.mrb[0].mxu0
      %v2403 = vadd.f32 %v2352, %v2402
      %v2404 = vpop.f32.mrb[0].mxu0
      %v2405 = vpop.f32.mrb[0].mxu0
      %v2406 = vadd.f32 %v2352, %v2405
      %v2407 = vpop.f32.mrb[0].mxu0
      %2408 = vdwg.mxu0
      %v2409 = vadd.f32 %v2403, %v1282
      %v2410 = vadd.f32 %v2406, %v1283
      %v2411 = vsel %vm705, %v2409, 0.0
      %2412 = vadd.xlane.f32.xlu0 %v2411
      %v2413 = vpop.xlane.xlu0 %2412
      %v2414 = vsel %vm705, %v2410, 0.0
      %2415 = vadd.xlane.f32.xlu0 %v2414
      %v2416 = vpop.xlane.xlu0 %2415
      %v2417 = vmul.f32 %v2413, %v712
      %v2418 = vmul.f32 %v2416, %v712
      %v2419 = vsub.f32 %v2409, %v2417
      %v2420 = vsub.f32 %v2410, %v2418
      %v2421 = vmul.f32 %v2419, %v2419
      %v2422 = vmul.f32 %v2420, %v2420
      %v2423 = vsel %vm705, %v2421, 0.0
      %2424 = vadd.xlane.f32.xlu0 %v2423
      %v2425 = vpop.xlane.xlu0 %2424
      %v2426 = vsel %vm705, %v2422, 0.0
      %2427 = vadd.xlane.f32.xlu0 %v2426
      %v2428 = vpop.xlane.xlu0 %2427
      %v2429 = vmul.f32 %v2425, %v712
      %v2430 = vmul.f32 %v2428, %v712
      %v2431 = vadd.f32 %v2429, 1e-05
      %v2432 = vadd.f32 %v2430, 1e-05
      %v2433 = vrsqrt.pop %v2431
      %v2434 = vrsqrt.pop %v2432
      %v2435 = vmul.f32 %v2419, %v2433
      %v2436 = vmul.f32 %v2420, %v2434
      %v2437 = vlaneseq
      %v2438 = vshrl.u32 %v2437, 7
      %v2439 = vsub.s32 7, %v2438
      %v2440 = vrot.slane %v702, %v2439
      %v2441 = vmul.f32 %v2435, %v2440
      %v2442 = vmul.f32 %v2436, %v2440
      %v2443 = vlaneseq
      %v2444 = vshrl.u32 %v2443, 7
      %v2445 = vsub.s32 0, %v2444
      %v2446 = vrot.slane %v703, %v2445
      %v2447 = vadd.f32 %v2441, %v2446
      %v2448 = vadd.f32 %v2442, %v2446
      %v2449 = vpack.c.bf16 %v2448, %v2447
      %v2450 = vld [vmem:[%s677] sm:$0xf]
      %v2451 = vld [vmem:[%s677 + $0x4] sm:$0xf]
      %v2452 = vld [vmem:[%s677 + $0x8] sm:$0xf]
      %v2453 = vld [vmem:[%s677 + $0xc] sm:$0xf]
      %v2454 = vlaneseq
      %v2455 = vshrl.u32 %v2454, 7
      %v2456 = vsub.s32 1, %v2455
      %v2457 = vrot.slane %v704, %v2456
      %v2462 = vunpack.c.l.b16 %v2450
      %v2463 = vunpack.c.l.b16 %v2451
      %v2464 = vunpack.c.l.b16 %v2452
      %v2465 = vunpack.c.l.b16 %v2453
      %v2466 = vpack.c.b16 %v2463, %v2462
      %v2467 = vpack.c.b16 %v2465, %v2464
      %v2471 = vsel %vm705, %v2449, 0
      %2473 = vmatprep.subr.bf16.mxu0 0
      %2474 = vmatpush1.bf16.msra.mxu0 %v2466
      %2475 = vmatprep.subr.bf16.mxu0 0
      %2476 = vmatpush1.bf16.msra.mxu0 %v2467
      %2477 = vmatprep.subr.bf16.mxu0 0
      %2478 = vmatpush1.bf16.msra.mxu0 0
      %2479 = vmatprep.subr.bf16.mxu0 0
      %2480 = vmatpush1.bf16.msra.mxu0 0
      %2481 = vmatprep.subr.bf16.mxu0 0
      %2482 = vmatpush1.bf16.msra.mxu0 0
      %2483 = vmatprep.subr.bf16.mxu0 0
      %2484 = vmatpush1.bf16.msra.mxu0 0
      %2485 = vmatprep.subr.bf16.mxu0 0
      %2486 = vmatpush1.bf16.msra.mxu0 0
      %2487 = vmatprep.subr.bf16.mxu0 0
      %2488 = vmatpush1.bf16.msra.mxu0 0
      %2489 = vmatprep.subr.bf16.mxu0 0
      %2490 = vmatpush1.bf16.msra.mxu0 0
      %2491 = vmatprep.subr.bf16.mxu0 0
      %2492 = vmatpush1.bf16.msra.mxu0 0
      %2493 = vmatprep.subr.bf16.mxu0 0
      %2494 = vmatpush1.bf16.msra.mxu0 0
      %2495 = vmatprep.subr.bf16.mxu0 0
      %2496 = vmatpush1.bf16.msra.mxu0 0
      %2497 = vmatprep.subr.bf16.mxu0 0
      %2498 = vmatpush1.bf16.msra.mxu0 0
      %2499 = vmatprep.subr.bf16.mxu0 0
      %2500 = vmatpush1.bf16.msra.mxu0 0
      %2501 = vmatprep.subr.bf16.mxu0 0
      %2502 = vmatpush1.bf16.msra.mxu0 0
      %2503 = vmatprep.subr.bf16.mxu0 0
      %2504 = vmatpush1.bf16.msra.mxu0 0
      %2505 = vmatprep.mubr.bf16.mxu0 0
      %2506 = vmatmul.mubr.bf16.gmra.mrb[0].mxu0 %v2471
      %v2507 = vpop.f32.mrb[0].mxu0
      %v2508 = vadd.f32 %v2457, %v2507
      %v2509 = vpop.f32.mrb[0].mxu0
      %v2510 = vpop.f32.mrb[0].mxu0
      %v2511 = vadd.f32 %v2457, %v2510
      %v2512 = vpop.f32.mrb[0].mxu0
      %2513 = vdwg.mxu0
      %v2514 = vsub.f32 0.0, %v2508
      %v2515 = vsub.f32 0.0, %v2511
      %v2516 = vmul.f32 %v2514, 1.442695
      %v2517 = vpow.pop %v2516
      %v2518 = vmul.f32 %v2515, 1.442695
      %v2519 = vpow.pop %v2518
      %v2520 = vadd.f32 %v2517, 1.0
      %v2521 = vadd.f32 %v2519, 1.0
      %v2522 = vrcp.pop %v2520
      %v2523 = vrcp.pop %v2521
      %v2524 = vmul.f32 %v2508, %v2522
      %v2525 = vmul.f32 %v2511, %v2523
      %v2526 = vpack.c.bf16 %v2525, %v2524
      %v2527 = vld [vmem:[%s682] sm:$0xf]
      %v2528 = vld [vmem:[%s682 + $0x4] sm:$0xf]
      %v2529 = vld [vmem:[%s682 + $0x8] sm:$0xf]
      %v2530 = vld [vmem:[%s682 + $0xc] sm:$0xf]
      %v2531 = vld [vmem:[%s682 + $0x10] sm:$0xf]
      %v2532 = vld [vmem:[%s682 + $0x14] sm:$0xf]
      %v2533 = vld [vmem:[%s682 + $0x18] sm:$0xf]
      %v2534 = vld [vmem:[%s682 + $0x1c] sm:$0xf]
      %v2535 = vlaneseq
      %v2536 = vshrl.u32 %v2535, 7
      %v2537 = vsub.s32 1, %v2536
      %v2538 = vrot.slane %v703, %v2537
      %v2547 = vunpack.c.l.b16 %v2527
      %v2548 = vunpack.c.l.b16 %v2528
      %v2549 = vunpack.c.l.b16 %v2529
      %v2550 = vunpack.c.l.b16 %v2530
      %v2551 = vunpack.c.l.b16 %v2531
      %v2552 = vunpack.c.l.b16 %v2532
      %v2553 = vunpack.c.l.b16 %v2533
      %v2554 = vunpack.c.l.b16 %v2534
      %v2555 = vpack.c.b16 %v2548, %v2547
      %v2556 = vpack.c.b16 %v2550, %v2549
      %v2557 = vpack.c.b16 %v2552, %v2551
      %v2558 = vpack.c.b16 %v2554, %v2553
      %v2564 = vsel %vm859, %v2526, 0
      %2566 = vmatprep.subr.bf16.mxu0 0
      %2567 = vmatpush1.bf16.msra.mxu0 %v2555
      %2568 = vmatprep.subr.bf16.mxu0 0
      %2569 = vmatpush1.bf16.msra.mxu0 %v2556
      %2570 = vmatprep.subr.bf16.mxu0 0
      %2571 = vmatpush1.bf16.msra.mxu0 %v2557
      %2572 = vmatprep.subr.bf16.mxu0 0
      %2573 = vmatpush1.bf16.msra.mxu0 %v2558
      %2574 = vmatprep.subr.bf16.mxu0 0
      %2575 = vmatpush1.bf16.msra.mxu0 0
      %2576 = vmatprep.subr.bf16.mxu0 0
      %2577 = vmatpush1.bf16.msra.mxu0 0
      %2578 = vmatprep.subr.bf16.mxu0 0
      %2579 = vmatpush1.bf16.msra.mxu0 0
      %2580 = vmatprep.subr.bf16.mxu0 0
      %2581 = vmatpush1.bf16.msra.mxu0 0
      %2582 = vmatprep.subr.bf16.mxu0 0
      %2583 = vmatpush1.bf16.msra.mxu0 0
      %2584 = vmatprep.subr.bf16.mxu0 0
      %2585 = vmatpush1.bf16.msra.mxu0 0
      %2586 = vmatprep.subr.bf16.mxu0 0
      %2587 = vmatpush1.bf16.msra.mxu0 0
      %2588 = vmatprep.subr.bf16.mxu0 0
      %2589 = vmatpush1.bf16.msra.mxu0 0
      %2590 = vmatprep.subr.bf16.mxu0 0
      %2591 = vmatpush1.bf16.msra.mxu0 0
      %2592 = vmatprep.subr.bf16.mxu0 0
      %2593 = vmatpush1.bf16.msra.mxu0 0
      %2594 = vmatprep.subr.bf16.mxu0 0
      %2595 = vmatpush1.bf16.msra.mxu0 0
      %2596 = vmatprep.subr.bf16.mxu0 0
      %2597 = vmatpush1.bf16.msra.mxu0 0
      %2598 = vmatprep.mubr.bf16.mxu0 0
      %2599 = vmatmul.mubr.bf16.gmra.mrb[0].mxu0 %v2564
      %v2600 = vpop.f32.mrb[0].mxu0
      %v2601 = vadd.f32 %v2538, %v2600
      %v2602 = vpop.f32.mrb[0].mxu0
      %v2603 = vpop.f32.mrb[0].mxu0
      %v2604 = vadd.f32 %v2538, %v2603
      %v2605 = vpop.f32.mrb[0].mxu0
      %2606 = vdwg.mxu0
      %v2607 = vmul.f32 %v2601, 0.5
      %v2608 = vmul.f32 %v2604, 0.5
      %v2609 = vadd.f32 %v2607, %v2409
      %v2610 = vadd.f32 %v2608, %v2410
      %v2611 = vsel %vm705, %v2609, 0.0
      %2612 = vadd.xlane.f32.xlu0 %v2611
      %v2613 = vpop.xlane.xlu0 %2612
      %v2614 = vsel %vm705, %v2610, 0.0
      %2615 = vadd.xlane.f32.xlu0 %v2614
      %v2616 = vpop.xlane.xlu0 %2615
      %v2617 = vmul.f32 %v2613, %v712
      %v2618 = vmul.f32 %v2616, %v712
      %v2619 = vsub.f32 %v2609, %v2617
      %v2620 = vsub.f32 %v2610, %v2618
      %v2621 = vmul.f32 %v2619, %v2619
      %v2622 = vmul.f32 %v2620, %v2620
      %v2623 = vsel %vm705, %v2621, 0.0
      %2624 = vadd.xlane.f32.xlu0 %v2623
      %v2625 = vpop.xlane.xlu0 %2624
      %v2626 = vsel %vm705, %v2622, 0.0
      %2627 = vadd.xlane.f32.xlu0 %v2626
      %v2628 = vpop.xlane.xlu0 %2627
      %v2629 = vmul.f32 %v2625, %v712
      %v2630 = vmul.f32 %v2628, %v712
      %v2631 = vadd.f32 %v2629, 1e-05
      %v2632 = vadd.f32 %v2630, 1e-05
      %v2633 = vrsqrt.pop %v2631
      %v2634 = vrsqrt.pop %v2632
      %v2635 = vmul.f32 %v2619, %v2633
      %v2636 = vmul.f32 %v2620, %v2634
      %v2637 = vlaneseq
      %v2638 = vshrl.u32 %v2637, 7
      %v2639 = vsub.s32 2, %v2638
      %v2640 = vrot.slane %v703, %v2639
      %v2641 = vmul.f32 %v2635, %v2640
      %v2642 = vmul.f32 %v2636, %v2640
      %v2643 = vlaneseq
      %v2644 = vshrl.u32 %v2643, 7
      %v2645 = vsub.s32 3, %v2644
      %v2646 = vrot.slane %v703, %v2645
      %v2647 = vadd.f32 %v2641, %v2646
      %v2648 = vadd.f32 %v2642, %v2646
      %2649 = vst.msk [vmem:[%s687] sm:$0xff] %vm705, %v2647
      %2650 = vst.msk [vmem:[%s687 + $0x8] sm:$0xff] %vm705, %v2648
      %s2651 = smul.u32 2, %s28
      %p2652 = scmp.lt.s32.totalorder %s2651, 3
      %s2653 = scalar_select %p2652, %s2651, 3
      %s2654 = smul.addr %s2653, 8
      %s2655 = scalar_lea.vmem %s13, %s2654
      // Predicated region
      $region77: #{conformer_forward.4} parent=71 // pred_check
        %p2656 = pneg %p392
      $region78: #{conformer_forward.4} parent=71 // pred_check_branch
        %2658 = sbr.rel (%p2656) target = $region80
      $region79: #{conformer_forward.4} parent=71 // pred_region
        %s2659 = smul.u32 2, %s28
      $region80: #{conformer_forward.4} parent=71 // pred_fallthru
        _
    $region72: #{conformer_forward.4} parent=5 // pred_fallthru
      _
    %p2660 = scmp.le.s32.totalorder 2, %s19
    // Predicated region
    $region81: #{conformer_forward.4} parent=5 // pred_check
      %p2661 = pneg %p2660
    $region82: #{conformer_forward.4} parent=5 // pred_check_branch
      %2663 = sbr.rel (%p2661) target = $region84
    $region83: #{conformer_forward.4} parent=5 // pred_region
      %s2664 = ssub.s32 %s19, 2
      // Predicated region
      $region85: #{conformer_forward.4} parent=83 // pred_check
        %p2665 = pneg %p398
      $region86: #{conformer_forward.4} parent=83 // pred_check_branch
        %2667 = sbr.rel (%p2665) target = $region88
      $region87: #{conformer_forward.4} parent=83 // pred_region
        %s2668 = smul.u32 2, %s30
        %p2669 = scmp.lt.s32.totalorder %s2668, 3
        %s2670 = scalar_select %p2669, %s2668, 3
        %s2671 = smul.addr %s2670, 8
        %s2672 = scalar_lea.vmem %s13, %s2671
      $region88: #{conformer_forward.4} parent=83 // pred_fallthru
        _
    $region84: #{conformer_forward.4} parent=5 // pred_fallthru
      _
  $region6: #{conformer_forward.4} parent=0 // loop_footer
    %s23 = sadd.s32 1, %s19
  $region7: #{conformer_forward.4} parent=0 // loop_footer_branch
    %18 = sbr.rel target = $region3
  $region8: #{conformer_forward.4} parent=0 // loop_exit
    _

</llo_original>
